<compile_context>
chip_gen: v6e
topology: v6e:2x2x1
jax: 0.10.0
libtpu: 0.0.40
codegen_flags: <defaults>
</compile_context>

<pallas_src>
import functools

import jax
import jax.numpy as jnp
from jax.experimental import pallas as pl
from jax.experimental.pallas import tpu as pltpu


# ----------------------------------------------------------------------------
# Fused Pallas kernel: GAP + Embedding + conv_block for F frames per grid step
# ----------------------------------------------------------------------------
def _make_stam_kernel(w, mid):
    def kernel(x_ref, w1_ref, ew2_ref, cw2_ref, cw3_ref, mask_ref,
               fv_ref, emb_ref, out_ref):
        f, hw, c = x_ref.shape
        n = f * hw
        emb_dim = emb_ref.shape[-1]

        x = x_ref[...]                                        # (F, HW, C) f32

        # --- AdaptiveAvgPool2d((1, 1)) -> feat_vect (per frame, f32) --------
        fv_ref[...] = jnp.mean(x, axis=1, keepdims=True)      # (F, 1, C)

        # Flatten frames to rows; bf16 for the MXU, f32 accumulation.
        rows = x.reshape(n, c).astype(jnp.bfloat16)           # (F*HW, C)

        # --- Fused 1x1 convs (Embedding conv1 | conv_block conv1) + ReLU ----
        z = jnp.maximum(
            jnp.dot(rows, w1_ref[...], preferred_element_type=jnp.float32),
            0.0)                                              # (F*HW, 2*mid)
        e1 = z[:, :mid].astype(jnp.bfloat16)
        y1 = z[:, mid:]                                       # f32

        # --- Embedding conv2 + ReLU  (128-wide, lane-dense store) -----------
        e2 = jnp.maximum(
            jnp.dot(e1, ew2_ref[...], preferred_element_type=jnp.float32),
            0.0)
        emb_ref[...] = e2.reshape(f, hw, emb_dim)

        # --- conv_block 3x3 conv, padding=1 ----------------------------------
        # TODO(synk): TRA / SRA submodule definitions are not provided in the
        # reference source, so the aggregated map falls back to the raw frame.
        #
        # One MXU push against the tap-packed weights, then per-tap sublane
        # rolls + zero-padding validity masks (rolling rows commutes with the
        # right-matmul; so does the per-row mask).
        zt = jnp.dot(y1.astype(jnp.bfloat16), cw2_ref[...],
                     preferred_element_type=jnp.float32)      # (F*HW, 9*mid)
        acc = None
        k = 0
        for oy in (-1, 0, 1):
            for ox in (-1, 0, 1):
                tap = zt[:, k * mid:(k + 1) * mid]            # (F*HW, mid)
                off = oy * w + ox
                if off != 0:
                    tap = jnp.roll(tap, shift=-off, axis=0)
                    tap = tap * mask_ref[:, k:k + 1]          # zero the padding
                acc = tap if acc is None else acc + tap
                k += 1
        y2 = jnp.maximum(acc, 0.0)

        # --- conv_block conv3 (1x1) + ReLU -----------------------------------
        y3 = jnp.maximum(
            jnp.dot(y2.astype(jnp.bfloat16), cw3_ref[...],
                    preferred_element_type=jnp.float32), 0.0)
        out_ref[...] = y3.reshape(f, hw, c)

    return kernel


# ----------------------------------------------------------------------------
# Host-side constants
# ----------------------------------------------------------------------------
def make_tap_masks(h, w):
    """(HW, 9) validity masks for a 3x3 conv with padding=1.

    Tap order k = (oy+1)*3 + (ox+1); destination pixel p is valid for tap k
    iff its source pixel p + oy*w + ox lies inside the same frame.
    """
    hw = h * w
    p = jnp.arange(hw)
    hh, ww = p // w, p % w
    cols = []
    for oy in (-1, 0, 1):
        for ox in (-1, 0, 1):
            valid = ((hh + oy >= 0) & (hh + oy < h) &
                     (ww + ox >= 0) & (ww + ox < w))
            cols.append(valid)
    return jnp.stack(cols, axis=1).astype(jnp.float32)


def init_params(key, inplanes, mid_planes, eps=1e-5):
    """Deterministic init mirroring weights_init_kaiming + default BatchNorm.

    BatchNorm is taken in inference form with gamma=1, beta=0, running_mean=0,
    running_var=1  =>  BN(y) = y / sqrt(1 + eps); the scale folds into the
    conv weights and the bias is identically zero.
    TODO(synk): a trained checkpoint needs the general fold
        scale = gamma / sqrt(var + eps), bias = beta - mean * scale
    (plus a bias-add operand in the kernel), and PyTorch (Cout, Cin, kH, kW)
    conv weights must be permuted to the (kH, kW, Cin, Cout) layout used here.
    """
    bn_scale = 1.0 / jnp.sqrt(1.0 + eps)

    def kaiming(k, shape, fan_in):
        return jax.random.normal(k, shape, jnp.float32) * jnp.sqrt(2.0 / fan_in)

    ks = jax.random.split(key, 5)
    return {
        "emb_w1": kaiming(ks[0], (inplanes, mid_planes), inplanes) * bn_scale,
        "emb_w2": kaiming(ks[1], (mid_planes, 128), mid_planes) * bn_scale,
        "cb_w1": kaiming(ks[2], (inplanes, mid_planes), inplanes) * bn_scale,
        "cb_w2": kaiming(ks[3], (3, 3, mid_planes, mid_planes),
                         mid_planes * 9) * bn_scale,
        "cb_w3": kaiming(ks[4], (mid_planes, inplanes), mid_planes) * bn_scale,
    }


# ----------------------------------------------------------------------------
# Kernel wrapper
# ----------------------------------------------------------------------------
def stam_fused(x_flat, params, h, w, frames_per_block=None):
    """Run the fused STAM kernel.

    x_flat: (B*T, H*W, C) channels-last pixels (f32).
    Returns (feat_vect (B*T,1,C), embed (B*T,HW,128), out (B*T,HW,C)).
    """
    bt, hw, c = x_flat.shape
    mid = params["cb_w1"].shape[1]
    emb_dim = params["emb_w2"].shape[1]

    if frames_per_block is None:
        # >= 2 grid steps when possible so both v7x TensorCores get work;
        # on v5e/v6e the two larger steps still amortize per-step overhead.
        frames_per_block = bt // 2 if (bt % 2 == 0 and bt >= 2) else bt
    assert bt % frames_per_block == 0
    num_blocks = bt // frames_per_block
    fpb = frames_per_block

    # Host-side weight packing (BN already folded, bf16 for the MXU).
    w1 = jnp.concatenate([params["emb_w1"], params["cb_w1"]],
                         axis=1).astype(jnp.bfloat16)                # (C, 2*mid)
    ew2 = params["emb_w2"].astype(jnp.bfloat16)                      # (mid, 128)
    cw2 = jnp.transpose(params["cb_w2"], (2, 0, 1, 3)).reshape(
        mid, 9 * mid).astype(jnp.bfloat16)                           # (mid, 9*mid)
    cw3 = params["cb_w3"].astype(jnp.bfloat16)                       # (mid, C)
    masks = jnp.tile(make_tap_masks(h, w), (fpb, 1))                 # (fpb*HW, 9)

    kernel = _make_stam_kernel(w, mid)

    fv, emb, out = pl.pallas_call(
        kernel,
        out_shape=(
            jax.ShapeDtypeStruct((bt, 1, c), jnp.float32),
            jax.ShapeDtypeStruct((bt, hw, emb_dim), jnp.float32),
            jax.ShapeDtypeStruct((bt, hw, c), jnp.float32),
        ),
        grid=(num_blocks,),
        in_specs=[
            pl.BlockSpec((fpb, hw, c), lambda i: (i, 0, 0)),     # frame pixels
            pl.BlockSpec((c, 2 * mid), lambda i: (0, 0)),        # [emb_w1|cb_w1]
            pl.BlockSpec((mid, emb_dim), lambda i: (0, 0)),      # emb_w2
            pl.BlockSpec((mid, 9 * mid), lambda i: (0, 0)),      # cb_w2 (packed)
            pl.BlockSpec((mid, c), lambda i: (0, 0)),            # cb_w3
            pl.BlockSpec((fpb * hw, 9), lambda i: (0, 0)),       # tap masks
        ],
        out_specs=(
            pl.BlockSpec((fpb, 1, c), lambda i: (i, 0, 0)),
            pl.BlockSpec((fpb, hw, emb_dim), lambda i: (i, 0, 0)),
            pl.BlockSpec((fpb, hw, c), lambda i: (i, 0, 0)),
        ),
        compiler_params=pltpu.CompilerParams(
            dimension_semantics=("parallel",)),
    )(x_flat, w1, ew2, cw2, cw3, masks)
    return fv, emb, out


# ----------------------------------------------------------------------------
# STAM forward (matches the PyTorch module's NCHW interface)
# ----------------------------------------------------------------------------
def stam_forward(feat_map, params):
    b, t, c, h, w = feat_map.shape
    bt = b * t
    # Single layout conversion at the API boundary:
    # NCHW frames -> channels-last pixel rows (B*T, H*W, C).
    x = jnp.transpose(feat_map.reshape(bt, c, h * w), (0, 2, 1))

    fv, emb, out = stam_fused(x, params, h, w)

    feat_vect = fv.reshape(b, t, c)
    embed_feat = jnp.transpose(emb.reshape(bt, h, w, -1),
                               (0, 3, 1, 2)).reshape(b, t, -1, h, w)
    gap_feat_map = jnp.transpose(out.reshape(bt, h, w, c),
                                 (0, 3, 1, 2)).reshape(b, t, c, h, w)
    return gap_feat_map, feat_vect, embed_feat


# ----------------------------------------------------------------------------
# Pure-XLA reference (same folded weights, same bf16 rounding, same TRA/SRA stub)
# ----------------------------------------------------------------------------
def stam_reference(feat_map, params):
    b, t, c, h, w = feat_map.shape
    bt = b * t
    x = jnp.transpose(feat_map.reshape(bt, c, h, w), (0, 2, 3, 1))   # NHWC f32
    feat_vect = jnp.mean(x, axis=(1, 2)).reshape(b, t, c)

    rows = x.reshape(bt * h * w, c).astype(jnp.bfloat16)
    ew1 = params["emb_w1"].astype(jnp.bfloat16)
    ew2 = params["emb_w2"].astype(jnp.bfloat16)
    cw1 = params["cb_w1"].astype(jnp.bfloat16)
    cw2 = params["cb_w2"].astype(jnp.bfloat16)
    cw3 = params["cb_w3"].astype(jnp.bfloat16)

    e1 = jax.nn.relu(jnp.dot(rows, ew1, preferred_element_type=jnp.float32))
    e2 = jax.nn.relu(jnp.dot(e1.astype(jnp.bfloat16), ew2,
                             preferred_element_type=jnp.float32))
    embed_feat = jnp.transpose(e2.reshape(bt, h, w, -1),
                               (0, 3, 1, 2)).reshape(b, t, -1, h, w)

    mid = params["cb_w1"].shape[1]
    y1 = jax.nn.relu(jnp.dot(rows, cw1, preferred_element_type=jnp.float32))
    y1 = y1.astype(jnp.bfloat16).reshape(bt, h, w, mid)
    y2 = jax.nn.relu(jax.lax.conv_general_dilated(
        y1, cw2, window_strides=(1, 1), padding="SAME",
        dimension_numbers=("NHWC", "HWIO", "NHWC"),
        preferred_element_type=jnp.float32))
    y3 = jax.nn.relu(jnp.dot(y2.reshape(bt * h * w, mid).astype(jnp.bfloat16),
                             cw3, preferred_element_type=jnp.float32))
    out = jnp.transpose(y3.reshape(bt, h, w, c),
                        (0, 3, 1, 2)).reshape(b, t, c, h, w)
    return out, feat_vect, embed_feat


# ----------------------------------------------------------------------------
# Driver
# ----------------------------------------------------------------------------
if __name__ == "__main__":
    key = jax.random.PRNGKey(0)
    b, num, inplanes, mid_planes, h, w = 2, 4, 16, 16, 8, 8

    k_in, k_par = jax.random.split(key)
    feat_map = jax.random.normal(k_in, (b, num, inplanes, h, w), jnp.float32)
    params = init_params(k_par, inplanes, mid_planes)

    fwd = jax.jit(stam_forward)
    out, feat_vect, embed_feat = fwd(feat_map, params)
    jax.block_until_ready((out, feat_vect, embed_feat))

    assert out.shape == (b, num, inplanes, h, w)
    assert feat_vect.shape == (b, num, inplanes)
    assert embed_feat.shape == (b, num, 128, h, w)

    # Numerical check of the fused kernel against a pure-XLA reference that
    # applies the identical bf16 rounding (so tolerance stays tight enough to
    # catch any wrong tap ordering / orientation).
    ref_out, ref_fv, ref_emb = stam_reference(feat_map, params)
    for got, ref in ((out, ref_out), (feat_vect, ref_fv), (embed_feat, ref_emb)):
        assert jnp.allclose(got, ref, rtol=1e-2, atol=1e-2), \
            float(jnp.max(jnp.abs(got - ref)))

    print("KERNEL_OK")
</pallas_src>

<mosaic_0001>
module attributes {stable_mosaic.version = 11 : i64} {
  func.func @kernel(%arg0: i32, %arg1: memref<4x64x16xf32, #tpu.memory_space<vmem>>, %arg2: memref<16x32xbf16, #tpu.memory_space<vmem>>, %arg3: memref<16x128xbf16, #tpu.memory_space<vmem>>, %arg4: memref<16x144xbf16, #tpu.memory_space<vmem>>, %arg5: memref<16x16xbf16, #tpu.memory_space<vmem>>, %arg6: memref<256x9xf32, #tpu.memory_space<vmem>>, %arg7: memref<4x1x16xf32, #tpu.memory_space<vmem>>, %arg8: memref<4x64x128xf32, #tpu.memory_space<vmem>>, %arg9: memref<4x64x16xf32, #tpu.memory_space<vmem>>) attributes {dimension_semantics = [#tpu.dimension_semantics<parallel>], iteration_bounds = array<i64: 2>, scalar_prefetch = 0 : i64, scratch_operands = 0 : i64, tpu.core_type = #tpu.core_type<tc>, window_params = [{transform_indices = @transform_0, window_bounds = array<i64: 4, 64, 16>}, {pipeline_mode = #tpu.pipeline_mode<synchronous>, transform_indices = @transform_1, window_bounds = array<i64: 16, 32>}, {pipeline_mode = #tpu.pipeline_mode<synchronous>, transform_indices = @transform_2, window_bounds = array<i64: 16, 128>}, {pipeline_mode = #tpu.pipeline_mode<synchronous>, transform_indices = @transform_3, window_bounds = array<i64: 16, 144>}, {pipeline_mode = #tpu.pipeline_mode<synchronous>, transform_indices = @transform_4, window_bounds = array<i64: 16, 16>}, {pipeline_mode = #tpu.pipeline_mode<synchronous>, transform_indices = @transform_5, window_bounds = array<i64: 256, 9>}, {transform_indices = @transform_6, window_bounds = array<i64: 4, 1, 16>}, {transform_indices = @transform_7, window_bounds = array<i64: 4, 64, 128>}, {transform_indices = @transform_8, window_bounds = array<i64: 4, 64, 16>}]} {
    %c0 = arith.constant 0 : index
    %c0_0 = arith.constant 0 : index
    %c0_1 = arith.constant 0 : index
    %0 = vector.load %arg1[%c0, %c0_0, %c0_1] : memref<4x64x16xf32, #tpu.memory_space<vmem>>, vector<4x64x16xf32>
    %cst = arith.constant dense<0.000000e+00> : vector<4x16xf32>
    %1 = vector.multi_reduction <add>, %0, %cst [1] : vector<4x64x16xf32> to vector<4x16xf32>
    %2 = vector.shape_cast %1 : vector<4x16xf32> to vector<4x1x16xf32>
    %cst_2 = arith.constant 6.400000e+01 : f32
    %3 = vector.broadcast %cst_2 : f32 to vector<4x1x16xf32>
    %4 = arith.divf %2, %3 : vector<4x1x16xf32>
    %c0_3 = arith.constant 0 : index
    %c0_4 = arith.constant 0 : index
    %c0_5 = arith.constant 0 : index
    %5 = vector.load %arg7[%c0_3, %c0_4, %c0_5] : memref<4x1x16xf32, #tpu.memory_space<vmem>>, vector<4x1x16xf32>
    tpu.vector_store %arg7[%c0_3, %c0_4, %c0_5], %4 {strides = array<i32>} : memref<4x1x16xf32, #tpu.memory_space<vmem>>, vector<4x1x16xf32>,
    %6 = vector.shape_cast %0 : vector<4x64x16xf32> to vector<256x16xf32>
    %7 = arith.truncf %6 : vector<256x16xf32> to vector<256x16xbf16>
    %c0_6 = arith.constant 0 : index
    %c0_7 = arith.constant 0 : index
    %8 = vector.load %arg2[%c0_6, %c0_7] : memref<16x32xbf16, #tpu.memory_space<vmem>>, vector<16x32xbf16>
    %cst_8 = arith.constant dense<0.000000e+00> : vector<256x32xf32>
    %9 = tpu.matmul %7, %8, %cst_8 {dimension_numbers = #tpu.dot_dimension_numbers<[1], [0], [0], [1], [0, 0, 1, 1], [], []>} : vector<256x16xbf16>, vector<16x32xbf16>, vector<256x32xf32> -> vector<256x32xf32>
    %cst_9 = arith.constant 0.000000e+00 : f32
    %10 = vector.broadcast %cst_9 : f32 to vector<256x32xf32>
    %11 = arith.maximumf %9, %10 : vector<256x32xf32>
    %12 = vector.extract_strided_slice %11 {offsets = [0, 0], sizes = [256, 16], strides = [1, 1]} : vector<256x32xf32> to vector<256x16xf32>
    %13 = arith.truncf %12 : vector<256x16xf32> to vector<256x16xbf16>
    %14 = vector.extract_strided_slice %11 {offsets = [0, 16], sizes = [256, 16], strides = [1, 1]} : vector<256x32xf32> to vector<256x16xf32>
    %c0_10 = arith.constant 0 : index
    %c0_11 = arith.constant 0 : index
    %15 = vector.load %arg3[%c0_10, %c0_11] : memref<16x128xbf16, #tpu.memory_space<vmem>>, vector<16x128xbf16>
    %cst_12 = arith.constant dense<0.000000e+00> : vector<256x128xf32>
    %16 = tpu.matmul %13, %15, %cst_12 {dimension_numbers = #tpu.dot_dimension_numbers<[1], [0], [0], [1], [0, 0, 1, 1], [], []>} : vector<256x16xbf16>, vector<16x128xbf16>, vector<256x128xf32> -> vector<256x128xf32>
    %cst_13 = arith.constant 0.000000e+00 : f32
    %17 = vector.broadcast %cst_13 : f32 to vector<256x128xf32>
    %18 = arith.maximumf %16, %17 : vector<256x128xf32>
    %19 = vector.shape_cast %18 : vector<256x128xf32> to vector<4x64x128xf32>
    %c0_14 = arith.constant 0 : index
    %c0_15 = arith.constant 0 : index
    %c0_16 = arith.constant 0 : index
    %20 = vector.load %arg8[%c0_14, %c0_15, %c0_16] : memref<4x64x128xf32, #tpu.memory_space<vmem>>, vector<4x64x128xf32>
    tpu.vector_store %arg8[%c0_14, %c0_15, %c0_16], %19 {strides = array<i32>} : memref<4x64x128xf32, #tpu.memory_space<vmem>>, vector<4x64x128xf32>,
    %21 = arith.truncf %14 : vector<256x16xf32> to vector<256x16xbf16>
    %c0_17 = arith.constant 0 : index
    %c0_18 = arith.constant 0 : index
    %22 = vector.load %arg4[%c0_17, %c0_18] : memref<16x144xbf16, #tpu.memory_space<vmem>>, vector<16x144xbf16>
    %cst_19 = arith.constant dense<0.000000e+00> : vector<256x144xf32>
    %23 = tpu.matmul %21, %22, %cst_19 {dimension_numbers = #tpu.dot_dimension_numbers<[1], [0], [0], [1], [0, 0, 1, 1], [], []>} : vector<256x16xbf16>, vector<16x144xbf16>, vector<256x144xf32> -> vector<256x144xf32>
    %24 = vector.extract_strided_slice %23 {offsets = [0, 0], sizes = [256, 16], strides = [1, 1]} : vector<256x144xf32> to vector<256x16xf32>
    %25 = vector.extract_strided_slice %24 {offsets = [247, 0], sizes = [9, 16], strides = [1, 1]} : vector<256x16xf32> to vector<9x16xf32>
    %26 = vector.extract_strided_slice %24 {offsets = [0, 0], sizes = [247, 16], strides = [1, 1]} : vector<256x16xf32> to vector<247x16xf32>
    %27 = tpu.concatenate %25, %26 in 0 : vector<9x16xf32>, vector<247x16xf32> -> vector<256x16xf32>
    %c0_20 = arith.constant 0 : index
    %c0_21 = arith.constant 0 : index
    %28 = vector.load %arg6[%c0_20, %c0_21] : memref<256x9xf32, #tpu.memory_space<vmem>>, vector<256x1xf32>
    %29 = vector.broadcast %28 : vector<256x1xf32> to vector<256x16xf32>
    %30 = arith.mulf %27, %29 : vector<256x16xf32>
    %31 = vector.extract_strided_slice %23 {offsets = [0, 16], sizes = [256, 16], strides = [1, 1]} : vector<256x144xf32> to vector<256x16xf32>
    %32 = vector.extract_strided_slice %31 {offsets = [248, 0], sizes = [8, 16], strides = [1, 1]} : vector<256x16xf32> to vector<8x16xf32>
    %33 = vector.extract_strided_slice %31 {offsets = [0, 0], sizes = [248, 16], strides = [1, 1]} : vector<256x16xf32> to vector<248x16xf32>
    %34 = tpu.concatenate %32, %33 in 0 : vector<8x16xf32>, vector<248x16xf32> -> vector<256x16xf32>
    %c0_22 = arith.constant 0 : index
    %c1 = arith.constant 1 : index
    %35 = vector.load %arg6[%c0_22, %c1] : memref<256x9xf32, #tpu.memory_space<vmem>>, vector<256x1xf32>
    %36 = vector.broadcast %35 : vector<256x1xf32> to vector<256x16xf32>
    %37 = arith.mulf %34, %36 : vector<256x16xf32>
    %38 = arith.addf %30, %37 : vector<256x16xf32>
    %39 = vector.extract_strided_slice %23 {offsets = [0, 32], sizes = [256, 16], strides = [1, 1]} : vector<256x144xf32> to vector<256x16xf32>
    %40 = vector.extract_strided_slice %39 {offsets = [249, 0], sizes = [7, 16], strides = [1, 1]} : vector<256x16xf32> to vector<7x16xf32>
    %41 = vector.extract_strided_slice %39 {offsets = [0, 0], sizes = [249, 16], strides = [1, 1]} : vector<256x16xf32> to vector<249x16xf32>
    %42 = tpu.concatenate %40, %41 in 0 : vector<7x16xf32>, vector<249x16xf32> -> vector<256x16xf32>
    %c0_23 = arith.constant 0 : index
    %c2 = arith.constant 2 : index
    %43 = vector.load %arg6[%c0_23, %c2] : memref<256x9xf32, #tpu.memory_space<vmem>>, vector<256x1xf32>
    %44 = vector.broadcast %43 : vector<256x1xf32> to vector<256x16xf32>
    %45 = arith.mulf %42, %44 : vector<256x16xf32>
    %46 = arith.addf %38, %45 : vector<256x16xf32>
    %47 = vector.extract_strided_slice %23 {offsets = [0, 48], sizes = [256, 16], strides = [1, 1]} : vector<256x144xf32> to vector<256x16xf32>
    %48 = vector.extract_strided_slice %47 {offsets = [255, 0], sizes = [1, 16], strides = [1, 1]} : vector<256x16xf32> to vector<1x16xf32>
    %49 = vector.extract_strided_slice %47 {offsets = [0, 0], sizes = [255, 16], strides = [1, 1]} : vector<256x16xf32> to vector<255x16xf32>
    %50 = tpu.concatenate %48, %49 in 0 : vector<1x16xf32>, vector<255x16xf32> -> vector<256x16xf32>
    %c0_24 = arith.constant 0 : index
    %c3 = arith.constant 3 : index
    %51 = vector.load %arg6[%c0_24, %c3] : memref<256x9xf32, #tpu.memory_space<vmem>>, vector<256x1xf32>
    %52 = vector.broadcast %51 : vector<256x1xf32> to vector<256x16xf32>
    %53 = arith.mulf %50, %52 : vector<256x16xf32>
    %54 = arith.addf %46, %53 : vector<256x16xf32>
    %55 = vector.extract_strided_slice %23 {offsets = [0, 64], sizes = [256, 16], strides = [1, 1]} : vector<256x144xf32> to vector<256x16xf32>
    %56 = arith.addf %54, %55 : vector<256x16xf32>
    %57 = vector.extract_strided_slice %23 {offsets = [0, 80], sizes = [256, 16], strides = [1, 1]} : vector<256x144xf32> to vector<256x16xf32>
    %58 = vector.extract_strided_slice %57 {offsets = [1, 0], sizes = [255, 16], strides = [1, 1]} : vector<256x16xf32> to vector<255x16xf32>
    %59 = vector.extract_strided_slice %57 {offsets = [0, 0], sizes = [1, 16], strides = [1, 1]} : vector<256x16xf32> to vector<1x16xf32>
    %60 = tpu.concatenate %58, %59 in 0 : vector<255x16xf32>, vector<1x16xf32> -> vector<256x16xf32>
    %c0_25 = arith.constant 0 : index
    %c5 = arith.constant 5 : index
    %61 = vector.load %arg6[%c0_25, %c5] : memref<256x9xf32, #tpu.memory_space<vmem>>, vector<256x1xf32>
    %62 = vector.broadcast %61 : vector<256x1xf32> to vector<256x16xf32>
    %63 = arith.mulf %60, %62 : vector<256x16xf32>
    %64 = arith.addf %56, %63 : vector<256x16xf32>
    %65 = vector.extract_strided_slice %23 {offsets = [0, 96], sizes = [256, 16], strides = [1, 1]} : vector<256x144xf32> to vector<256x16xf32>
    %66 = vector.extract_strided_slice %65 {offsets = [7, 0], sizes = [249, 16], strides = [1, 1]} : vector<256x16xf32> to vector<249x16xf32>
    %67 = vector.extract_strided_slice %65 {offsets = [0, 0], sizes = [7, 16], strides = [1, 1]} : vector<256x16xf32> to vector<7x16xf32>
    %68 = tpu.concatenate %66, %67 in 0 : vector<249x16xf32>, vector<7x16xf32> -> vector<256x16xf32>
    %c0_26 = arith.constant 0 : index
    %c6 = arith.constant 6 : index
    %69 = vector.load %arg6[%c0_26, %c6] : memref<256x9xf32, #tpu.memory_space<vmem>>, vector<256x1xf32>
    %70 = vector.broadcast %69 : vector<256x1xf32> to vector<256x16xf32>
    %71 = arith.mulf %68, %70 : vector<256x16xf32>
    %72 = arith.addf %64, %71 : vector<256x16xf32>
    %73 = vector.extract_strided_slice %23 {offsets = [0, 112], sizes = [256, 16], strides = [1, 1]} : vector<256x144xf32> to vector<256x16xf32>
    %74 = vector.extract_strided_slice %73 {offsets = [8, 0], sizes = [248, 16], strides = [1, 1]} : vector<256x16xf32> to vector<248x16xf32>
    %75 = vector.extract_strided_slice %73 {offsets = [0, 0], sizes = [8, 16], strides = [1, 1]} : vector<256x16xf32> to vector<8x16xf32>
    %76 = tpu.concatenate %74, %75 in 0 : vector<248x16xf32>, vector<8x16xf32> -> vector<256x16xf32>
    %c0_27 = arith.constant 0 : index
    %c7 = arith.constant 7 : index
    %77 = vector.load %arg6[%c0_27, %c7] : memref<256x9xf32, #tpu.memory_space<vmem>>, vector<256x1xf32>
    %78 = vector.broadcast %77 : vector<256x1xf32> to vector<256x16xf32>
    %79 = arith.mulf %76, %78 : vector<256x16xf32>
    %80 = arith.addf %72, %79 : vector<256x16xf32>
    %81 = vector.extract_strided_slice %23 {offsets = [0, 128], sizes = [256, 16], strides = [1, 1]} : vector<256x144xf32> to vector<256x16xf32>
    %82 = vector.extract_strided_slice %81 {offsets = [9, 0], sizes = [247, 16], strides = [1, 1]} : vector<256x16xf32> to vector<247x16xf32>
    %83 = vector.extract_strided_slice %81 {offsets = [0, 0], sizes = [9, 16], strides = [1, 1]} : vector<256x16xf32> to vector<9x16xf32>
    %84 = tpu.concatenate %82, %83 in 0 : vector<247x16xf32>, vector<9x16xf32> -> vector<256x16xf32>
    %c0_28 = arith.constant 0 : index
    %c8 = arith.constant 8 : index
    %85 = vector.load %arg6[%c0_28, %c8] : memref<256x9xf32, #tpu.memory_space<vmem>>, vector<256x1xf32>
    %86 = vector.broadcast %85 : vector<256x1xf32> to vector<256x16xf32>
    %87 = arith.mulf %84, %86 : vector<256x16xf32>
    %88 = arith.addf %80, %87 : vector<256x16xf32>
    %cst_29 = arith.constant 0.000000e+00 : f32
    %89 = vector.broadcast %cst_29 : f32 to vector<256x16xf32>
    %90 = arith.maximumf %88, %89 : vector<256x16xf32>
    %91 = arith.truncf %90 : vector<256x16xf32> to vector<256x16xbf16>
    %c0_30 = arith.constant 0 : index
    %c0_31 = arith.constant 0 : index
    %92 = vector.load %arg5[%c0_30, %c0_31] : memref<16x16xbf16, #tpu.memory_space<vmem>>, vector<16x16xbf16>
    %cst_32 = arith.constant dense<0.000000e+00> : vector<256x16xf32>
    %93 = tpu.matmul %91, %92, %cst_32 {dimension_numbers = #tpu.dot_dimension_numbers<[1], [0], [0], [1], [0, 0, 1, 1], [], []>} : vector<256x16xbf16>, vector<16x16xbf16>, vector<256x16xf32> -> vector<256x16xf32>
    %cst_33 = arith.constant 0.000000e+00 : f32
    %94 = vector.broadcast %cst_33 : f32 to vector<256x16xf32>
    %95 = arith.maximumf %93, %94 : vector<256x16xf32>
    %96 = vector.shape_cast %95 : vector<256x16xf32> to vector<4x64x16xf32>
    %c0_34 = arith.constant 0 : index
    %c0_35 = arith.constant 0 : index
    %c0_36 = arith.constant 0 : index
    %97 = vector.load %arg9[%c0_34, %c0_35, %c0_36] : memref<4x64x16xf32, #tpu.memory_space<vmem>>, vector<4x64x16xf32>
    tpu.vector_store %arg9[%c0_34, %c0_35, %c0_36], %96 {strides = array<i32>} : memref<4x64x16xf32, #tpu.memory_space<vmem>>, vector<4x64x16xf32>,
    return
  }
  func.func @transform_0(%arg0: i32) -> (i32, i32, i32) {
    %c0_i32 = arith.constant 0 : i32
    %c0_i32_0 = arith.constant 0 : i32
    %c0_i32_1 = arith.constant 0 : i32
    return %arg0, %c0_i32, %c0_i32_0 : i32, i32, i32
  }
  func.func @transform_1(%arg0: i32) -> (i32, i32) {
    %c0_i32 = arith.constant 0 : i32
    %c0_i32_0 = arith.constant 0 : i32
    %c0_i32_1 = arith.constant 0 : i32
    return %c0_i32, %c0_i32_0 : i32, i32
  }
  func.func @transform_2(%arg0: i32) -> (i32, i32) {
    %c0_i32 = arith.constant 0 : i32
    %c0_i32_0 = arith.constant 0 : i32
    %c0_i32_1 = arith.constant 0 : i32
    return %c0_i32, %c0_i32_0 : i32, i32
  }
  func.func @transform_3(%arg0: i32) -> (i32, i32) {
    %c0_i32 = arith.constant 0 : i32
    %c0_i32_0 = arith.constant 0 : i32
    %c0_i32_1 = arith.constant 0 : i32
    return %c0_i32, %c0_i32_0 : i32, i32
  }
  func.func @transform_4(%arg0: i32) -> (i32, i32) {
    %c0_i32 = arith.constant 0 : i32
    %c0_i32_0 = arith.constant 0 : i32
    %c0_i32_1 = arith.constant 0 : i32
    return %c0_i32, %c0_i32_0 : i32, i32
  }
  func.func @transform_5(%arg0: i32) -> (i32, i32) {
    %c0_i32 = arith.constant 0 : i32
    %c0_i32_0 = arith.constant 0 : i32
    %c0_i32_1 = arith.constant 0 : i32
    return %c0_i32, %c0_i32_0 : i32, i32
  }
  func.func @transform_6(%arg0: i32) -> (i32, i32, i32) {
    %c0_i32 = arith.constant 0 : i32
    %c0_i32_0 = arith.constant 0 : i32
    %c0_i32_1 = arith.constant 0 : i32
    return %arg0, %c0_i32, %c0_i32_0 : i32, i32, i32
  }
  func.func @transform_7(%arg0: i32) -> (i32, i32, i32) {
    %c0_i32 = arith.constant 0 : i32
    %c0_i32_0 = arith.constant 0 : i32
    %c0_i32_1 = arith.constant 0 : i32
    return %arg0, %c0_i32, %c0_i32_0 : i32, i32, i32
  }
  func.func @transform_8(%arg0: i32) -> (i32, i32, i32) {
    %c0_i32 = arith.constant 0 : i32
    %c0_i32_0 = arith.constant 0 : i32
    %c0_i32_1 = arith.constant 0 : i32
    return %arg0, %c0_i32, %c0_i32_0 : i32, i32, i32
  }
}

</mosaic_0001>

<llo_original>
// kernel: stam_forward.1
$region0: #{stam_forward.1}
  #allocation0 [shape = 'u32[]', space=smem, size = 0x4, offset = 0x4, fixed_abs, tag = 'smem constant byte address 0x4 - core index']
  #allocation1 [shape = 'u32[144,128]{1,0:T(1,128)}', space=vmem, size = 0x12000, scoped, tag = 'internal scratch']
  %s0 = inlined_call_operand.vmem [shape: f32[8,64,16], index: 0, kind: input, shape index: {}]
  %s1 = inlined_call_operand.vmem [shape: bf16[16,32], index: 1, kind: input, shape index: {}]
  %s2 = inlined_call_operand.vmem [shape: bf16[16,128], index: 2, kind: input, shape index: {}]
  %s3 = inlined_call_operand.vmem [shape: bf16[16,144], index: 3, kind: input, shape index: {}]
  %s4 = inlined_call_operand.vmem [shape: bf16[16,16], index: 4, kind: input, shape index: {}]
  %s5 = inlined_call_operand.vmem [shape: f32[256,9], index: 5, kind: input, shape index: {}]
  %s6 = inlined_call_operand.hbm [shape: f32[8,1,16], index: 6, kind: output, shape index: {0}]
  %s7 = inlined_call_operand.hbm [shape: f32[8,64,128], index: 7, kind: output, shape index: {1}]
  %s8 = inlined_call_operand.hbm [shape: f32[8,64,16], index: 8, kind: output, shape index: {2}]
  %9 = xla_tuple %s6, %s7, %s8
  %s10 = sld [smem:[#allocation0]]
  $region73: #{stam_forward.1} parent=0
    _
  %s12 = ssub.s32 1, %s10
  %s13 = scalar_select 0, %s12, %s10
  $region1: #{stam_forward.1} parent=0
    #allocation2 [shape = 'u8[4096]{0}', space=vmem, size = 0x1000, scoped, tag = 'output window, operand 0']
    #allocation3 [shape = 's32[2]{0}', space=sflag, size = 0x8, scoped, tag = 'scoped memory for stam_forward.1']
    #allocation4 [shape = 'u8[262144]{0}', space=vmem, size = 0x40000, scoped, tag = 'output window, operand 1']
    #allocation5 [shape = 's32[2]{0}', space=sflag, size = 0x8, scoped, tag = 'scoped memory for stam_forward.1']
    #allocation6 [shape = 'u8[262144]{0}', space=vmem, size = 0x40000, scoped, tag = 'output window, operand 2']
    %14 = vsyncpa [#allocation3], 0
    %s15 = scalar_lea.sflag [#allocation3], 1
    %16 = vsyncpa %s15, 0
    %17 = vsyncpa [#allocation5], 0
    %s18 = scalar_lea.sflag [#allocation5], 1
    %19 = vsyncpa %s18, 0
    loop: start=0, step=1, limit=4
    $region2: #{stam_forward.1} parent=1 // loop_pre_header
      _
    $region3: #{stam_forward.1} parent=1 // loop_header
      %s21 = sphi 0, %s25
      %p22 = scmp.ge.s32.totalorder %s21, 4
      %s31 = sphi 0, %s33
      %s34 = sphi 0, %s31
      %s35 = sphi 0, %s34
      %s51 = sphi 0, %s35
      %s55 = sphi 0, %s55
      %s57 = sphi 0, %s55
      %s58 = sphi 0, %s57
      %s72 = sphi 0, %s58
      %s76 = sphi 0, %s76
      %s78 = sphi 0, %s76
      %s79 = sphi 0, %s78
      %s93 = sphi 0, %s79
      %s97 = sphi 0, %s97
      %s99 = sphi 0, %s97
      %s100 = sphi 0, %s99
      %s114 = sphi 0, %s100
      %s118 = sphi 0, %s118
      %s120 = sphi 0, %s118
      %s121 = sphi 0, %s120
      %s135 = sphi 0, %s121
      %s139 = sphi 0, %s139
      %s141 = sphi 0, %s139
      %s142 = sphi 0, %s141
      %s156 = sphi 0, %s142
      %s162 = sphi 0, %s164
      %s165 = sphi 0, %s162
      %s166 = sphi 0, %s165
      %s182 = sphi 0, %s166
      %s188 = sphi 0, %s190
      %s191 = sphi 0, %s188
      %s192 = sphi 0, %s191
      %s208 = sphi 0, %s192
      %s214 = sphi 0, %s216
      %s217 = sphi 0, %s214
      %s218 = sphi 0, %s217
      %s234 = sphi 0, %s218
    $region4: #{stam_forward.1} parent=1 // loop_header_branch
      %24 = sbr.rel (%p22) target = $region8
    $region5: #{stam_forward.1} parent=1 // loop_body
      %s26 = ssub.s32 %s21, 1
      %s27 = ssub.s32 %s21, 2
      %s28 = sadd.s32 %s21, 1
      %s29 = ssub.s32 %s21, %s28
      %p30 = scmp.eq.s32.totalorder %s29, 0
      %s32 = sadd.s32 %s31, 1
      %s33 = scalar_select %p30, %s31, %s32
      %p36 = pneg %p30
      %p37 = scmp.eq.s32.totalorder %s21, 1
      %p38 = por %p36, %p37
      %p39 = scmp.ne.s32.totalorder %s31, %s34
      %p40 = scmp.eq.s32.totalorder %s21, 0
      %p41 = por %p39, %p40
      %p42 = scmp.ne.s32.totalorder %s31, %s34
      %p43 = scmp.eq.s32.totalorder %s26, 1
      %p44 = por %p42, %p43
      %p45 = scmp.ne.s32.totalorder %s34, %s35
      %p46 = scmp.eq.s32.totalorder %s26, 0
      %p47 = por %p45, %p46
      %p48 = scmp.ne.s32.totalorder %s34, %s35
      %p49 = scmp.eq.s32.totalorder %s27, 1
      %p50 = por %p48, %p49
      %p52 = scmp.ne.s32.totalorder %s35, %s51
      %p53 = scmp.eq.s32.totalorder %s27, 0
      %p54 = por %p52, %p53
      %s56 = sadd.s32 %s55, 1
      %p59 = scmp.eq.s32.totalorder %s21, 1
      %p60 = scmp.ne.s32.totalorder %s55, %s57
      %p61 = scmp.eq.s32.totalorder %s21, 0
      %p62 = por %p60, %p61
      %p63 = scmp.ne.s32.totalorder %s55, %s57
      %p64 = scmp.eq.s32.totalorder %s26, 1
      %p65 = por %p63, %p64
      %p66 = scmp.ne.s32.totalorder %s57, %s58
      %p67 = scmp.eq.s32.totalorder %s26, 0
      %p68 = por %p66, %p67
      %p69 = scmp.ne.s32.totalorder %s57, %s58
      %p70 = scmp.eq.s32.totalorder %s27, 1
      %p71 = por %p69, %p70
      %p73 = scmp.ne.s32.totalorder %s58, %s72
      %p74 = scmp.eq.s32.totalorder %s27, 0
      %p75 = por %p73, %p74
      %s77 = sadd.s32 %s76, 1
      %p80 = scmp.eq.s32.totalorder %s21, 1
      %p81 = scmp.ne.s32.totalorder %s76, %s78
      %p82 = scmp.eq.s32.totalorder %s21, 0
      %p83 = por %p81, %p82
      %p84 = scmp.ne.s32.totalorder %s76, %s78
      %p85 = scmp.eq.s32.totalorder %s26, 1
      %p86 = por %p84, %p85
      %p87 = scmp.ne.s32.totalorder %s78, %s79
      %p88 = scmp.eq.s32.totalorder %s26, 0
      %p89 = por %p87, %p88
      %p90 = scmp.ne.s32.totalorder %s78, %s79
      %p91 = scmp.eq.s32.totalorder %s27, 1
      %p92 = por %p90, %p91
      %p94 = scmp.ne.s32.totalorder %s79, %s93
      %p95 = scmp.eq.s32.totalorder %s27, 0
      %p96 = por %p94, %p95
      %s98 = sadd.s32 %s97, 1
      %p101 = scmp.eq.s32.totalorder %s21, 1
      %p102 = scmp.ne.s32.totalorder %s97, %s99
      %p103 = scmp.eq.s32.totalorder %s21, 0
      %p104 = por %p102, %p103
      %p105 = scmp.ne.s32.totalorder %s97, %s99
      %p106 = scmp.eq.s32.totalorder %s26, 1
      %p107 = por %p105, %p106
      %p108 = scmp.ne.s32.totalorder %s99, %s100
      %p109 = scmp.eq.s32.totalorder %s26, 0
      %p110 = por %p108, %p109
      %p111 = scmp.ne.s32.totalorder %s99, %s100
      %p112 = scmp.eq.s32.totalorder %s27, 1
      %p113 = por %p111, %p112
      %p115 = scmp.ne.s32.totalorder %s100, %s114
      %p116 = scmp.eq.s32.totalorder %s27, 0
      %p117 = por %p115, %p116
      %s119 = sadd.s32 %s118, 1
      %p122 = scmp.eq.s32.totalorder %s21, 1
      %p123 = scmp.ne.s32.totalorder %s118, %s120
      %p124 = scmp.eq.s32.totalorder %s21, 0
      %p125 = por %p123, %p124
      %p126 = scmp.ne.s32.totalorder %s118, %s120
      %p127 = scmp.eq.s32.totalorder %s26, 1
      %p128 = por %p126, %p127
      %p129 = scmp.ne.s32.totalorder %s120, %s121
      %p130 = scmp.eq.s32.totalorder %s26, 0
      %p131 = por %p129, %p130
      %p132 = scmp.ne.s32.totalorder %s120, %s121
      %p133 = scmp.eq.s32.totalorder %s27, 1
      %p134 = por %p132, %p133
      %p136 = scmp.ne.s32.totalorder %s121, %s135
      %p137 = scmp.eq.s32.totalorder %s27, 0
      %p138 = por %p136, %p137
      %s140 = sadd.s32 %s139, 1
      %p143 = scmp.eq.s32.totalorder %s21, 1
      %p144 = scmp.ne.s32.totalorder %s139, %s141
      %p145 = scmp.eq.s32.totalorder %s21, 0
      %p146 = por %p144, %p145
      %p147 = scmp.ne.s32.totalorder %s139, %s141
      %p148 = scmp.eq.s32.totalorder %s26, 1
      %p149 = por %p147, %p148
      %p150 = scmp.ne.s32.totalorder %s141, %s142
      %p151 = scmp.eq.s32.totalorder %s26, 0
      %p152 = por %p150, %p151
      %p153 = scmp.ne.s32.totalorder %s141, %s142
      %p154 = scmp.eq.s32.totalorder %s27, 1
      %p155 = por %p153, %p154
      %p157 = scmp.ne.s32.totalorder %s142, %s156
      %p158 = scmp.eq.s32.totalorder %s27, 0
      %p159 = por %p157, %p158
      %s160 = ssub.s32 %s21, %s28
      %p161 = scmp.eq.s32.totalorder %s160, 0
      %s163 = sadd.s32 %s162, 1
      %s164 = scalar_select %p161, %s162, %s163
      %p167 = pneg %p161
      %p168 = scmp.eq.s32.totalorder %s21, 1
      %p169 = por %p167, %p168
      %p170 = scmp.ne.s32.totalorder %s162, %s165
      %p171 = scmp.eq.s32.totalorder %s21, 0
      %p172 = por %p170, %p171
      %p173 = scmp.ne.s32.totalorder %s162, %s165
      %p174 = scmp.eq.s32.totalorder %s26, 1
      %p175 = por %p173, %p174
      %p176 = scmp.ne.s32.totalorder %s165, %s166
      %p177 = scmp.eq.s32.totalorder %s26, 0
      %p178 = por %p176, %p177
      %p179 = scmp.ne.s32.totalorder %s165, %s166
      %p180 = scmp.eq.s32.totalorder %s27, 1
      %p181 = por %p179, %p180
      %p183 = scmp.ne.s32.totalorder %s166, %s182
      %p184 = scmp.eq.s32.totalorder %s27, 0
      %p185 = por %p183, %p184
      %s186 = ssub.s32 %s21, %s28
      %p187 = scmp.eq.s32.totalorder %s186, 0
      %s189 = sadd.s32 %s188, 1
      %s190 = scalar_select %p187, %s188, %s189
      %p193 = pneg %p187
      %p194 = scmp.eq.s32.totalorder %s21, 1
      %p195 = por %p193, %p194
      %p196 = scmp.ne.s32.totalorder %s188, %s191
      %p197 = scmp.eq.s32.totalorder %s21, 0
      %p198 = por %p196, %p197
      %p199 = scmp.ne.s32.totalorder %s188, %s191
      %p200 = scmp.eq.s32.totalorder %s26, 1
      %p201 = por %p199, %p200
      %p202 = scmp.ne.s32.totalorder %s191, %s192
      %p203 = scmp.eq.s32.totalorder %s26, 0
      %p204 = por %p202, %p203
      %p205 = scmp.ne.s32.totalorder %s191, %s192
      %p206 = scmp.eq.s32.totalorder %s27, 1
      %p207 = por %p205, %p206
      %p209 = scmp.ne.s32.totalorder %s192, %s208
      %p210 = scmp.eq.s32.totalorder %s27, 0
      %p211 = por %p209, %p210
      %s212 = ssub.s32 %s21, %s28
      %p213 = scmp.eq.s32.totalorder %s212, 0
      %s215 = sadd.s32 %s214, 1
      %s216 = scalar_select %p213, %s214, %s215
      %p219 = pneg %p213
      %p220 = scmp.eq.s32.totalorder %s21, 1
      %p221 = por %p219, %p220
      %p222 = scmp.ne.s32.totalorder %s214, %s217
      %p223 = scmp.eq.s32.totalorder %s21, 0
      %p224 = por %p222, %p223
      %p225 = scmp.ne.s32.totalorder %s214, %s217
      %p226 = scmp.eq.s32.totalorder %s26, 1
      %p227 = por %p225, %p226
      %p228 = scmp.ne.s32.totalorder %s217, %s218
      %p229 = scmp.eq.s32.totalorder %s26, 0
      %p230 = por %p228, %p229
      %p231 = scmp.ne.s32.totalorder %s217, %s218
      %p232 = scmp.eq.s32.totalorder %s27, 1
      %p233 = por %p231, %p232
      %p235 = scmp.ne.s32.totalorder %s218, %s234
      %p236 = scmp.eq.s32.totalorder %s27, 0
      %p237 = por %p235, %p236
      %p238 = scmp.le.s32.totalorder 1, %s21
      %p239 = scmp.lt.s32.totalorder %s21, 3
      %p240 = pnand %p238, %p239
      %p241 = pneg %p240
      // Predicated region
      $region9: #{stam_forward.1} parent=5 // pred_check
        _
      $region10: #{stam_forward.1} parent=5 // pred_check_branch
        %243 = sbr.rel (%p240) target = $region12
      $region11: #{stam_forward.1} parent=5 // pred_region
        %s244 = ssub.s32 %s21, 1
        // Predicated region
        $region13: #{stam_forward.1} parent=11 // pred_check
          %p245 = pneg %p68
        $region14: #{stam_forward.1} parent=11 // pred_check_branch
          %247 = sbr.rel (%p245) target = $region16
        $region15: #{stam_forward.1} parent=11 // pred_region
          _
        $region16: #{stam_forward.1} parent=11 // pred_fallthru
          _
        // Predicated region
        $region17: #{stam_forward.1} parent=11 // pred_check
          %p248 = pneg %p89
        $region18: #{stam_forward.1} parent=11 // pred_check_branch
          %250 = sbr.rel (%p248) target = $region20
        $region19: #{stam_forward.1} parent=11 // pred_region
          _
        $region20: #{stam_forward.1} parent=11 // pred_fallthru
          _
        // Predicated region
        $region21: #{stam_forward.1} parent=11 // pred_check
          %p251 = pneg %p110
        $region22: #{stam_forward.1} parent=11 // pred_check_branch
          %253 = sbr.rel (%p251) target = $region24
        $region23: #{stam_forward.1} parent=11 // pred_region
          _
        $region24: #{stam_forward.1} parent=11 // pred_fallthru
          _
        // Predicated region
        $region25: #{stam_forward.1} parent=11 // pred_check
          %p254 = pneg %p131
        $region26: #{stam_forward.1} parent=11 // pred_check_branch
          %256 = sbr.rel (%p254) target = $region28
        $region27: #{stam_forward.1} parent=11 // pred_region
          _
        $region28: #{stam_forward.1} parent=11 // pred_fallthru
          _
        // Predicated region
        $region29: #{stam_forward.1} parent=11 // pred_check
          %p257 = pneg %p152
        $region30: #{stam_forward.1} parent=11 // pred_check_branch
          %259 = sbr.rel (%p257) target = $region32
        $region31: #{stam_forward.1} parent=11 // pred_region
          _
        $region32: #{stam_forward.1} parent=11 // pred_fallthru
          _
      $region12: #{stam_forward.1} parent=5 // pred_fallthru
        _
      %p260 = scmp.lt.s32.totalorder %s21, 2
      // Predicated region
      $region33: #{stam_forward.1} parent=5 // pred_check
        %p261 = pneg %p260
      $region34: #{stam_forward.1} parent=5 // pred_check_branch
        %263 = sbr.rel (%p261) target = $region36
      $region35: #{stam_forward.1} parent=5 // pred_region
        // Predicated region
        $region37: #{stam_forward.1} parent=35 // pred_check
          %p264 = pneg %p41
        $region38: #{stam_forward.1} parent=35 // pred_check_branch
          %266 = sbr.rel (%p264) target = $region40
        $region39: #{stam_forward.1} parent=35 // pred_region
          %s267 = smul.u32 4, %s21
          %p268 = scmp.lt.s32.totalorder %s267, 7
          %s269 = scalar_select %p268, %s267, 7
          %s270 = smul.addr %s269, 8
          %s271 = smul.addr %s270, 8
          %s272 = scalar_lea.vmem %s0, %s271
          %s273 = smul.u32 4, %s21
        $region40: #{stam_forward.1} parent=35 // pred_fallthru
          _
      $region36: #{stam_forward.1} parent=5 // pred_fallthru
        _
      %p274 = scmp.le.s32.totalorder 1, %s21
      %p275 = scmp.lt.s32.totalorder %s21, 3
      %p276 = pnand %p274, %p275
      %p277 = pneg %p276
      // Predicated region
      $region41: #{stam_forward.1} parent=5 // pred_check
        _
      $region42: #{stam_forward.1} parent=5 // pred_check_branch
        %279 = sbr.rel (%p276) target = $region44
      $region43: #{stam_forward.1} parent=5 // pred_region
        %s280 = ssub.s32 %s21, 1
        %s281 = smul.u32 4, %s26
        %p282 = scmp.lt.s32.totalorder %s281, 7
        %s283 = scalar_select %p282, %s281, 7
        %s284 = smul.addr %s283, 8
        %s285 = smul.addr %s284, 8
        %s286 = scalar_lea.vmem %s0, %s285
        %p287 = pneg %p47
        %p288 = pneg %p44
        %p289 = pneg %p68
        %p290 = pneg %p65
        %p291 = pneg %p89
        %p292 = pneg %p86
        %p293 = pneg %p110
        %p294 = pneg %p107
        %p295 = pneg %p131
        %p296 = pneg %p128
        %p297 = pneg %p152
        %p298 = pneg %p149
        %p299 = pneg %p178
        %p300 = pneg %p175
        %s301 = sand.u32 %s165, 1
        %s302 = scalar_lea.sflag [#allocation3], %s301
        %s303 = sand.u32 %s165, 1
        %s304 = smul.addr %s303, 4
        %s305 = scalar_lea.vmem [#allocation2], %s304
        %p306 = pneg %p204
        %p307 = pneg %p201
        %s308 = sand.u32 %s26, 1
        %s309 = scalar_lea.sflag [#allocation5], %s308
        %s310 = sand.u32 %s191, 1
        %s311 = smul.addr %s310, 256
        %s312 = scalar_lea.vmem [#allocation4], %s311
        %p313 = pneg %p230
        %p314 = pneg %p227
        %s315 = sand.u32 %s26, 1
        %s316 = scalar_lea.sflag [#allocation5], %s315
        %s317 = sand.u32 %s217, 1
        %s318 = smul.addr %s317, 256
        %s319 = scalar_lea.vmem [#allocation6], %s318
        %s320 = smul.u32 4, %s26
        %p321 = scmp.lt.s32.totalorder %s320, 7
        %s322 = scalar_select %p321, %s320, 7
        %s323 = smul.addr %s322, 8
        %s324 = smul.addr %s323, 8
        %s325 = scalar_lea.vmem %s0, %s324
        %s326 = smul.u32 4, %s26
        %s327 = smul.u32 4, %s26
        %s328 = smul.u32 4, %s26
        %s329 = smul.u32 4, %s26
        %v331 = vld [vmem:[%s325] sm:$0xff]
        %v332 = vld [vmem:[%s325 + $0x8] sm:$0xff]
        %v333 = vld [vmem:[%s325 + $0x10] sm:$0xff]
        %v334 = vld [vmem:[%s325 + $0x18] sm:$0xff]
        %v335 = vld [vmem:[%s325 + $0x20] sm:$0xff]
        %v336 = vld [vmem:[%s325 + $0x28] sm:$0xff]
        %v337 = vld [vmem:[%s325 + $0x30] sm:$0xff]
        %v338 = vld [vmem:[%s325 + $0x38] sm:$0xff]
        %v339 = vld [vmem:[%s325 + $0x40] sm:$0xff]
        %v340 = vld [vmem:[%s325 + $0x48] sm:$0xff]
        %v341 = vld [vmem:[%s325 + $0x50] sm:$0xff]
        %v342 = vld [vmem:[%s325 + $0x58] sm:$0xff]
        %v343 = vld [vmem:[%s325 + $0x60] sm:$0xff]
        %v344 = vld [vmem:[%s325 + $0x68] sm:$0xff]
        %v345 = vld [vmem:[%s325 + $0x70] sm:$0xff]
        %v346 = vld [vmem:[%s325 + $0x78] sm:$0xff]
        %v347 = vld [vmem:[%s325 + $0x80] sm:$0xff]
        %v348 = vld [vmem:[%s325 + $0x88] sm:$0xff]
        %v349 = vld [vmem:[%s325 + $0x90] sm:$0xff]
        %v350 = vld [vmem:[%s325 + $0x98] sm:$0xff]
        %v351 = vld [vmem:[%s325 + $0xa0] sm:$0xff]
        %v352 = vld [vmem:[%s325 + $0xa8] sm:$0xff]
        %v353 = vld [vmem:[%s325 + $0xb0] sm:$0xff]
        %v354 = vld [vmem:[%s325 + $0xb8] sm:$0xff]
        %v355 = vld [vmem:[%s325 + $0xc0] sm:$0xff]
        %v356 = vld [vmem:[%s325 + $0xc8] sm:$0xff]
        %v357 = vld [vmem:[%s325 + $0xd0] sm:$0xff]
        %v358 = vld [vmem:[%s325 + $0xd8] sm:$0xff]
        %v359 = vld [vmem:[%s325 + $0xe0] sm:$0xff]
        %v360 = vld [vmem:[%s325 + $0xe8] sm:$0xff]
        %v361 = vld [vmem:[%s325 + $0xf0] sm:$0xff]
        %v362 = vld [vmem:[%s325 + $0xf8] sm:$0xff]
        %vm363 = vcmask 130048
        %v364 = vsel %vm363, %v331, 0.0
        %v365 = vsel %vm363, %v332, 0.0
        %v366 = vadd.f32 %v364, %v365
        %v367 = vsel %vm363, %v333, 0.0
        %v368 = vadd.f32 %v366, %v367
        %v369 = vsel %vm363, %v334, 0.0
        %v370 = vadd.f32 %v368, %v369
        %v371 = vsel %vm363, %v335, 0.0
        %v372 = vadd.f32 %v370, %v371
        %v373 = vsel %vm363, %v336, 0.0
        %v374 = vadd.f32 %v372, %v373
        %v375 = vsel %vm363, %v337, 0.0
        %v376 = vadd.f32 %v374, %v375
        %v377 = vsel %vm363, %v338, 0.0
        %v378 = vadd.f32 %v376, %v377
        %v379 = vrot.slane %v378, 4
        %v380 = vadd.f32 %v378, %v379
        %v381 = vrot.slane %v380, 2
        %v382 = vadd.f32 %v380, %v381
        %v383 = vrot.slane %v382, 1
        %v384 = vadd.f32 %v382, %v383
        %v385 = vsel %vm363, %v339, 0.0
        %v386 = vsel %vm363, %v340, 0.0
        %v387 = vadd.f32 %v385, %v386
        %v388 = vsel %vm363, %v341, 0.0
        %v389 = vadd.f32 %v387, %v388
        %v390 = vsel %vm363, %v342, 0.0
        %v391 = vadd.f32 %v389, %v390
        %v392 = vsel %vm363, %v343, 0.0
        %v393 = vadd.f32 %v391, %v392
        %v394 = vsel %vm363, %v344, 0.0
        %v395 = vadd.f32 %v393, %v394
        %v396 = vsel %vm363, %v345, 0.0
        %v397 = vadd.f32 %v395, %v396
        %v398 = vsel %vm363, %v346, 0.0
        %v399 = vadd.f32 %v397, %v398
        %v400 = vrot.slane %v399, 4
        %v401 = vadd.f32 %v399, %v400
        %v402 = vrot.slane %v401, 2
        %v403 = vadd.f32 %v401, %v402
        %v404 = vrot.slane %v403, 1
        %v405 = vadd.f32 %v403, %v404
        %v406 = vsel %vm363, %v347, 0.0
        %v407 = vsel %vm363, %v348, 0.0
        %v408 = vadd.f32 %v406, %v407
        %v409 = vsel %vm363, %v349, 0.0
        %v410 = vadd.f32 %v408, %v409
        %v411 = vsel %vm363, %v350, 0.0
        %v412 = vadd.f32 %v410, %v411
        %v413 = vsel %vm363, %v351, 0.0
        %v414 = vadd.f32 %v412, %v413
        %v415 = vsel %vm363, %v352, 0.0
        %v416 = vadd.f32 %v414, %v415
        %v417 = vsel %vm363, %v353, 0.0
        %v418 = vadd.f32 %v416, %v417
        %v419 = vsel %vm363, %v354, 0.0
        %v420 = vadd.f32 %v418, %v419
        %v421 = vrot.slane %v420, 4
        %v422 = vadd.f32 %v420, %v421
        %v423 = vrot.slane %v422, 2
        %v424 = vadd.f32 %v422, %v423
        %v425 = vrot.slane %v424, 1
        %v426 = vadd.f32 %v424, %v425
        %v427 = vsel %vm363, %v355, 0.0
        %v428 = vsel %vm363, %v356, 0.0
        %v429 = vadd.f32 %v427, %v428
        %v430 = vsel %vm363, %v357, 0.0
        %v431 = vadd.f32 %v429, %v430
        %v432 = vsel %vm363, %v358, 0.0
        %v433 = vadd.f32 %v431, %v432
        %v434 = vsel %vm363, %v359, 0.0
        %v435 = vadd.f32 %v433, %v434
        %v436 = vsel %vm363, %v360, 0.0
        %v437 = vadd.f32 %v435, %v436
        %v438 = vsel %vm363, %v361, 0.0
        %v439 = vadd.f32 %v437, %v438
        %v440 = vsel %vm363, %v362, 0.0
        %v441 = vadd.f32 %v439, %v440
        %v442 = vrot.slane %v441, 4
        %v443 = vadd.f32 %v441, %v442
        %v444 = vrot.slane %v443, 2
        %v445 = vadd.f32 %v443, %v444
        %v446 = vrot.slane %v445, 1
        %v447 = vadd.f32 %v445, %v446
        %v448 = vrcp.pop 64.0
        %v449 = vmul.f32 %v384, %v448
        %v450 = vmul.f32 %v405, %v448
        %v451 = vmul.f32 %v426, %v448
        %v452 = vmul.f32 %v447, %v448
        %vm453 = vcmask 122880
        %454 = vst.msk [vmem:[%s305] sm:$0x1] %vm453, %v449
        %455 = vst.msk [vmem:[%s305 + $0x1] sm:$0x1] %vm453, %v450
        %456 = vst.msk [vmem:[%s305 + $0x2] sm:$0x1] %vm453, %v451
        %457 = vst.msk [vmem:[%s305 + $0x3] sm:$0x1] %vm453, %v452
        %v458 = vpack.c.bf16 %v332, %v331
        %v459 = vpack.c.bf16 %v334, %v333
        %v460 = vpack.c.bf16 %v336, %v335
        %v461 = vpack.c.bf16 %v338, %v337
        %v462 = vpack.c.bf16 %v340, %v339
        %v463 = vpack.c.bf16 %v342, %v341
        %v464 = vpack.c.bf16 %v344, %v343
        %v465 = vpack.c.bf16 %v346, %v345
        %v466 = vpack.c.bf16 %v348, %v347
        %v467 = vpack.c.bf16 %v350, %v349
        %v468 = vpack.c.bf16 %v352, %v351
        %v469 = vpack.c.bf16 %v354, %v353
        %v470 = vpack.c.bf16 %v356, %v355
        %v471 = vpack.c.bf16 %v358, %v357
        %v472 = vpack.c.bf16 %v360, %v359
        %v473 = vpack.c.bf16 %v362, %v361
        %v474 = vld [vmem:[%s1] sm:$0xf]
        %v475 = vld [vmem:[%s1 + $0x4] sm:$0xf]
        %v478 = vunpack.c.l.b16 %v474
        %v479 = vunpack.c.l.b16 %v475
        %v480 = vpack.c.b16 %v479, %v478
        %v483 = vsel %vm363, %v458, 0
        %v486 = vsel %vm363, %v459, 0
        %v489 = vsel %vm363, %v460, 0
        %v492 = vsel %vm363, %v461, 0
        %v495 = vsel %vm363, %v462, 0
        %v498 = vsel %vm363, %v463, 0
        %v501 = vsel %vm363, %v464, 0
        %v504 = vsel %vm363, %v465, 0
        %v507 = vsel %vm363, %v466, 0
        %v510 = vsel %vm363, %v467, 0
        %v513 = vsel %vm363, %v468, 0
        %v516 = vsel %vm363, %v469, 0
        %v519 = vsel %vm363, %v470, 0
        %v522 = vsel %vm363, %v471, 0
        %v525 = vsel %vm363, %v472, 0
        %v528 = vsel %vm363, %v473, 0
        %530 = vmatprep.subr.bf16.mxu0 0
        %531 = vmatpush1.bf16.msra.mxu0 0
        %532 = vmatprep.subr.bf16.mxu0 0
        %533 = vmatpush1.bf16.msra.mxu0 0
        %534 = vmatprep.subr.bf16.mxu0 0
        %535 = vmatpush1.bf16.msra.mxu0 0
        %536 = vmatprep.subr.bf16.mxu0 0
        %537 = vmatpush1.bf16.msra.mxu0 0
        %538 = vmatprep.subr.bf16.mxu0 0
        %539 = vmatpush1.bf16.msra.mxu0 0
        %540 = vmatprep.subr.bf16.mxu0 0
        %541 = vmatpush1.bf16.msra.mxu0 0
        %542 = vmatprep.subr.bf16.mxu0 0
        %543 = vmatpush1.bf16.msra.mxu0 0
        %544 = vmatprep.subr.bf16.mxu0 0
        %545 = vmatpush1.bf16.msra.mxu0 %v480
        %546 = vmatprep.subr.bf16.mxu0 0
        %547 = vmatpush2.bf16.msra.mxu0 0
        %548 = vmatprep.subr.bf16.mxu0 0
        %549 = vmatpush2.bf16.msra.mxu0 0
        %550 = vmatprep.subr.bf16.mxu0 0
        %551 = vmatpush2.bf16.msra.mxu0 0
        %552 = vmatprep.subr.bf16.mxu0 0
        %553 = vmatpush2.bf16.msra.mxu0 0
        %554 = vmatprep.subr.bf16.mxu0 0
        %555 = vmatpush2.bf16.msra.mxu0 0
        %556 = vmatprep.subr.bf16.mxu0 0
        %557 = vmatpush2.bf16.msra.mxu0 0
        %558 = vmatprep.subr.bf16.mxu0 0
        %559 = vmatpush2.bf16.msra.mxu0 0
        %560 = vmatprep.subr.bf16.mxu0 0
        %561 = vmatpush2.bf16.msra.mxu0 0
        %562 = vmatprep.mubr.bf16.mxu0 0
        %563 = vmatmul.mubr.bf16.gmra.mxu0 %v483
        %v564 = vpop.f32.mrf.mxu0
        %v565 = vadd.f32 0.0, %v564
        %v566 = vpop.f32.mrf.mxu0
        %v567 = vpop.f32.mrf.mxu0
        %v568 = vadd.f32 0.0, %v567
        %v569 = vpop.f32.mrf.mxu0
        %570 = vmatprep.mubr.bf16.mxu0 0
        %571 = vmatmul.mubr.bf16.gmra.mxu0 %v486
        %v572 = vpop.f32.mrf.mxu0
        %v573 = vadd.f32 0.0, %v572
        %v574 = vpop.f32.mrf.mxu0
        %v575 = vpop.f32.mrf.mxu0
        %v576 = vadd.f32 0.0, %v575
        %v577 = vpop.f32.mrf.mxu0
        %578 = vmatprep.mubr.bf16.mxu0 0
        %579 = vmatmul.mubr.bf16.gmra.mxu0 %v489
        %v580 = vpop.f32.mrf.mxu0
        %v581 = vadd.f32 0.0, %v580
        %v582 = vpop.f32.mrf.mxu0
        %v583 = vpop.f32.mrf.mxu0
        %v584 = vadd.f32 0.0, %v583
        %v585 = vpop.f32.mrf.mxu0
        %586 = vmatprep.mubr.bf16.mxu0 0
        %587 = vmatmul.mubr.bf16.gmra.mxu0 %v492
        %v588 = vpop.f32.mrf.mxu0
        %v589 = vadd.f32 0.0, %v588
        %v590 = vpop.f32.mrf.mxu0
        %v591 = vpop.f32.mrf.mxu0
        %v592 = vadd.f32 0.0, %v591
        %v593 = vpop.f32.mrf.mxu0
        %594 = vmatprep.mubr.bf16.mxu0 0
        %595 = vmatmul.mubr.bf16.gmra.mxu0 %v495
        %v596 = vpop.f32.mrf.mxu0
        %v597 = vadd.f32 0.0, %v596
        %v598 = vpop.f32.mrf.mxu0
        %v599 = vpop.f32.mrf.mxu0
        %v600 = vadd.f32 0.0, %v599
        %v601 = vpop.f32.mrf.mxu0
        %602 = vmatprep.mubr.bf16.mxu0 0
        %603 = vmatmul.mubr.bf16.gmra.mxu0 %v498
        %v604 = vpop.f32.mrf.mxu0
        %v605 = vadd.f32 0.0, %v604
        %v606 = vpop.f32.mrf.mxu0
        %v607 = vpop.f32.mrf.mxu0
        %v608 = vadd.f32 0.0, %v607
        %v609 = vpop.f32.mrf.mxu0
        %610 = vmatprep.mubr.bf16.mxu0 0
        %611 = vmatmul.mubr.bf16.gmra.mxu0 %v501
        %v612 = vpop.f32.mrf.mxu0
        %v613 = vadd.f32 0.0, %v612
        %v614 = vpop.f32.mrf.mxu0
        %v615 = vpop.f32.mrf.mxu0
        %v616 = vadd.f32 0.0, %v615
        %v617 = vpop.f32.mrf.mxu0
        %618 = vmatprep.mubr.bf16.mxu0 0
        %619 = vmatmul.mubr.bf16.gmra.mxu0 %v504
        %v620 = vpop.f32.mrf.mxu0
        %v621 = vadd.f32 0.0, %v620
        %v622 = vpop.f32.mrf.mxu0
        %v623 = vpop.f32.mrf.mxu0
        %v624 = vadd.f32 0.0, %v623
        %v625 = vpop.f32.mrf.mxu0
        %626 = vmatprep.mubr.bf16.mxu0 0
        %627 = vmatmul.mubr.bf16.gmra.mxu0 %v507
        %v628 = vpop.f32.mrf.mxu0
        %v629 = vadd.f32 0.0, %v628
        %v630 = vpop.f32.mrf.mxu0
        %v631 = vpop.f32.mrf.mxu0
        %v632 = vadd.f32 0.0, %v631
        %v633 = vpop.f32.mrf.mxu0
        %634 = vmatprep.mubr.bf16.mxu0 0
        %635 = vmatmul.mubr.bf16.gmra.mxu0 %v510
        %v636 = vpop.f32.mrf.mxu0
        %v637 = vadd.f32 0.0, %v636
        %v638 = vpop.f32.mrf.mxu0
        %v639 = vpop.f32.mrf.mxu0
        %v640 = vadd.f32 0.0, %v639
        %v641 = vpop.f32.mrf.mxu0
        %642 = vmatprep.mubr.bf16.mxu0 0
        %643 = vmatmul.mubr.bf16.gmra.mxu0 %v513
        %v644 = vpop.f32.mrf.mxu0
        %v645 = vadd.f32 0.0, %v644
        %v646 = vpop.f32.mrf.mxu0
        %v647 = vpop.f32.mrf.mxu0
        %v648 = vadd.f32 0.0, %v647
        %v649 = vpop.f32.mrf.mxu0
        %650 = vmatprep.mubr.bf16.mxu0 0
        %651 = vmatmul.mubr.bf16.gmra.mxu0 %v516
        %v652 = vpop.f32.mrf.mxu0
        %v653 = vadd.f32 0.0, %v652
        %v654 = vpop.f32.mrf.mxu0
        %v655 = vpop.f32.mrf.mxu0
        %v656 = vadd.f32 0.0, %v655
        %v657 = vpop.f32.mrf.mxu0
        %658 = vmatprep.mubr.bf16.mxu0 0
        %659 = vmatmul.mubr.bf16.gmra.mxu0 %v519
        %v660 = vpop.f32.mrf.mxu0
        %v661 = vadd.f32 0.0, %v660
        %v662 = vpop.f32.mrf.mxu0
        %v663 = vpop.f32.mrf.mxu0
        %v664 = vadd.f32 0.0, %v663
        %v665 = vpop.f32.mrf.mxu0
        %666 = vmatprep.mubr.bf16.mxu0 0
        %667 = vmatmul.mubr.bf16.gmra.mxu0 %v522
        %v668 = vpop.f32.mrf.mxu0
        %v669 = vadd.f32 0.0, %v668
        %v670 = vpop.f32.mrf.mxu0
        %v671 = vpop.f32.mrf.mxu0
        %v672 = vadd.f32 0.0, %v671
        %v673 = vpop.f32.mrf.mxu0
        %674 = vmatprep.mubr.bf16.mxu0 0
        %675 = vmatmul.mubr.bf16.gmra.mxu0 %v525
        %v676 = vpop.f32.mrf.mxu0
        %v677 = vadd.f32 0.0, %v676
        %v678 = vpop.f32.mrf.mxu0
        %v679 = vpop.f32.mrf.mxu0
        %v680 = vadd.f32 0.0, %v679
        %v681 = vpop.f32.mrf.mxu0
        %682 = vmatprep.mubr.bf16.mxu0 0
        %683 = vmatmul.mubr.bf16.gmra.mxu0 %v528
        %v684 = vpop.f32.mrf.mxu0
        %v685 = vadd.f32 0.0, %v684
        %v686 = vpop.f32.mrf.mxu0
        %v687 = vpop.f32.mrf.mxu0
        %v688 = vadd.f32 0.0, %v687
        %v689 = vpop.f32.mrf.mxu0
        %690 = vdwg.mxu0
        %v691 = vmax.f32 %v565, 0.0
        %v692 = vmax.f32 %v568, 0.0
        %v693 = vmax.f32 %v573, 0.0
        %v694 = vmax.f32 %v576, 0.0
        %v695 = vmax.f32 %v581, 0.0
        %v696 = vmax.f32 %v584, 0.0
        %v697 = vmax.f32 %v589, 0.0
        %v698 = vmax.f32 %v592, 0.0
        %v699 = vmax.f32 %v597, 0.0
        %v700 = vmax.f32 %v600, 0.0
        %v701 = vmax.f32 %v605, 0.0
        %v702 = vmax.f32 %v608, 0.0
        %v703 = vmax.f32 %v613, 0.0
        %v704 = vmax.f32 %v616, 0.0
        %v705 = vmax.f32 %v621, 0.0
        %v706 = vmax.f32 %v624, 0.0
        %v707 = vmax.f32 %v629, 0.0
        %v708 = vmax.f32 %v632, 0.0
        %v709 = vmax.f32 %v637, 0.0
        %v710 = vmax.f32 %v640, 0.0
        %v711 = vmax.f32 %v645, 0.0
        %v712 = vmax.f32 %v648, 0.0
        %v713 = vmax.f32 %v653, 0.0
        %v714 = vmax.f32 %v656, 0.0
        %v715 = vmax.f32 %v661, 0.0
        %v716 = vmax.f32 %v664, 0.0
        %v717 = vmax.f32 %v669, 0.0
        %v718 = vmax.f32 %v672, 0.0
        %v719 = vmax.f32 %v677, 0.0
        %v720 = vmax.f32 %v680, 0.0
        %v721 = vmax.f32 %v685, 0.0
        %v722 = vmax.f32 %v688, 0.0
        %v723 = vpack.c.bf16 %v692, %v691
        %v724 = vpack.c.bf16 %v694, %v693
        %v725 = vpack.c.bf16 %v696, %v695
        %v726 = vpack.c.bf16 %v698, %v697
        %v727 = vpack.c.bf16 %v700, %v699
        %v728 = vpack.c.bf16 %v702, %v701
        %v729 = vpack.c.bf16 %v704, %v703
        %v730 = vpack.c.bf16 %v706, %v705
        %v731 = vpack.c.bf16 %v708, %v707
        %v732 = vpack.c.bf16 %v710, %v709
        %v733 = vpack.c.bf16 %v712, %v711
        %v734 = vpack.c.bf16 %v714, %v713
        %v735 = vpack.c.bf16 %v716, %v715
        %v736 = vpack.c.bf16 %v718, %v717
        %v737 = vpack.c.bf16 %v720, %v719
        %v738 = vpack.c.bf16 %v722, %v721
        %v739 = vld [vmem:[%s2] sm:$0xf]
        %v740 = vld [vmem:[%s2 + $0x4] sm:$0xf]
        %v743 = vunpack.c.l.b16 %v739
        %v744 = vunpack.c.l.b16 %v740
        %v745 = vpack.c.b16 %v744, %v743
        %v748 = vsel %vm363, %v723, 0
        %v751 = vsel %vm363, %v724, 0
        %v754 = vsel %vm363, %v725, 0
        %v757 = vsel %vm363, %v726, 0
        %v760 = vsel %vm363, %v727, 0
        %v763 = vsel %vm363, %v728, 0
        %v766 = vsel %vm363, %v729, 0
        %v769 = vsel %vm363, %v730, 0
        %v772 = vsel %vm363, %v731, 0
        %v775 = vsel %vm363, %v732, 0
        %v778 = vsel %vm363, %v733, 0
        %v781 = vsel %vm363, %v734, 0
        %v784 = vsel %vm363, %v735, 0
        %v787 = vsel %vm363, %v736, 0
        %v790 = vsel %vm363, %v737, 0
        %v793 = vsel %vm363, %v738, 0
        %795 = vmatprep.subr.bf16.mxu0 0
        %796 = vmatpush1.bf16.msra.mxu0 0
        %797 = vmatprep.subr.bf16.mxu0 0
        %798 = vmatpush1.bf16.msra.mxu0 0
        %799 = vmatprep.subr.bf16.mxu0 0
        %800 = vmatpush1.bf16.msra.mxu0 0
        %801 = vmatprep.subr.bf16.mxu0 0
        %802 = vmatpush1.bf16.msra.mxu0 0
        %803 = vmatprep.subr.bf16.mxu0 0
        %804 = vmatpush1.bf16.msra.mxu0 0
        %805 = vmatprep.subr.bf16.mxu0 0
        %806 = vmatpush1.bf16.msra.mxu0 0
        %807 = vmatprep.subr.bf16.mxu0 0
        %808 = vmatpush1.bf16.msra.mxu0 0
        %809 = vmatprep.subr.bf16.mxu0 0
        %810 = vmatpush1.bf16.msra.mxu0 %v745
        %811 = vmatprep.subr.bf16.mxu0 0
        %812 = vmatpush2.bf16.msra.mxu0 0
        %813 = vmatprep.subr.bf16.mxu0 0
        %814 = vmatpush2.bf16.msra.mxu0 0
        %815 = vmatprep.subr.bf16.mxu0 0
        %816 = vmatpush2.bf16.msra.mxu0 0
        %817 = vmatprep.subr.bf16.mxu0 0
        %818 = vmatpush2.bf16.msra.mxu0 0
        %819 = vmatprep.subr.bf16.mxu0 0
        %820 = vmatpush2.bf16.msra.mxu0 0
        %821 = vmatprep.subr.bf16.mxu0 0
        %822 = vmatpush2.bf16.msra.mxu0 0
        %823 = vmatprep.subr.bf16.mxu0 0
        %824 = vmatpush2.bf16.msra.mxu0 0
        %825 = vmatprep.subr.bf16.mxu0 0
        %826 = vmatpush2.bf16.msra.mxu0 0
        %827 = vmatprep.mubr.bf16.mxu0 0
        %828 = vmatmul.mubr.bf16.gmra.mxu0 %v748
        %v829 = vpop.f32.mrf.mxu0
        %v830 = vadd.f32 0.0, %v829
        %v831 = vpop.f32.mrf.mxu0
        %v832 = vpop.f32.mrf.mxu0
        %v833 = vadd.f32 0.0, %v832
        %v834 = vpop.f32.mrf.mxu0
        %835 = vmatprep.mubr.bf16.mxu0 0
        %836 = vmatmul.mubr.bf16.gmra.mxu0 %v751
        %v837 = vpop.f32.mrf.mxu0
        %v838 = vadd.f32 0.0, %v837
        %v839 = vpop.f32.mrf.mxu0
        %v840 = vpop.f32.mrf.mxu0
        %v841 = vadd.f32 0.0, %v840
        %v842 = vpop.f32.mrf.mxu0
        %843 = vmatprep.mubr.bf16.mxu0 0
        %844 = vmatmul.mubr.bf16.gmra.mxu0 %v754
        %v845 = vpop.f32.mrf.mxu0
        %v846 = vadd.f32 0.0, %v845
        %v847 = vpop.f32.mrf.mxu0
        %v848 = vpop.f32.mrf.mxu0
        %v849 = vadd.f32 0.0, %v848
        %v850 = vpop.f32.mrf.mxu0
        %851 = vmatprep.mubr.bf16.mxu0 0
        %852 = vmatmul.mubr.bf16.gmra.mxu0 %v757
        %v853 = vpop.f32.mrf.mxu0
        %v854 = vadd.f32 0.0, %v853
        %v855 = vpop.f32.mrf.mxu0
        %v856 = vpop.f32.mrf.mxu0
        %v857 = vadd.f32 0.0, %v856
        %v858 = vpop.f32.mrf.mxu0
        %859 = vmatprep.mubr.bf16.mxu0 0
        %860 = vmatmul.mubr.bf16.gmra.mxu0 %v760
        %v861 = vpop.f32.mrf.mxu0
        %v862 = vadd.f32 0.0, %v861
        %v863 = vpop.f32.mrf.mxu0
        %v864 = vpop.f32.mrf.mxu0
        %v865 = vadd.f32 0.0, %v864
        %v866 = vpop.f32.mrf.mxu0
        %867 = vmatprep.mubr.bf16.mxu0 0
        %868 = vmatmul.mubr.bf16.gmra.mxu0 %v763
        %v869 = vpop.f32.mrf.mxu0
        %v870 = vadd.f32 0.0, %v869
        %v871 = vpop.f32.mrf.mxu0
        %v872 = vpop.f32.mrf.mxu0
        %v873 = vadd.f32 0.0, %v872
        %v874 = vpop.f32.mrf.mxu0
        %875 = vmatprep.mubr.bf16.mxu0 0
        %876 = vmatmul.mubr.bf16.gmra.mxu0 %v766
        %v877 = vpop.f32.mrf.mxu0
        %v878 = vadd.f32 0.0, %v877
        %v879 = vpop.f32.mrf.mxu0
        %v880 = vpop.f32.mrf.mxu0
        %v881 = vadd.f32 0.0, %v880
        %v882 = vpop.f32.mrf.mxu0
        %883 = vmatprep.mubr.bf16.mxu0 0
        %884 = vmatmul.mubr.bf16.gmra.mxu0 %v769
        %v885 = vpop.f32.mrf.mxu0
        %v886 = vadd.f32 0.0, %v885
        %v887 = vpop.f32.mrf.mxu0
        %v888 = vpop.f32.mrf.mxu0
        %v889 = vadd.f32 0.0, %v888
        %v890 = vpop.f32.mrf.mxu0
        %891 = vmatprep.mubr.bf16.mxu0 0
        %892 = vmatmul.mubr.bf16.gmra.mxu0 %v772
        %v893 = vpop.f32.mrf.mxu0
        %v894 = vadd.f32 0.0, %v893
        %v895 = vpop.f32.mrf.mxu0
        %v896 = vpop.f32.mrf.mxu0
        %v897 = vadd.f32 0.0, %v896
        %v898 = vpop.f32.mrf.mxu0
        %899 = vmatprep.mubr.bf16.mxu0 0
        %900 = vmatmul.mubr.bf16.gmra.mxu0 %v775
        %v901 = vpop.f32.mrf.mxu0
        %v902 = vadd.f32 0.0, %v901
        %v903 = vpop.f32.mrf.mxu0
        %v904 = vpop.f32.mrf.mxu0
        %v905 = vadd.f32 0.0, %v904
        %v906 = vpop.f32.mrf.mxu0
        %907 = vmatprep.mubr.bf16.mxu0 0
        %908 = vmatmul.mubr.bf16.gmra.mxu0 %v778
        %v909 = vpop.f32.mrf.mxu0
        %v910 = vadd.f32 0.0, %v909
        %v911 = vpop.f32.mrf.mxu0
        %v912 = vpop.f32.mrf.mxu0
        %v913 = vadd.f32 0.0, %v912
        %v914 = vpop.f32.mrf.mxu0
        %915 = vmatprep.mubr.bf16.mxu0 0
        %916 = vmatmul.mubr.bf16.gmra.mxu0 %v781
        %v917 = vpop.f32.mrf.mxu0
        %v918 = vadd.f32 0.0, %v917
        %v919 = vpop.f32.mrf.mxu0
        %v920 = vpop.f32.mrf.mxu0
        %v921 = vadd.f32 0.0, %v920
        %v922 = vpop.f32.mrf.mxu0
        %923 = vmatprep.mubr.bf16.mxu0 0
        %924 = vmatmul.mubr.bf16.gmra.mxu0 %v784
        %v925 = vpop.f32.mrf.mxu0
        %v926 = vadd.f32 0.0, %v925
        %v927 = vpop.f32.mrf.mxu0
        %v928 = vpop.f32.mrf.mxu0
        %v929 = vadd.f32 0.0, %v928
        %v930 = vpop.f32.mrf.mxu0
        %931 = vmatprep.mubr.bf16.mxu0 0
        %932 = vmatmul.mubr.bf16.gmra.mxu0 %v787
        %v933 = vpop.f32.mrf.mxu0
        %v934 = vadd.f32 0.0, %v933
        %v935 = vpop.f32.mrf.mxu0
        %v936 = vpop.f32.mrf.mxu0
        %v937 = vadd.f32 0.0, %v936
        %v938 = vpop.f32.mrf.mxu0
        %939 = vmatprep.mubr.bf16.mxu0 0
        %940 = vmatmul.mubr.bf16.gmra.mxu0 %v790
        %v941 = vpop.f32.mrf.mxu0
        %v942 = vadd.f32 0.0, %v941
        %v943 = vpop.f32.mrf.mxu0
        %v944 = vpop.f32.mrf.mxu0
        %v945 = vadd.f32 0.0, %v944
        %v946 = vpop.f32.mrf.mxu0
        %947 = vmatprep.mubr.bf16.mxu0 0
        %948 = vmatmul.mubr.bf16.gmra.mxu0 %v793
        %v949 = vpop.f32.mrf.mxu0
        %v950 = vadd.f32 0.0, %v949
        %v951 = vpop.f32.mrf.mxu0
        %v952 = vpop.f32.mrf.mxu0
        %v953 = vadd.f32 0.0, %v952
        %v954 = vpop.f32.mrf.mxu0
        %955 = vdwg.mxu0
        %v956 = vmax.f32 %v830, 0.0
        %v957 = vmax.f32 %v833, 0.0
        %v958 = vmax.f32 %v838, 0.0
        %v959 = vmax.f32 %v841, 0.0
        %v960 = vmax.f32 %v846, 0.0
        %v961 = vmax.f32 %v849, 0.0
        %v962 = vmax.f32 %v854, 0.0
        %v963 = vmax.f32 %v857, 0.0
        %v964 = vmax.f32 %v862, 0.0
        %v965 = vmax.f32 %v865, 0.0
        %v966 = vmax.f32 %v870, 0.0
        %v967 = vmax.f32 %v873, 0.0
        %v968 = vmax.f32 %v878, 0.0
        %v969 = vmax.f32 %v881, 0.0
        %v970 = vmax.f32 %v886, 0.0
        %v971 = vmax.f32 %v889, 0.0
        %v972 = vmax.f32 %v894, 0.0
        %v973 = vmax.f32 %v897, 0.0
        %v974 = vmax.f32 %v902, 0.0
        %v975 = vmax.f32 %v905, 0.0
        %v976 = vmax.f32 %v910, 0.0
        %v977 = vmax.f32 %v913, 0.0
        %v978 = vmax.f32 %v918, 0.0
        %v979 = vmax.f32 %v921, 0.0
        %v980 = vmax.f32 %v926, 0.0
        %v981 = vmax.f32 %v929, 0.0
        %v982 = vmax.f32 %v934, 0.0
        %v983 = vmax.f32 %v937, 0.0
        %v984 = vmax.f32 %v942, 0.0
        %v985 = vmax.f32 %v945, 0.0
        %v986 = vmax.f32 %v950, 0.0
        %v987 = vmax.f32 %v953, 0.0
        %988 = vst [vmem:[%s312] sm:$0xff] %v956
        %989 = vst [vmem:[%s312 + $0x8] sm:$0xff] %v957
        %990 = vst [vmem:[%s312 + $0x10] sm:$0xff] %v958
        %991 = vst [vmem:[%s312 + $0x18] sm:$0xff] %v959
        %992 = vst [vmem:[%s312 + $0x20] sm:$0xff] %v960
        %993 = vst [vmem:[%s312 + $0x28] sm:$0xff] %v961
        %994 = vst [vmem:[%s312 + $0x30] sm:$0xff] %v962
        %995 = vst [vmem:[%s312 + $0x38] sm:$0xff] %v963
        %996 = vst [vmem:[%s312 + $0x40] sm:$0xff] %v964
        %997 = vst [vmem:[%s312 + $0x48] sm:$0xff] %v965
        %998 = vst [vmem:[%s312 + $0x50] sm:$0xff] %v966
        %999 = vst [vmem:[%s312 + $0x58] sm:$0xff] %v967
        %1000 = vst [vmem:[%s312 + $0x60] sm:$0xff] %v968
        %1001 = vst [vmem:[%s312 + $0x68] sm:$0xff] %v969
        %1002 = vst [vmem:[%s312 + $0x70] sm:$0xff] %v970
        %1003 = vst [vmem:[%s312 + $0x78] sm:$0xff] %v971
        %1004 = vst [vmem:[%s312 + $0x80] sm:$0xff] %v972
        %1005 = vst [vmem:[%s312 + $0x88] sm:$0xff] %v973
        %1006 = vst [vmem:[%s312 + $0x90] sm:$0xff] %v974
        %1007 = vst [vmem:[%s312 + $0x98] sm:$0xff] %v975
        %1008 = vst [vmem:[%s312 + $0xa0] sm:$0xff] %v976
        %1009 = vst [vmem:[%s312 + $0xa8] sm:$0xff] %v977
        %1010 = vst [vmem:[%s312 + $0xb0] sm:$0xff] %v978
        %1011 = vst [vmem:[%s312 + $0xb8] sm:$0xff] %v979
        %1012 = vst [vmem:[%s312 + $0xc0] sm:$0xff] %v980
        %1013 = vst [vmem:[%s312 + $0xc8] sm:$0xff] %v981
        %1014 = vst [vmem:[%s312 + $0xd0] sm:$0xff] %v982
        %1015 = vst [vmem:[%s312 + $0xd8] sm:$0xff] %v983
        %1016 = vst [vmem:[%s312 + $0xe0] sm:$0xff] %v984
        %1017 = vst [vmem:[%s312 + $0xe8] sm:$0xff] %v985
        %1018 = vst [vmem:[%s312 + $0xf0] sm:$0xff] %v986
        %1019 = vst [vmem:[%s312 + $0xf8] sm:$0xff] %v987
        %v1020 = vld [vmem:[%s3] sm:$0xff]
        %v1021 = vld [vmem:[%s3 + $0x8] sm:$0xff]
        %1038 = vrot.lane.b32.xlu0 %v723, 112
        %v1039 = vpop.permute.xlu0 %1038
        %1040 = vrot.lane.b32.xlu0 %v724, 112
        %v1041 = vpop.permute.xlu0 %1040
        %1042 = vrot.lane.b32.xlu0 %v725, 112
        %v1043 = vpop.permute.xlu0 %1042
        %1044 = vrot.lane.b32.xlu0 %v726, 112
        %v1045 = vpop.permute.xlu0 %1044
        %1046 = vrot.lane.b32.xlu0 %v727, 112
        %v1047 = vpop.permute.xlu0 %1046
        %1048 = vrot.lane.b32.xlu0 %v728, 112
        %v1049 = vpop.permute.xlu0 %1048
        %1050 = vrot.lane.b32.xlu0 %v729, 112
        %v1051 = vpop.permute.xlu0 %1050
        %1052 = vrot.lane.b32.xlu0 %v730, 112
        %v1053 = vpop.permute.xlu0 %1052
        %1054 = vrot.lane.b32.xlu0 %v731, 112
        %v1055 = vpop.permute.xlu0 %1054
        %1056 = vrot.lane.b32.xlu0 %v732, 112
        %v1057 = vpop.permute.xlu0 %1056
        %1058 = vrot.lane.b32.xlu0 %v733, 112
        %v1059 = vpop.permute.xlu0 %1058
        %1060 = vrot.lane.b32.xlu0 %v734, 112
        %v1061 = vpop.permute.xlu0 %1060
        %1062 = vrot.lane.b32.xlu0 %v735, 112
        %v1063 = vpop.permute.xlu0 %1062
        %1064 = vrot.lane.b32.xlu0 %v736, 112
        %v1065 = vpop.permute.xlu0 %1064
        %1066 = vrot.lane.b32.xlu0 %v737, 112
        %v1067 = vpop.permute.xlu0 %1066
        %1068 = vrot.lane.b32.xlu0 %v738, 112
        %v1069 = vpop.permute.xlu0 %1068
        %v1072 = vunpack.c.l.b16 %v1020
        %v1073 = vunpack.c.h.b16 %v1020
        %v1074 = vunpack.c.l.b16 %v1021
        %v1075 = vunpack.c.h.b16 %v1021
        %v1076 = vpack.c.b16 %v1074, %v1072
        %v1077 = vpack.c.b16 %v1075, %v1073
        %v1081 = vsel %vm363, %v1039, 0
        %v1084 = vsel %vm363, %v1041, 0
        %v1087 = vsel %vm363, %v1043, 0
        %v1090 = vsel %vm363, %v1045, 0
        %v1093 = vsel %vm363, %v1047, 0
        %v1096 = vsel %vm363, %v1049, 0
        %v1099 = vsel %vm363, %v1051, 0
        %v1102 = vsel %vm363, %v1053, 0
        %v1105 = vsel %vm363, %v1055, 0
        %v1108 = vsel %vm363, %v1057, 0
        %v1111 = vsel %vm363, %v1059, 0
        %v1114 = vsel %vm363, %v1061, 0
        %v1117 = vsel %vm363, %v1063, 0
        %v1120 = vsel %vm363, %v1065, 0
        %v1123 = vsel %vm363, %v1067, 0
        %v1126 = vsel %vm363, %v1069, 0
        %1128 = vmatprep.subr.bf16.mxu0 0
        %1129 = vmatpush1.bf16.msra.mxu0 0
        %1130 = vmatprep.subr.bf16.mxu0 0
        %1131 = vmatpush1.bf16.msra.mxu0 0
        %1132 = vmatprep.subr.bf16.mxu0 0
        %1133 = vmatpush1.bf16.msra.mxu0 0
        %1134 = vmatprep.subr.bf16.mxu0 0
        %1135 = vmatpush1.bf16.msra.mxu0 0
        %1136 = vmatprep.subr.bf16.mxu0 0
        %1137 = vmatpush1.bf16.msra.mxu0 0
        %1138 = vmatprep.subr.bf16.mxu0 0
        %1139 = vmatpush1.bf16.msra.mxu0 0
        %1140 = vmatprep.subr.bf16.mxu0 0
        %1141 = vmatpush1.bf16.msra.mxu0 0
        %1142 = vmatprep.subr.bf16.mxu0 %v1077
        %1143 = vmatpush1.bf16.msra.mxu0 %v1076
        %1144 = vmatprep.subr.bf16.mxu0 0
        %1145 = vmatpush2.bf16.msra.mxu0 0
        %1146 = vmatprep.subr.bf16.mxu0 0
        %1147 = vmatpush2.bf16.msra.mxu0 0
        %1148 = vmatprep.subr.bf16.mxu0 0
        %1149 = vmatpush2.bf16.msra.mxu0 0
        %1150 = vmatprep.subr.bf16.mxu0 0
        %1151 = vmatpush2.bf16.msra.mxu0 0
        %1152 = vmatprep.subr.bf16.mxu0 0
        %1153 = vmatpush2.bf16.msra.mxu0 0
        %1154 = vmatprep.subr.bf16.mxu0 0
        %1155 = vmatpush2.bf16.msra.mxu0 0
        %1156 = vmatprep.subr.bf16.mxu0 0
        %1157 = vmatpush2.bf16.msra.mxu0 0
        %1158 = vmatprep.subr.bf16.mxu0 0
        %1159 = vmatpush2.bf16.msra.mxu0 0
        %1160 = vmatprep.mubr.bf16.mxu0 0
        %1161 = vmatmul.mubr.bf16.gmra.mxu0 %v1081
        %v1162 = vpop.f32.mrf.mxu0
        %v1163 = vadd.f32 0.0, %v1162
        %v1164 = vpop.f32.mrf.mxu0
        %v1165 = vadd.f32 0.0, %v1164
        %v1166 = vpop.f32.mrf.mxu0
        %v1167 = vadd.f32 0.0, %v1166
        %v1168 = vpop.f32.mrf.mxu0
        %v1169 = vadd.f32 0.0, %v1168
        %1170 = vmatprep.mubr.bf16.mxu0 0
        %1171 = vmatmul.mubr.bf16.gmra.mxu0 %v1084
        %v1172 = vpop.f32.mrf.mxu0
        %v1173 = vadd.f32 0.0, %v1172
        %v1174 = vpop.f32.mrf.mxu0
        %v1175 = vadd.f32 0.0, %v1174
        %v1176 = vpop.f32.mrf.mxu0
        %v1177 = vadd.f32 0.0, %v1176
        %v1178 = vpop.f32.mrf.mxu0
        %v1179 = vadd.f32 0.0, %v1178
        %1180 = vmatprep.mubr.bf16.mxu0 0
        %1181 = vmatmul.mubr.bf16.gmra.mxu0 %v1087
        %v1182 = vpop.f32.mrf.mxu0
        %v1183 = vadd.f32 0.0, %v1182
        %v1184 = vpop.f32.mrf.mxu0
        %v1185 = vadd.f32 0.0, %v1184
        %v1186 = vpop.f32.mrf.mxu0
        %v1187 = vadd.f32 0.0, %v1186
        %v1188 = vpop.f32.mrf.mxu0
        %v1189 = vadd.f32 0.0, %v1188
        %1190 = vmatprep.mubr.bf16.mxu0 0
        %1191 = vmatmul.mubr.bf16.gmra.mxu0 %v1090
        %v1192 = vpop.f32.mrf.mxu0
        %v1193 = vadd.f32 0.0, %v1192
        %v1194 = vpop.f32.mrf.mxu0
        %v1195 = vadd.f32 0.0, %v1194
        %v1196 = vpop.f32.mrf.mxu0
        %v1197 = vadd.f32 0.0, %v1196
        %v1198 = vpop.f32.mrf.mxu0
        %v1199 = vadd.f32 0.0, %v1198
        %1200 = vmatprep.mubr.bf16.mxu0 0
        %1201 = vmatmul.mubr.bf16.gmra.mxu0 %v1093
        %v1202 = vpop.f32.mrf.mxu0
        %v1203 = vadd.f32 0.0, %v1202
        %v1204 = vpop.f32.mrf.mxu0
        %v1205 = vadd.f32 0.0, %v1204
        %v1206 = vpop.f32.mrf.mxu0
        %v1207 = vadd.f32 0.0, %v1206
        %v1208 = vpop.f32.mrf.mxu0
        %v1209 = vadd.f32 0.0, %v1208
        %1210 = vmatprep.mubr.bf16.mxu0 0
        %1211 = vmatmul.mubr.bf16.gmra.mxu0 %v1096
        %v1212 = vpop.f32.mrf.mxu0
        %v1213 = vadd.f32 0.0, %v1212
        %v1214 = vpop.f32.mrf.mxu0
        %v1215 = vadd.f32 0.0, %v1214
        %v1216 = vpop.f32.mrf.mxu0
        %v1217 = vadd.f32 0.0, %v1216
        %v1218 = vpop.f32.mrf.mxu0
        %v1219 = vadd.f32 0.0, %v1218
        %1220 = vmatprep.mubr.bf16.mxu0 0
        %1221 = vmatmul.mubr.bf16.gmra.mxu0 %v1099
        %v1222 = vpop.f32.mrf.mxu0
        %v1223 = vadd.f32 0.0, %v1222
        %v1224 = vpop.f32.mrf.mxu0
        %v1225 = vadd.f32 0.0, %v1224
        %v1226 = vpop.f32.mrf.mxu0
        %v1227 = vadd.f32 0.0, %v1226
        %v1228 = vpop.f32.mrf.mxu0
        %v1229 = vadd.f32 0.0, %v1228
        %1230 = vmatprep.mubr.bf16.mxu0 0
        %1231 = vmatmul.mubr.bf16.gmra.mxu0 %v1102
        %v1232 = vpop.f32.mrf.mxu0
        %v1233 = vadd.f32 0.0, %v1232
        %v1234 = vpop.f32.mrf.mxu0
        %v1235 = vadd.f32 0.0, %v1234
        %v1236 = vpop.f32.mrf.mxu0
        %v1237 = vadd.f32 0.0, %v1236
        %v1238 = vpop.f32.mrf.mxu0
        %v1239 = vadd.f32 0.0, %v1238
        %1240 = vmatprep.mubr.bf16.mxu0 0
        %1241 = vmatmul.mubr.bf16.gmra.mxu0 %v1105
        %v1242 = vpop.f32.mrf.mxu0
        %v1243 = vadd.f32 0.0, %v1242
        %v1244 = vpop.f32.mrf.mxu0
        %v1245 = vadd.f32 0.0, %v1244
        %v1246 = vpop.f32.mrf.mxu0
        %v1247 = vadd.f32 0.0, %v1246
        %v1248 = vpop.f32.mrf.mxu0
        %v1249 = vadd.f32 0.0, %v1248
        %1250 = vmatprep.mubr.bf16.mxu0 0
        %1251 = vmatmul.mubr.bf16.gmra.mxu0 %v1108
        %v1252 = vpop.f32.mrf.mxu0
        %v1253 = vadd.f32 0.0, %v1252
        %v1254 = vpop.f32.mrf.mxu0
        %v1255 = vadd.f32 0.0, %v1254
        %v1256 = vpop.f32.mrf.mxu0
        %v1257 = vadd.f32 0.0, %v1256
        %v1258 = vpop.f32.mrf.mxu0
        %v1259 = vadd.f32 0.0, %v1258
        %1260 = vmatprep.mubr.bf16.mxu0 0
        %1261 = vmatmul.mubr.bf16.gmra.mxu0 %v1111
        %v1262 = vpop.f32.mrf.mxu0
        %v1263 = vadd.f32 0.0, %v1262
        %v1264 = vpop.f32.mrf.mxu0
        %v1265 = vadd.f32 0.0, %v1264
        %v1266 = vpop.f32.mrf.mxu0
        %v1267 = vadd.f32 0.0, %v1266
        %v1268 = vpop.f32.mrf.mxu0
        %v1269 = vadd.f32 0.0, %v1268
        %1270 = vmatprep.mubr.bf16.mxu0 0
        %1271 = vmatmul.mubr.bf16.gmra.mxu0 %v1114
        %v1272 = vpop.f32.mrf.mxu0
        %v1273 = vadd.f32 0.0, %v1272
        %v1274 = vpop.f32.mrf.mxu0
        %v1275 = vadd.f32 0.0, %v1274
        %v1276 = vpop.f32.mrf.mxu0
        %v1277 = vadd.f32 0.0, %v1276
        %v1278 = vpop.f32.mrf.mxu0
        %v1279 = vadd.f32 0.0, %v1278
        %1280 = vmatprep.mubr.bf16.mxu0 0
        %1281 = vmatmul.mubr.bf16.gmra.mxu0 %v1117
        %v1282 = vpop.f32.mrf.mxu0
        %v1283 = vadd.f32 0.0, %v1282
        %v1284 = vpop.f32.mrf.mxu0
        %v1285 = vadd.f32 0.0, %v1284
        %v1286 = vpop.f32.mrf.mxu0
        %v1287 = vadd.f32 0.0, %v1286
        %v1288 = vpop.f32.mrf.mxu0
        %v1289 = vadd.f32 0.0, %v1288
        %1290 = vmatprep.mubr.bf16.mxu0 0
        %1291 = vmatmul.mubr.bf16.gmra.mxu0 %v1120
        %v1292 = vpop.f32.mrf.mxu0
        %v1293 = vadd.f32 0.0, %v1292
        %v1294 = vpop.f32.mrf.mxu0
        %v1295 = vadd.f32 0.0, %v1294
        %v1296 = vpop.f32.mrf.mxu0
        %v1297 = vadd.f32 0.0, %v1296
        %v1298 = vpop.f32.mrf.mxu0
        %v1299 = vadd.f32 0.0, %v1298
        %1300 = vmatprep.mubr.bf16.mxu0 0
        %1301 = vmatmul.mubr.bf16.gmra.mxu0 %v1123
        %v1302 = vpop.f32.mrf.mxu0
        %v1303 = vadd.f32 0.0, %v1302
        %v1304 = vpop.f32.mrf.mxu0
        %v1305 = vadd.f32 0.0, %v1304
        %v1306 = vpop.f32.mrf.mxu0
        %v1307 = vadd.f32 0.0, %v1306
        %v1308 = vpop.f32.mrf.mxu0
        %v1309 = vadd.f32 0.0, %v1308
        %1310 = vmatprep.mubr.bf16.mxu0 0
        %1311 = vmatmul.mubr.bf16.gmra.mxu0 %v1126
        %v1312 = vpop.f32.mrf.mxu0
        %v1313 = vadd.f32 0.0, %v1312
        %v1314 = vpop.f32.mrf.mxu0
        %v1315 = vadd.f32 0.0, %v1314
        %v1316 = vpop.f32.mrf.mxu0
        %v1317 = vadd.f32 0.0, %v1316
        %v1318 = vpop.f32.mrf.mxu0
        %v1319 = vadd.f32 0.0, %v1318
        %1320 = vdwg.mxu0
        %vm1323 = vcmask 1040384
        %v1324 = vrot.slane %v1313, 7
        %v1325 = vrot.slane %v1317, 7
        %v1326 = vsel %vm1323, %v1324, %v1325
        %v1359 = vrot.slane %v1163, 7
        %v1360 = vrot.slane %v1167, 7
        %v1361 = vsel %vm1323, %v1359, %v1360
        %v1362 = vrot.slane %v1173, 7
        %v1363 = vsel %vm1323, %v1360, %v1362
        %v1364 = vrot.slane %v1177, 7
        %v1365 = vsel %vm1323, %v1362, %v1364
        %v1366 = vrot.slane %v1183, 7
        %v1367 = vsel %vm1323, %v1364, %v1366
        %v1368 = vrot.slane %v1187, 7
        %v1369 = vsel %vm1323, %v1366, %v1368
        %v1370 = vrot.slane %v1193, 7
        %v1371 = vsel %vm1323, %v1368, %v1370
        %v1372 = vrot.slane %v1197, 7
        %v1373 = vsel %vm1323, %v1370, %v1372
        %v1374 = vrot.slane %v1203, 7
        %v1375 = vsel %vm1323, %v1372, %v1374
        %v1376 = vrot.slane %v1207, 7
        %v1377 = vsel %vm1323, %v1374, %v1376
        %v1378 = vrot.slane %v1213, 7
        %v1379 = vsel %vm1323, %v1376, %v1378
        %v1380 = vrot.slane %v1217, 7
        %v1381 = vsel %vm1323, %v1378, %v1380
        %v1382 = vrot.slane %v1223, 7
        %v1383 = vsel %vm1323, %v1380, %v1382
        %v1384 = vrot.slane %v1227, 7
        %v1385 = vsel %vm1323, %v1382, %v1384
        %v1386 = vrot.slane %v1233, 7
        %v1387 = vsel %vm1323, %v1384, %v1386
        %v1388 = vrot.slane %v1237, 7
        %v1389 = vsel %vm1323, %v1386, %v1388
        %v1390 = vrot.slane %v1243, 7
        %v1391 = vsel %vm1323, %v1388, %v1390
        %v1392 = vrot.slane %v1247, 7
        %v1393 = vsel %vm1323, %v1390, %v1392
        %v1394 = vrot.slane %v1253, 7
        %v1395 = vsel %vm1323, %v1392, %v1394
        %v1396 = vrot.slane %v1257, 7
        %v1397 = vsel %vm1323, %v1394, %v1396
        %v1398 = vrot.slane %v1263, 7
        %v1399 = vsel %vm1323, %v1396, %v1398
        %v1400 = vrot.slane %v1267, 7
        %v1401 = vsel %vm1323, %v1398, %v1400
        %v1402 = vrot.slane %v1273, 7
        %v1403 = vsel %vm1323, %v1400, %v1402
        %v1404 = vrot.slane %v1277, 7
        %v1405 = vsel %vm1323, %v1402, %v1404
        %v1406 = vrot.slane %v1283, 7
        %v1407 = vsel %vm1323, %v1404, %v1406
        %v1408 = vrot.slane %v1287, 7
        %v1409 = vsel %vm1323, %v1406, %v1408
        %v1410 = vrot.slane %v1293, 7
        %v1411 = vsel %vm1323, %v1408, %v1410
        %v1412 = vrot.slane %v1297, 7
        %v1413 = vsel %vm1323, %v1410, %v1412
        %v1414 = vrot.slane %v1303, 7
        %v1415 = vsel %vm1323, %v1412, %v1414
        %v1416 = vrot.slane %v1307, 7
        %v1417 = vsel %vm1323, %v1414, %v1416
        %v1418 = vsel %vm1323, %v1416, %v1324
        %v1450 = vsel %vm1323, %v1325, %v1359
        %v1451 = vld [vmem:[%s5] sm:$0xff]
        %v1452 = vld [vmem:[%s5 + $0x8] sm:$0xff]
        %v1453 = vld [vmem:[%s5 + $0x10] sm:$0xff]
        %v1454 = vld [vmem:[%s5 + $0x18] sm:$0xff]
        %v1455 = vld [vmem:[%s5 + $0x20] sm:$0xff]
        %v1456 = vld [vmem:[%s5 + $0x28] sm:$0xff]
        %v1457 = vld [vmem:[%s5 + $0x30] sm:$0xff]
        %v1458 = vld [vmem:[%s5 + $0x38] sm:$0xff]
        %v1459 = vld [vmem:[%s5 + $0x40] sm:$0xff]
        %v1460 = vld [vmem:[%s5 + $0x48] sm:$0xff]
        %v1461 = vld [vmem:[%s5 + $0x50] sm:$0xff]
        %v1462 = vld [vmem:[%s5 + $0x58] sm:$0xff]
        %v1463 = vld [vmem:[%s5 + $0x60] sm:$0xff]
        %v1464 = vld [vmem:[%s5 + $0x68] sm:$0xff]
        %v1465 = vld [vmem:[%s5 + $0x70] sm:$0xff]
        %v1466 = vld [vmem:[%s5 + $0x78] sm:$0xff]
        %v1467 = vld [vmem:[%s5 + $0x80] sm:$0xff]
        %v1468 = vld [vmem:[%s5 + $0x88] sm:$0xff]
        %v1469 = vld [vmem:[%s5 + $0x90] sm:$0xff]
        %v1470 = vld [vmem:[%s5 + $0x98] sm:$0xff]
        %v1471 = vld [vmem:[%s5 + $0xa0] sm:$0xff]
        %v1472 = vld [vmem:[%s5 + $0xa8] sm:$0xff]
        %v1473 = vld [vmem:[%s5 + $0xb0] sm:$0xff]
        %v1474 = vld [vmem:[%s5 + $0xb8] sm:$0xff]
        %v1475 = vld [vmem:[%s5 + $0xc0] sm:$0xff]
        %v1476 = vld [vmem:[%s5 + $0xc8] sm:$0xff]
        %v1477 = vld [vmem:[%s5 + $0xd0] sm:$0xff]
        %v1478 = vld [vmem:[%s5 + $0xd8] sm:$0xff]
        %v1479 = vld [vmem:[%s5 + $0xe0] sm:$0xff]
        %v1480 = vld [vmem:[%s5 + $0xe8] sm:$0xff]
        %v1481 = vld [vmem:[%s5 + $0xf0] sm:$0xff]
        %v1482 = vld [vmem:[%s5 + $0xf8] sm:$0xff]
        %1484 = vset.pattern.permute.xlu0 0
        %1485 = vperm.xlu0 %1484, %v1451
        %v1486 = vpop.permute.xlu0 %1485
        %1489 = vset.pattern.permute.xlu0 0
        %1490 = vperm.xlu0 %1489, %v1452
        %v1491 = vpop.permute.xlu0 %1490
        %1494 = vset.pattern.permute.xlu0 0
        %1495 = vperm.xlu0 %1494, %v1453
        %v1496 = vpop.permute.xlu0 %1495
        %1499 = vset.pattern.permute.xlu0 0
        %1500 = vperm.xlu0 %1499, %v1454
        %v1501 = vpop.permute.xlu0 %1500
        %1504 = vset.pattern.permute.xlu0 0
        %1505 = vperm.xlu0 %1504, %v1455
        %v1506 = vpop.permute.xlu0 %1505
        %1509 = vset.pattern.permute.xlu0 0
        %1510 = vperm.xlu0 %1509, %v1456
        %v1511 = vpop.permute.xlu0 %1510
        %1514 = vset.pattern.permute.xlu0 0
        %1515 = vperm.xlu0 %1514, %v1457
        %v1516 = vpop.permute.xlu0 %1515
        %1519 = vset.pattern.permute.xlu0 0
        %1520 = vperm.xlu0 %1519, %v1458
        %v1521 = vpop.permute.xlu0 %1520
        %1524 = vset.pattern.permute.xlu0 0
        %1525 = vperm.xlu0 %1524, %v1459
        %v1526 = vpop.permute.xlu0 %1525
        %1529 = vset.pattern.permute.xlu0 0
        %1530 = vperm.xlu0 %1529, %v1460
        %v1531 = vpop.permute.xlu0 %1530
        %1534 = vset.pattern.permute.xlu0 0
        %1535 = vperm.xlu0 %1534, %v1461
        %v1536 = vpop.permute.xlu0 %1535
        %1539 = vset.pattern.permute.xlu0 0
        %1540 = vperm.xlu0 %1539, %v1462
        %v1541 = vpop.permute.xlu0 %1540
        %1544 = vset.pattern.permute.xlu0 0
        %1545 = vperm.xlu0 %1544, %v1463
        %v1546 = vpop.permute.xlu0 %1545
        %1549 = vset.pattern.permute.xlu0 0
        %1550 = vperm.xlu0 %1549, %v1464
        %v1551 = vpop.permute.xlu0 %1550
        %1554 = vset.pattern.permute.xlu0 0
        %1555 = vperm.xlu0 %1554, %v1465
        %v1556 = vpop.permute.xlu0 %1555
        %1559 = vset.pattern.permute.xlu0 0
        %1560 = vperm.xlu0 %1559, %v1466
        %v1561 = vpop.permute.xlu0 %1560
        %1564 = vset.pattern.permute.xlu0 0
        %1565 = vperm.xlu0 %1564, %v1467
        %v1566 = vpop.permute.xlu0 %1565
        %1569 = vset.pattern.permute.xlu0 0
        %1570 = vperm.xlu0 %1569, %v1468
        %v1571 = vpop.permute.xlu0 %1570
        %1574 = vset.pattern.permute.xlu0 0
        %1575 = vperm.xlu0 %1574, %v1469
        %v1576 = vpop.permute.xlu0 %1575
        %1579 = vset.pattern.permute.xlu0 0
        %1580 = vperm.xlu0 %1579, %v1470
        %v1581 = vpop.permute.xlu0 %1580
        %1584 = vset.pattern.permute.xlu0 0
        %1585 = vperm.xlu0 %1584, %v1471
        %v1586 = vpop.permute.xlu0 %1585
        %1589 = vset.pattern.permute.xlu0 0
        %1590 = vperm.xlu0 %1589, %v1472
        %v1591 = vpop.permute.xlu0 %1590
        %1594 = vset.pattern.permute.xlu0 0
        %1595 = vperm.xlu0 %1594, %v1473
        %v1596 = vpop.permute.xlu0 %1595
        %1599 = vset.pattern.permute.xlu0 0
        %1600 = vperm.xlu0 %1599, %v1474
        %v1601 = vpop.permute.xlu0 %1600
        %1604 = vset.pattern.permute.xlu0 0
        %1605 = vperm.xlu0 %1604, %v1475
        %v1606 = vpop.permute.xlu0 %1605
        %1609 = vset.pattern.permute.xlu0 0
        %1610 = vperm.xlu0 %1609, %v1476
        %v1611 = vpop.permute.xlu0 %1610
        %1614 = vset.pattern.permute.xlu0 0
        %1615 = vperm.xlu0 %1614, %v1477
        %v1616 = vpop.permute.xlu0 %1615
        %1619 = vset.pattern.permute.xlu0 0
        %1620 = vperm.xlu0 %1619, %v1478
        %v1621 = vpop.permute.xlu0 %1620
        %1624 = vset.pattern.permute.xlu0 0
        %1625 = vperm.xlu0 %1624, %v1479
        %v1626 = vpop.permute.xlu0 %1625
        %1629 = vset.pattern.permute.xlu0 0
        %1630 = vperm.xlu0 %1629, %v1480
        %v1631 = vpop.permute.xlu0 %1630
        %1634 = vset.pattern.permute.xlu0 0
        %1635 = vperm.xlu0 %1634, %v1481
        %v1636 = vpop.permute.xlu0 %1635
        %1639 = vset.pattern.permute.xlu0 0
        %1640 = vperm.xlu0 %1639, %v1482
        %v1641 = vpop.permute.xlu0 %1640
        %v1643 = vmul.f32 %v1326, %v1486
        %v1644 = vmul.f32 %v1450, %v1491
        %v1645 = vmul.f32 %v1361, %v1496
        %v1646 = vmul.f32 %v1363, %v1501
        %v1647 = vmul.f32 %v1365, %v1506
        %v1648 = vmul.f32 %v1367, %v1511
        %v1649 = vmul.f32 %v1369, %v1516
        %v1650 = vmul.f32 %v1371, %v1521
        %v1651 = vmul.f32 %v1373, %v1526
        %v1652 = vmul.f32 %v1375, %v1531
        %v1653 = vmul.f32 %v1377, %v1536
        %v1654 = vmul.f32 %v1379, %v1541
        %v1655 = vmul.f32 %v1381, %v1546
        %v1656 = vmul.f32 %v1383, %v1551
        %v1657 = vmul.f32 %v1385, %v1556
        %v1658 = vmul.f32 %v1387, %v1561
        %v1659 = vmul.f32 %v1389, %v1566
        %v1660 = vmul.f32 %v1391, %v1571
        %v1661 = vmul.f32 %v1393, %v1576
        %v1662 = vmul.f32 %v1395, %v1581
        %v1663 = vmul.f32 %v1397, %v1586
        %v1664 = vmul.f32 %v1399, %v1591
        %v1665 = vmul.f32 %v1401, %v1596
        %v1666 = vmul.f32 %v1403, %v1601
        %v1667 = vmul.f32 %v1405, %v1606
        %v1668 = vmul.f32 %v1407, %v1611
        %v1669 = vmul.f32 %v1409, %v1616
        %v1670 = vmul.f32 %v1411, %v1621
        %v1671 = vmul.f32 %v1413, %v1626
        %v1672 = vmul.f32 %v1415, %v1631
        %v1673 = vmul.f32 %v1417, %v1636
        %v1674 = vmul.f32 %v1418, %v1641
        %1675 = vset.pattern.permute.xlu0 1
        %1676 = vperm.xlu0 %1675, %v1451
        %v1677 = vpop.permute.xlu0 %1676
        %1679 = vset.pattern.permute.xlu0 1
        %1680 = vperm.xlu0 %1679, %v1452
        %v1681 = vpop.permute.xlu0 %1680
        %1683 = vset.pattern.permute.xlu0 1
        %1684 = vperm.xlu0 %1683, %v1453
        %v1685 = vpop.permute.xlu0 %1684
        %1687 = vset.pattern.permute.xlu0 1
        %1688 = vperm.xlu0 %1687, %v1454
        %v1689 = vpop.permute.xlu0 %1688
        %1691 = vset.pattern.permute.xlu0 1
        %1692 = vperm.xlu0 %1691, %v1455
        %v1693 = vpop.permute.xlu0 %1692
        %1695 = vset.pattern.permute.xlu0 1
        %1696 = vperm.xlu0 %1695, %v1456
        %v1697 = vpop.permute.xlu0 %1696
        %1699 = vset.pattern.permute.xlu0 1
        %1700 = vperm.xlu0 %1699, %v1457
        %v1701 = vpop.permute.xlu0 %1700
        %1703 = vset.pattern.permute.xlu0 1
        %1704 = vperm.xlu0 %1703, %v1458
        %v1705 = vpop.permute.xlu0 %1704
        %1707 = vset.pattern.permute.xlu0 1
        %1708 = vperm.xlu0 %1707, %v1459
        %v1709 = vpop.permute.xlu0 %1708
        %1711 = vset.pattern.permute.xlu0 1
        %1712 = vperm.xlu0 %1711, %v1460
        %v1713 = vpop.permute.xlu0 %1712
        %1715 = vset.pattern.permute.xlu0 1
        %1716 = vperm.xlu0 %1715, %v1461
        %v1717 = vpop.permute.xlu0 %1716
        %1719 = vset.pattern.permute.xlu0 1
        %1720 = vperm.xlu0 %1719, %v1462
        %v1721 = vpop.permute.xlu0 %1720
        %1723 = vset.pattern.permute.xlu0 1
        %1724 = vperm.xlu0 %1723, %v1463
        %v1725 = vpop.permute.xlu0 %1724
        %1727 = vset.pattern.permute.xlu0 1
        %1728 = vperm.xlu0 %1727, %v1464
        %v1729 = vpop.permute.xlu0 %1728
        %1731 = vset.pattern.permute.xlu0 1
        %1732 = vperm.xlu0 %1731, %v1465
        %v1733 = vpop.permute.xlu0 %1732
        %1735 = vset.pattern.permute.xlu0 1
        %1736 = vperm.xlu0 %1735, %v1466
        %v1737 = vpop.permute.xlu0 %1736
        %1739 = vset.pattern.permute.xlu0 1
        %1740 = vperm.xlu0 %1739, %v1467
        %v1741 = vpop.permute.xlu0 %1740
        %1743 = vset.pattern.permute.xlu0 1
        %1744 = vperm.xlu0 %1743, %v1468
        %v1745 = vpop.permute.xlu0 %1744
        %1747 = vset.pattern.permute.xlu0 1
        %1748 = vperm.xlu0 %1747, %v1469
        %v1749 = vpop.permute.xlu0 %1748
        %1751 = vset.pattern.permute.xlu0 1
        %1752 = vperm.xlu0 %1751, %v1470
        %v1753 = vpop.permute.xlu0 %1752
        %1755 = vset.pattern.permute.xlu0 1
        %1756 = vperm.xlu0 %1755, %v1471
        %v1757 = vpop.permute.xlu0 %1756
        %1759 = vset.pattern.permute.xlu0 1
        %1760 = vperm.xlu0 %1759, %v1472
        %v1761 = vpop.permute.xlu0 %1760
        %1763 = vset.pattern.permute.xlu0 1
        %1764 = vperm.xlu0 %1763, %v1473
        %v1765 = vpop.permute.xlu0 %1764
        %1767 = vset.pattern.permute.xlu0 1
        %1768 = vperm.xlu0 %1767, %v1474
        %v1769 = vpop.permute.xlu0 %1768
        %1771 = vset.pattern.permute.xlu0 1
        %1772 = vperm.xlu0 %1771, %v1475
        %v1773 = vpop.permute.xlu0 %1772
        %1775 = vset.pattern.permute.xlu0 1
        %1776 = vperm.xlu0 %1775, %v1476
        %v1777 = vpop.permute.xlu0 %1776
        %1779 = vset.pattern.permute.xlu0 1
        %1780 = vperm.xlu0 %1779, %v1477
        %v1781 = vpop.permute.xlu0 %1780
        %1783 = vset.pattern.permute.xlu0 1
        %1784 = vperm.xlu0 %1783, %v1478
        %v1785 = vpop.permute.xlu0 %1784
        %1787 = vset.pattern.permute.xlu0 1
        %1788 = vperm.xlu0 %1787, %v1479
        %v1789 = vpop.permute.xlu0 %1788
        %1791 = vset.pattern.permute.xlu0 1
        %1792 = vperm.xlu0 %1791, %v1480
        %v1793 = vpop.permute.xlu0 %1792
        %1795 = vset.pattern.permute.xlu0 1
        %1796 = vperm.xlu0 %1795, %v1481
        %v1797 = vpop.permute.xlu0 %1796
        %1799 = vset.pattern.permute.xlu0 1
        %1800 = vperm.xlu0 %1799, %v1482
        %v1801 = vpop.permute.xlu0 %1800
        %v1803 = vmul.f32 %v1317, %v1677
        %v1804 = vmul.f32 %v1163, %v1681
        %v1805 = vmul.f32 %v1167, %v1685
        %v1806 = vmul.f32 %v1173, %v1689
        %v1807 = vmul.f32 %v1177, %v1693
        %v1808 = vmul.f32 %v1183, %v1697
        %v1809 = vmul.f32 %v1187, %v1701
        %v1810 = vmul.f32 %v1193, %v1705
        %v1811 = vmul.f32 %v1197, %v1709
        %v1812 = vmul.f32 %v1203, %v1713
        %v1813 = vmul.f32 %v1207, %v1717
        %v1814 = vmul.f32 %v1213, %v1721
        %v1815 = vmul.f32 %v1217, %v1725
        %v1816 = vmul.f32 %v1223, %v1729
        %v1817 = vmul.f32 %v1227, %v1733
        %v1818 = vmul.f32 %v1233, %v1737
        %v1819 = vmul.f32 %v1237, %v1741
        %v1820 = vmul.f32 %v1243, %v1745
        %v1821 = vmul.f32 %v1247, %v1749
        %v1822 = vmul.f32 %v1253, %v1753
        %v1823 = vmul.f32 %v1257, %v1757
        %v1824 = vmul.f32 %v1263, %v1761
        %v1825 = vmul.f32 %v1267, %v1765
        %v1826 = vmul.f32 %v1273, %v1769
        %v1827 = vmul.f32 %v1277, %v1773
        %v1828 = vmul.f32 %v1283, %v1777
        %v1829 = vmul.f32 %v1287, %v1781
        %v1830 = vmul.f32 %v1293, %v1785
        %v1831 = vmul.f32 %v1297, %v1789
        %v1832 = vmul.f32 %v1303, %v1793
        %v1833 = vmul.f32 %v1307, %v1797
        %v1834 = vmul.f32 %v1313, %v1801
        %1867 = vrot.lane.b32.xlu0 %v1803, 112
        %v1868 = vpop.permute.xlu0 %1867
        %1869 = vrot.lane.b32.xlu0 %v1804, 112
        %v1870 = vpop.permute.xlu0 %1869
        %1871 = vrot.lane.b32.xlu0 %v1805, 112
        %v1872 = vpop.permute.xlu0 %1871
        %1873 = vrot.lane.b32.xlu0 %v1806, 112
        %v1874 = vpop.permute.xlu0 %1873
        %1875 = vrot.lane.b32.xlu0 %v1807, 112
        %v1876 = vpop.permute.xlu0 %1875
        %1877 = vrot.lane.b32.xlu0 %v1808, 112
        %v1878 = vpop.permute.xlu0 %1877
        %1879 = vrot.lane.b32.xlu0 %v1809, 112
        %v1880 = vpop.permute.xlu0 %1879
        %1881 = vrot.lane.b32.xlu0 %v1810, 112
        %v1882 = vpop.permute.xlu0 %1881
        %1883 = vrot.lane.b32.xlu0 %v1811, 112
        %v1884 = vpop.permute.xlu0 %1883
        %1885 = vrot.lane.b32.xlu0 %v1812, 112
        %v1886 = vpop.permute.xlu0 %1885
        %1887 = vrot.lane.b32.xlu0 %v1813, 112
        %v1888 = vpop.permute.xlu0 %1887
        %1889 = vrot.lane.b32.xlu0 %v1814, 112
        %v1890 = vpop.permute.xlu0 %1889
        %1891 = vrot.lane.b32.xlu0 %v1815, 112
        %v1892 = vpop.permute.xlu0 %1891
        %1893 = vrot.lane.b32.xlu0 %v1816, 112
        %v1894 = vpop.permute.xlu0 %1893
        %1895 = vrot.lane.b32.xlu0 %v1817, 112
        %v1896 = vpop.permute.xlu0 %1895
        %1897 = vrot.lane.b32.xlu0 %v1818, 112
        %v1898 = vpop.permute.xlu0 %1897
        %1899 = vrot.lane.b32.xlu0 %v1819, 112
        %v1900 = vpop.permute.xlu0 %1899
        %1901 = vrot.lane.b32.xlu0 %v1820, 112
        %v1902 = vpop.permute.xlu0 %1901
        %1903 = vrot.lane.b32.xlu0 %v1821, 112
        %v1904 = vpop.permute.xlu0 %1903
        %1905 = vrot.lane.b32.xlu0 %v1822, 112
        %v1906 = vpop.permute.xlu0 %1905
        %1907 = vrot.lane.b32.xlu0 %v1823, 112
        %v1908 = vpop.permute.xlu0 %1907
        %1909 = vrot.lane.b32.xlu0 %v1824, 112
        %v1910 = vpop.permute.xlu0 %1909
        %1911 = vrot.lane.b32.xlu0 %v1825, 112
        %v1912 = vpop.permute.xlu0 %1911
        %1913 = vrot.lane.b32.xlu0 %v1826, 112
        %v1914 = vpop.permute.xlu0 %1913
        %1915 = vrot.lane.b32.xlu0 %v1827, 112
        %v1916 = vpop.permute.xlu0 %1915
        %1917 = vrot.lane.b32.xlu0 %v1828, 112
        %v1918 = vpop.permute.xlu0 %1917
        %1919 = vrot.lane.b32.xlu0 %v1829, 112
        %v1920 = vpop.permute.xlu0 %1919
        %1921 = vrot.lane.b32.xlu0 %v1830, 112
        %v1922 = vpop.permute.xlu0 %1921
        %1923 = vrot.lane.b32.xlu0 %v1831, 112
        %v1924 = vpop.permute.xlu0 %1923
        %1925 = vrot.lane.b32.xlu0 %v1832, 112
        %v1926 = vpop.permute.xlu0 %1925
        %1927 = vrot.lane.b32.xlu0 %v1833, 112
        %v1928 = vpop.permute.xlu0 %1927
        %1929 = vrot.lane.b32.xlu0 %v1834, 112
        %v1930 = vpop.permute.xlu0 %1929
        %v1963 = vadd.f32 %v1643, %v1868
        %v1964 = vadd.f32 %v1644, %v1870
        %v1965 = vadd.f32 %v1645, %v1872
        %v1966 = vadd.f32 %v1646, %v1874
        %v1967 = vadd.f32 %v1647, %v1876
        %v1968 = vadd.f32 %v1648, %v1878
        %v1969 = vadd.f32 %v1649, %v1880
        %v1970 = vadd.f32 %v1650, %v1882
        %v1971 = vadd.f32 %v1651, %v1884
        %v1972 = vadd.f32 %v1652, %v1886
        %v1973 = vadd.f32 %v1653, %v1888
        %v1974 = vadd.f32 %v1654, %v1890
        %v1975 = vadd.f32 %v1655, %v1892
        %v1976 = vadd.f32 %v1656, %v1894
        %v1977 = vadd.f32 %v1657, %v1896
        %v1978 = vadd.f32 %v1658, %v1898
        %v1979 = vadd.f32 %v1659, %v1900
        %v1980 = vadd.f32 %v1660, %v1902
        %v1981 = vadd.f32 %v1661, %v1904
        %v1982 = vadd.f32 %v1662, %v1906
        %v1983 = vadd.f32 %v1663, %v1908
        %v1984 = vadd.f32 %v1664, %v1910
        %v1985 = vadd.f32 %v1665, %v1912
        %v1986 = vadd.f32 %v1666, %v1914
        %v1987 = vadd.f32 %v1667, %v1916
        %v1988 = vadd.f32 %v1668, %v1918
        %v1989 = vadd.f32 %v1669, %v1920
        %v1990 = vadd.f32 %v1670, %v1922
        %v1991 = vadd.f32 %v1671, %v1924
        %v1992 = vadd.f32 %v1672, %v1926
        %v1993 = vadd.f32 %v1673, %v1928
        %v1994 = vadd.f32 %v1674, %v1930
        %v1995 = vrot.slane %v1317, 1
        %vm1997 = vcmask 1046528
        %v1998 = vrot.slane %v1163, 1
        %v1999 = vrot.slane %v1167, 1
        %v2000 = vsel %vm1997, %v1998, %v1999
        %v2001 = vrot.slane %v1173, 1
        %v2002 = vsel %vm1997, %v1999, %v2001
        %v2003 = vrot.slane %v1177, 1
        %v2004 = vsel %vm1997, %v2001, %v2003
        %v2005 = vrot.slane %v1183, 1
        %v2006 = vsel %vm1997, %v2003, %v2005
        %v2007 = vrot.slane %v1187, 1
        %v2008 = vsel %vm1997, %v2005, %v2007
        %v2009 = vrot.slane %v1193, 1
        %v2010 = vsel %vm1997, %v2007, %v2009
        %v2011 = vrot.slane %v1197, 1
        %v2012 = vsel %vm1997, %v2009, %v2011
        %v2013 = vrot.slane %v1203, 1
        %v2014 = vsel %vm1997, %v2011, %v2013
        %v2015 = vrot.slane %v1207, 1
        %v2016 = vsel %vm1997, %v2013, %v2015
        %v2017 = vrot.slane %v1213, 1
        %v2018 = vsel %vm1997, %v2015, %v2017
        %v2019 = vrot.slane %v1217, 1
        %v2020 = vsel %vm1997, %v2017, %v2019
        %v2021 = vrot.slane %v1223, 1
        %v2022 = vsel %vm1997, %v2019, %v2021
        %v2023 = vrot.slane %v1227, 1
        %v2024 = vsel %vm1997, %v2021, %v2023
        %v2025 = vrot.slane %v1233, 1
        %v2026 = vsel %vm1997, %v2023, %v2025
        %v2027 = vrot.slane %v1237, 1
        %v2028 = vsel %vm1997, %v2025, %v2027
        %v2029 = vrot.slane %v1243, 1
        %v2030 = vsel %vm1997, %v2027, %v2029
        %v2031 = vrot.slane %v1247, 1
        %v2032 = vsel %vm1997, %v2029, %v2031
        %v2033 = vrot.slane %v1253, 1
        %v2034 = vsel %vm1997, %v2031, %v2033
        %v2035 = vrot.slane %v1257, 1
        %v2036 = vsel %vm1997, %v2033, %v2035
        %v2037 = vrot.slane %v1263, 1
        %v2038 = vsel %vm1997, %v2035, %v2037
        %v2039 = vrot.slane %v1267, 1
        %v2040 = vsel %vm1997, %v2037, %v2039
        %v2041 = vrot.slane %v1273, 1
        %v2042 = vsel %vm1997, %v2039, %v2041
        %v2043 = vrot.slane %v1277, 1
        %v2044 = vsel %vm1997, %v2041, %v2043
        %v2045 = vrot.slane %v1283, 1
        %v2046 = vsel %vm1997, %v2043, %v2045
        %v2047 = vrot.slane %v1287, 1
        %v2048 = vsel %vm1997, %v2045, %v2047
        %v2049 = vrot.slane %v1293, 1
        %v2050 = vsel %vm1997, %v2047, %v2049
        %v2051 = vrot.slane %v1297, 1
        %v2052 = vsel %vm1997, %v2049, %v2051
        %v2053 = vrot.slane %v1303, 1
        %v2054 = vsel %vm1997, %v2051, %v2053
        %v2055 = vrot.slane %v1307, 1
        %v2056 = vsel %vm1997, %v2053, %v2055
        %v2057 = vrot.slane %v1313, 1
        %v2058 = vsel %vm1997, %v2055, %v2057
        %v2059 = vsel %vm1997, %v2057, %v1995
        %v2092 = vsel %vm1997, %v1995, %v1998
        %2093 = vset.pattern.permute.xlu0 2
        %2094 = vperm.xlu0 %2093, %v1451
        %v2095 = vpop.permute.xlu0 %2094
        %2097 = vset.pattern.permute.xlu0 2
        %2098 = vperm.xlu0 %2097, %v1452
        %v2099 = vpop.permute.xlu0 %2098
        %2101 = vset.pattern.permute.xlu0 2
        %2102 = vperm.xlu0 %2101, %v1453
        %v2103 = vpop.permute.xlu0 %2102
        %2105 = vset.pattern.permute.xlu0 2
        %2106 = vperm.xlu0 %2105, %v1454
        %v2107 = vpop.permute.xlu0 %2106
        %2109 = vset.pattern.permute.xlu0 2
        %2110 = vperm.xlu0 %2109, %v1455
        %v2111 = vpop.permute.xlu0 %2110
        %2113 = vset.pattern.permute.xlu0 2
        %2114 = vperm.xlu0 %2113, %v1456
        %v2115 = vpop.permute.xlu0 %2114
        %2117 = vset.pattern.permute.xlu0 2
        %2118 = vperm.xlu0 %2117, %v1457
        %v2119 = vpop.permute.xlu0 %2118
        %2121 = vset.pattern.permute.xlu0 2
        %2122 = vperm.xlu0 %2121, %v1458
        %v2123 = vpop.permute.xlu0 %2122
        %2125 = vset.pattern.permute.xlu0 2
        %2126 = vperm.xlu0 %2125, %v1459
        %v2127 = vpop.permute.xlu0 %2126
        %2129 = vset.pattern.permute.xlu0 2
        %2130 = vperm.xlu0 %2129, %v1460
        %v2131 = vpop.permute.xlu0 %2130
        %2133 = vset.pattern.permute.xlu0 2
        %2134 = vperm.xlu0 %2133, %v1461
        %v2135 = vpop.permute.xlu0 %2134
        %2137 = vset.pattern.permute.xlu0 2
        %2138 = vperm.xlu0 %2137, %v1462
        %v2139 = vpop.permute.xlu0 %2138
        %2141 = vset.pattern.permute.xlu0 2
        %2142 = vperm.xlu0 %2141, %v1463
        %v2143 = vpop.permute.xlu0 %2142
        %2145 = vset.pattern.permute.xlu0 2
        %2146 = vperm.xlu0 %2145, %v1464
        %v2147 = vpop.permute.xlu0 %2146
        %2149 = vset.pattern.permute.xlu0 2
        %2150 = vperm.xlu0 %2149, %v1465
        %v2151 = vpop.permute.xlu0 %2150
        %2153 = vset.pattern.permute.xlu0 2
        %2154 = vperm.xlu0 %2153, %v1466
        %v2155 = vpop.permute.xlu0 %2154
        %2157 = vset.pattern.permute.xlu0 2
        %2158 = vperm.xlu0 %2157, %v1467
        %v2159 = vpop.permute.xlu0 %2158
        %2161 = vset.pattern.permute.xlu0 2
        %2162 = vperm.xlu0 %2161, %v1468
        %v2163 = vpop.permute.xlu0 %2162
        %2165 = vset.pattern.permute.xlu0 2
        %2166 = vperm.xlu0 %2165, %v1469
        %v2167 = vpop.permute.xlu0 %2166
        %2169 = vset.pattern.permute.xlu0 2
        %2170 = vperm.xlu0 %2169, %v1470
        %v2171 = vpop.permute.xlu0 %2170
        %2173 = vset.pattern.permute.xlu0 2
        %2174 = vperm.xlu0 %2173, %v1471
        %v2175 = vpop.permute.xlu0 %2174
        %2177 = vset.pattern.permute.xlu0 2
        %2178 = vperm.xlu0 %2177, %v1472
        %v2179 = vpop.permute.xlu0 %2178
        %2181 = vset.pattern.permute.xlu0 2
        %2182 = vperm.xlu0 %2181, %v1473
        %v2183 = vpop.permute.xlu0 %2182
        %2185 = vset.pattern.permute.xlu0 2
        %2186 = vperm.xlu0 %2185, %v1474
        %v2187 = vpop.permute.xlu0 %2186
        %2189 = vset.pattern.permute.xlu0 2
        %2190 = vperm.xlu0 %2189, %v1475
        %v2191 = vpop.permute.xlu0 %2190
        %2193 = vset.pattern.permute.xlu0 2
        %2194 = vperm.xlu0 %2193, %v1476
        %v2195 = vpop.permute.xlu0 %2194
        %2197 = vset.pattern.permute.xlu0 2
        %2198 = vperm.xlu0 %2197, %v1477
        %v2199 = vpop.permute.xlu0 %2198
        %2201 = vset.pattern.permute.xlu0 2
        %2202 = vperm.xlu0 %2201, %v1478
        %v2203 = vpop.permute.xlu0 %2202
        %2205 = vset.pattern.permute.xlu0 2
        %2206 = vperm.xlu0 %2205, %v1479
        %v2207 = vpop.permute.xlu0 %2206
        %2209 = vset.pattern.permute.xlu0 2
        %2210 = vperm.xlu0 %2209, %v1480
        %v2211 = vpop.permute.xlu0 %2210
        %2213 = vset.pattern.permute.xlu0 2
        %2214 = vperm.xlu0 %2213, %v1481
        %v2215 = vpop.permute.xlu0 %2214
        %2217 = vset.pattern.permute.xlu0 2
        %2218 = vperm.xlu0 %2217, %v1482
        %v2219 = vpop.permute.xlu0 %2218
        %v2221 = vmul.f32 %v2092, %v2095
        %v2222 = vmul.f32 %v2000, %v2099
        %v2223 = vmul.f32 %v2002, %v2103
        %v2224 = vmul.f32 %v2004, %v2107
        %v2225 = vmul.f32 %v2006, %v2111
        %v2226 = vmul.f32 %v2008, %v2115
        %v2227 = vmul.f32 %v2010, %v2119
        %v2228 = vmul.f32 %v2012, %v2123
        %v2229 = vmul.f32 %v2014, %v2127
        %v2230 = vmul.f32 %v2016, %v2131
        %v2231 = vmul.f32 %v2018, %v2135
        %v2232 = vmul.f32 %v2020, %v2139
        %v2233 = vmul.f32 %v2022, %v2143
        %v2234 = vmul.f32 %v2024, %v2147
        %v2235 = vmul.f32 %v2026, %v2151
        %v2236 = vmul.f32 %v2028, %v2155
        %v2237 = vmul.f32 %v2030, %v2159
        %v2238 = vmul.f32 %v2032, %v2163
        %v2239 = vmul.f32 %v2034, %v2167
        %v2240 = vmul.f32 %v2036, %v2171
        %v2241 = vmul.f32 %v2038, %v2175
        %v2242 = vmul.f32 %v2040, %v2179
        %v2243 = vmul.f32 %v2042, %v2183
        %v2244 = vmul.f32 %v2044, %v2187
        %v2245 = vmul.f32 %v2046, %v2191
        %v2246 = vmul.f32 %v2048, %v2195
        %v2247 = vmul.f32 %v2050, %v2199
        %v2248 = vmul.f32 %v2052, %v2203
        %v2249 = vmul.f32 %v2054, %v2207
        %v2250 = vmul.f32 %v2056, %v2211
        %v2251 = vmul.f32 %v2058, %v2215
        %v2252 = vmul.f32 %v2059, %v2219
        %2285 = vrot.lane.b32.xlu0 %v2221, 96
        %v2286 = vpop.permute.xlu0 %2285
        %2287 = vrot.lane.b32.xlu0 %v2222, 96
        %v2288 = vpop.permute.xlu0 %2287
        %2289 = vrot.lane.b32.xlu0 %v2223, 96
        %v2290 = vpop.permute.xlu0 %2289
        %2291 = vrot.lane.b32.xlu0 %v2224, 96
        %v2292 = vpop.permute.xlu0 %2291
        %2293 = vrot.lane.b32.xlu0 %v2225, 96
        %v2294 = vpop.permute.xlu0 %2293
        %2295 = vrot.lane.b32.xlu0 %v2226, 96
        %v2296 = vpop.permute.xlu0 %2295
        %2297 = vrot.lane.b32.xlu0 %v2227, 96
        %v2298 = vpop.permute.xlu0 %2297
        %2299 = vrot.lane.b32.xlu0 %v2228, 96
        %v2300 = vpop.permute.xlu0 %2299
        %2301 = vrot.lane.b32.xlu0 %v2229, 96
        %v2302 = vpop.permute.xlu0 %2301
        %2303 = vrot.lane.b32.xlu0 %v2230, 96
        %v2304 = vpop.permute.xlu0 %2303
        %2305 = vrot.lane.b32.xlu0 %v2231, 96
        %v2306 = vpop.permute.xlu0 %2305
        %2307 = vrot.lane.b32.xlu0 %v2232, 96
        %v2308 = vpop.permute.xlu0 %2307
        %2309 = vrot.lane.b32.xlu0 %v2233, 96
        %v2310 = vpop.permute.xlu0 %2309
        %2311 = vrot.lane.b32.xlu0 %v2234, 96
        %v2312 = vpop.permute.xlu0 %2311
        %2313 = vrot.lane.b32.xlu0 %v2235, 96
        %v2314 = vpop.permute.xlu0 %2313
        %2315 = vrot.lane.b32.xlu0 %v2236, 96
        %v2316 = vpop.permute.xlu0 %2315
        %2317 = vrot.lane.b32.xlu0 %v2237, 96
        %v2318 = vpop.permute.xlu0 %2317
        %2319 = vrot.lane.b32.xlu0 %v2238, 96
        %v2320 = vpop.permute.xlu0 %2319
        %2321 = vrot.lane.b32.xlu0 %v2239, 96
        %v2322 = vpop.permute.xlu0 %2321
        %2323 = vrot.lane.b32.xlu0 %v2240, 96
        %v2324 = vpop.permute.xlu0 %2323
        %2325 = vrot.lane.b32.xlu0 %v2241, 96
        %v2326 = vpop.permute.xlu0 %2325
        %2327 = vrot.lane.b32.xlu0 %v2242, 96
        %v2328 = vpop.permute.xlu0 %2327
        %2329 = vrot.lane.b32.xlu0 %v2243, 96
        %v2330 = vpop.permute.xlu0 %2329
        %2331 = vrot.lane.b32.xlu0 %v2244, 96
        %v2332 = vpop.permute.xlu0 %2331
        %2333 = vrot.lane.b32.xlu0 %v2245, 96
        %v2334 = vpop.permute.xlu0 %2333
        %2335 = vrot.lane.b32.xlu0 %v2246, 96
        %v2336 = vpop.permute.xlu0 %2335
        %2337 = vrot.lane.b32.xlu0 %v2247, 96
        %v2338 = vpop.permute.xlu0 %2337
        %2339 = vrot.lane.b32.xlu0 %v2248, 96
        %v2340 = vpop.permute.xlu0 %2339
        %2341 = vrot.lane.b32.xlu0 %v2249, 96
        %v2342 = vpop.permute.xlu0 %2341
        %2343 = vrot.lane.b32.xlu0 %v2250, 96
        %v2344 = vpop.permute.xlu0 %2343
        %2345 = vrot.lane.b32.xlu0 %v2251, 96
        %v2346 = vpop.permute.xlu0 %2345
        %2347 = vrot.lane.b32.xlu0 %v2252, 96
        %v2348 = vpop.permute.xlu0 %2347
        %v2381 = vadd.f32 %v1963, %v2286
        %v2382 = vadd.f32 %v1964, %v2288
        %v2383 = vadd.f32 %v1965, %v2290
        %v2384 = vadd.f32 %v1966, %v2292
        %v2385 = vadd.f32 %v1967, %v2294
        %v2386 = vadd.f32 %v1968, %v2296
        %v2387 = vadd.f32 %v1969, %v2298
        %v2388 = vadd.f32 %v1970, %v2300
        %v2389 = vadd.f32 %v1971, %v2302
        %v2390 = vadd.f32 %v1972, %v2304
        %v2391 = vadd.f32 %v1973, %v2306
        %v2392 = vadd.f32 %v1974, %v2308
        %v2393 = vadd.f32 %v1975, %v2310
        %v2394 = vadd.f32 %v1976, %v2312
        %v2395 = vadd.f32 %v1977, %v2314
        %v2396 = vadd.f32 %v1978, %v2316
        %v2397 = vadd.f32 %v1979, %v2318
        %v2398 = vadd.f32 %v1980, %v2320
        %v2399 = vadd.f32 %v1981, %v2322
        %v2400 = vadd.f32 %v1982, %v2324
        %v2401 = vadd.f32 %v1983, %v2326
        %v2402 = vadd.f32 %v1984, %v2328
        %v2403 = vadd.f32 %v1985, %v2330
        %v2404 = vadd.f32 %v1986, %v2332
        %v2405 = vadd.f32 %v1987, %v2334
        %v2406 = vadd.f32 %v1988, %v2336
        %v2407 = vadd.f32 %v1989, %v2338
        %v2408 = vadd.f32 %v1990, %v2340
        %v2409 = vadd.f32 %v1991, %v2342
        %v2410 = vadd.f32 %v1992, %v2344
        %v2411 = vadd.f32 %v1993, %v2346
        %v2412 = vadd.f32 %v1994, %v2348
        %2413 = vset.pattern.permute.xlu0 3
        %2414 = vperm.xlu0 %2413, %v1451
        %v2415 = vpop.permute.xlu0 %2414
        %2417 = vset.pattern.permute.xlu0 3
        %2418 = vperm.xlu0 %2417, %v1452
        %v2419 = vpop.permute.xlu0 %2418
        %2421 = vset.pattern.permute.xlu0 3
        %2422 = vperm.xlu0 %2421, %v1453
        %v2423 = vpop.permute.xlu0 %2422
        %2425 = vset.pattern.permute.xlu0 3
        %2426 = vperm.xlu0 %2425, %v1454
        %v2427 = vpop.permute.xlu0 %2426
        %2429 = vset.pattern.permute.xlu0 3
        %2430 = vperm.xlu0 %2429, %v1455
        %v2431 = vpop.permute.xlu0 %2430
        %2433 = vset.pattern.permute.xlu0 3
        %2434 = vperm.xlu0 %2433, %v1456
        %v2435 = vpop.permute.xlu0 %2434
        %2437 = vset.pattern.permute.xlu0 3
        %2438 = vperm.xlu0 %2437, %v1457
        %v2439 = vpop.permute.xlu0 %2438
        %2441 = vset.pattern.permute.xlu0 3
        %2442 = vperm.xlu0 %2441, %v1458
        %v2443 = vpop.permute.xlu0 %2442
        %2445 = vset.pattern.permute.xlu0 3
        %2446 = vperm.xlu0 %2445, %v1459
        %v2447 = vpop.permute.xlu0 %2446
        %2449 = vset.pattern.permute.xlu0 3
        %2450 = vperm.xlu0 %2449, %v1460
        %v2451 = vpop.permute.xlu0 %2450
        %2453 = vset.pattern.permute.xlu0 3
        %2454 = vperm.xlu0 %2453, %v1461
        %v2455 = vpop.permute.xlu0 %2454
        %2457 = vset.pattern.permute.xlu0 3
        %2458 = vperm.xlu0 %2457, %v1462
        %v2459 = vpop.permute.xlu0 %2458
        %2461 = vset.pattern.permute.xlu0 3
        %2462 = vperm.xlu0 %2461, %v1463
        %v2463 = vpop.permute.xlu0 %2462
        %2465 = vset.pattern.permute.xlu0 3
        %2466 = vperm.xlu0 %2465, %v1464
        %v2467 = vpop.permute.xlu0 %2466
        %2469 = vset.pattern.permute.xlu0 3
        %2470 = vperm.xlu0 %2469, %v1465
        %v2471 = vpop.permute.xlu0 %2470
        %2473 = vset.pattern.permute.xlu0 3
        %2474 = vperm.xlu0 %2473, %v1466
        %v2475 = vpop.permute.xlu0 %2474
        %2477 = vset.pattern.permute.xlu0 3
        %2478 = vperm.xlu0 %2477, %v1467
        %v2479 = vpop.permute.xlu0 %2478
        %2481 = vset.pattern.permute.xlu0 3
        %2482 = vperm.xlu0 %2481, %v1468
        %v2483 = vpop.permute.xlu0 %2482
        %2485 = vset.pattern.permute.xlu0 3
        %2486 = vperm.xlu0 %2485, %v1469
        %v2487 = vpop.permute.xlu0 %2486
        %2489 = vset.pattern.permute.xlu0 3
        %2490 = vperm.xlu0 %2489, %v1470
        %v2491 = vpop.permute.xlu0 %2490
        %2493 = vset.pattern.permute.xlu0 3
        %2494 = vperm.xlu0 %2493, %v1471
        %v2495 = vpop.permute.xlu0 %2494
        %2497 = vset.pattern.permute.xlu0 3
        %2498 = vperm.xlu0 %2497, %v1472
        %v2499 = vpop.permute.xlu0 %2498
        %2501 = vset.pattern.permute.xlu0 3
        %2502 = vperm.xlu0 %2501, %v1473
        %v2503 = vpop.permute.xlu0 %2502
        %2505 = vset.pattern.permute.xlu0 3
        %2506 = vperm.xlu0 %2505, %v1474
        %v2507 = vpop.permute.xlu0 %2506
        %2509 = vset.pattern.permute.xlu0 3
        %2510 = vperm.xlu0 %2509, %v1475
        %v2511 = vpop.permute.xlu0 %2510
        %2513 = vset.pattern.permute.xlu0 3
        %2514 = vperm.xlu0 %2513, %v1476
        %v2515 = vpop.permute.xlu0 %2514
        %2517 = vset.pattern.permute.xlu0 3
        %2518 = vperm.xlu0 %2517, %v1477
        %v2519 = vpop.permute.xlu0 %2518
        %2521 = vset.pattern.permute.xlu0 3
        %2522 = vperm.xlu0 %2521, %v1478
        %v2523 = vpop.permute.xlu0 %2522
        %2525 = vset.pattern.permute.xlu0 3
        %2526 = vperm.xlu0 %2525, %v1479
        %v2527 = vpop.permute.xlu0 %2526
        %2529 = vset.pattern.permute.xlu0 3
        %2530 = vperm.xlu0 %2529, %v1480
        %v2531 = vpop.permute.xlu0 %2530
        %2533 = vset.pattern.permute.xlu0 3
        %2534 = vperm.xlu0 %2533, %v1481
        %v2535 = vpop.permute.xlu0 %2534
        %2537 = vset.pattern.permute.xlu0 3
        %2538 = vperm.xlu0 %2537, %v1482
        %v2539 = vpop.permute.xlu0 %2538
        %v2541 = vmul.f32 %v1450, %v2415
        %v2542 = vmul.f32 %v1361, %v2419
        %v2543 = vmul.f32 %v1363, %v2423
        %v2544 = vmul.f32 %v1365, %v2427
        %v2545 = vmul.f32 %v1367, %v2431
        %v2546 = vmul.f32 %v1369, %v2435
        %v2547 = vmul.f32 %v1371, %v2439
        %v2548 = vmul.f32 %v1373, %v2443
        %v2549 = vmul.f32 %v1375, %v2447
        %v2550 = vmul.f32 %v1377, %v2451
        %v2551 = vmul.f32 %v1379, %v2455
        %v2552 = vmul.f32 %v1381, %v2459
        %v2553 = vmul.f32 %v1383, %v2463
        %v2554 = vmul.f32 %v1385, %v2467
        %v2555 = vmul.f32 %v1387, %v2471
        %v2556 = vmul.f32 %v1389, %v2475
        %v2557 = vmul.f32 %v1391, %v2479
        %v2558 = vmul.f32 %v1393, %v2483
        %v2559 = vmul.f32 %v1395, %v2487
        %v2560 = vmul.f32 %v1397, %v2491
        %v2561 = vmul.f32 %v1399, %v2495
        %v2562 = vmul.f32 %v1401, %v2499
        %v2563 = vmul.f32 %v1403, %v2503
        %v2564 = vmul.f32 %v1405, %v2507
        %v2565 = vmul.f32 %v1407, %v2511
        %v2566 = vmul.f32 %v1409, %v2515
        %v2567 = vmul.f32 %v1411, %v2519
        %v2568 = vmul.f32 %v1413, %v2523
        %v2569 = vmul.f32 %v1415, %v2527
        %v2570 = vmul.f32 %v1417, %v2531
        %v2571 = vmul.f32 %v1418, %v2535
        %v2572 = vmul.f32 %v1326, %v2539
        %2605 = vrot.lane.b32.xlu0 %v2541, 80
        %v2606 = vpop.permute.xlu0 %2605
        %2607 = vrot.lane.b32.xlu0 %v2542, 80
        %v2608 = vpop.permute.xlu0 %2607
        %2609 = vrot.lane.b32.xlu0 %v2543, 80
        %v2610 = vpop.permute.xlu0 %2609
        %2611 = vrot.lane.b32.xlu0 %v2544, 80
        %v2612 = vpop.permute.xlu0 %2611
        %2613 = vrot.lane.b32.xlu0 %v2545, 80
        %v2614 = vpop.permute.xlu0 %2613
        %2615 = vrot.lane.b32.xlu0 %v2546, 80
        %v2616 = vpop.permute.xlu0 %2615
        %2617 = vrot.lane.b32.xlu0 %v2547, 80
        %v2618 = vpop.permute.xlu0 %2617
        %2619 = vrot.lane.b32.xlu0 %v2548, 80
        %v2620 = vpop.permute.xlu0 %2619
        %2621 = vrot.lane.b32.xlu0 %v2549, 80
        %v2622 = vpop.permute.xlu0 %2621
        %2623 = vrot.lane.b32.xlu0 %v2550, 80
        %v2624 = vpop.permute.xlu0 %2623
        %2625 = vrot.lane.b32.xlu0 %v2551, 80
        %v2626 = vpop.permute.xlu0 %2625
        %2627 = vrot.lane.b32.xlu0 %v2552, 80
        %v2628 = vpop.permute.xlu0 %2627
        %2629 = vrot.lane.b32.xlu0 %v2553, 80
        %v2630 = vpop.permute.xlu0 %2629
        %2631 = vrot.lane.b32.xlu0 %v2554, 80
        %v2632 = vpop.permute.xlu0 %2631
        %2633 = vrot.lane.b32.xlu0 %v2555, 80
        %v2634 = vpop.permute.xlu0 %2633
        %2635 = vrot.lane.b32.xlu0 %v2556, 80
        %v2636 = vpop.permute.xlu0 %2635
        %2637 = vrot.lane.b32.xlu0 %v2557, 80
        %v2638 = vpop.permute.xlu0 %2637
        %2639 = vrot.lane.b32.xlu0 %v2558, 80
        %v2640 = vpop.permute.xlu0 %2639
        %2641 = vrot.lane.b32.xlu0 %v2559, 80
        %v2642 = vpop.permute.xlu0 %2641
        %2643 = vrot.lane.b32.xlu0 %v2560, 80
        %v2644 = vpop.permute.xlu0 %2643
        %2645 = vrot.lane.b32.xlu0 %v2561, 80
        %v2646 = vpop.permute.xlu0 %2645
        %2647 = vrot.lane.b32.xlu0 %v2562, 80
        %v2648 = vpop.permute.xlu0 %2647
        %2649 = vrot.lane.b32.xlu0 %v2563, 80
        %v2650 = vpop.permute.xlu0 %2649
        %2651 = vrot.lane.b32.xlu0 %v2564, 80
        %v2652 = vpop.permute.xlu0 %2651
        %2653 = vrot.lane.b32.xlu0 %v2565, 80
        %v2654 = vpop.permute.xlu0 %2653
        %2655 = vrot.lane.b32.xlu0 %v2566, 80
        %v2656 = vpop.permute.xlu0 %2655
        %2657 = vrot.lane.b32.xlu0 %v2567, 80
        %v2658 = vpop.permute.xlu0 %2657
        %2659 = vrot.lane.b32.xlu0 %v2568, 80
        %v2660 = vpop.permute.xlu0 %2659
        %2661 = vrot.lane.b32.xlu0 %v2569, 80
        %v2662 = vpop.permute.xlu0 %2661
        %2663 = vrot.lane.b32.xlu0 %v2570, 80
        %v2664 = vpop.permute.xlu0 %2663
        %2665 = vrot.lane.b32.xlu0 %v2571, 80
        %v2666 = vpop.permute.xlu0 %2665
        %2667 = vrot.lane.b32.xlu0 %v2572, 80
        %v2668 = vpop.permute.xlu0 %2667
        %v2701 = vadd.f32 %v2381, %v2606
        %v2702 = vadd.f32 %v2382, %v2608
        %v2703 = vadd.f32 %v2383, %v2610
        %v2704 = vadd.f32 %v2384, %v2612
        %v2705 = vadd.f32 %v2385, %v2614
        %v2706 = vadd.f32 %v2386, %v2616
        %v2707 = vadd.f32 %v2387, %v2618
        %v2708 = vadd.f32 %v2388, %v2620
        %v2709 = vadd.f32 %v2389, %v2622
        %v2710 = vadd.f32 %v2390, %v2624
        %v2711 = vadd.f32 %v2391, %v2626
        %v2712 = vadd.f32 %v2392, %v2628
        %v2713 = vadd.f32 %v2393, %v2630
        %v2714 = vadd.f32 %v2394, %v2632
        %v2715 = vadd.f32 %v2395, %v2634
        %v2716 = vadd.f32 %v2396, %v2636
        %v2717 = vadd.f32 %v2397, %v2638
        %v2718 = vadd.f32 %v2398, %v2640
        %v2719 = vadd.f32 %v2399, %v2642
        %v2720 = vadd.f32 %v2400, %v2644
        %v2721 = vadd.f32 %v2401, %v2646
        %v2722 = vadd.f32 %v2402, %v2648
        %v2723 = vadd.f32 %v2403, %v2650
        %v2724 = vadd.f32 %v2404, %v2652
        %v2725 = vadd.f32 %v2405, %v2654
        %v2726 = vadd.f32 %v2406, %v2656
        %v2727 = vadd.f32 %v2407, %v2658
        %v2728 = vadd.f32 %v2408, %v2660
        %v2729 = vadd.f32 %v2409, %v2662
        %v2730 = vadd.f32 %v2410, %v2664
        %v2731 = vadd.f32 %v2411, %v2666
        %v2732 = vadd.f32 %v2412, %v2668
        %2733 = vrot.lane.b32.xlu0 %v1163, 64
        %v2734 = vpop.permute.xlu0 %2733
        %2735 = vrot.lane.b32.xlu0 %v1167, 64
        %v2736 = vpop.permute.xlu0 %2735
        %2737 = vrot.lane.b32.xlu0 %v1173, 64
        %v2738 = vpop.permute.xlu0 %2737
        %2739 = vrot.lane.b32.xlu0 %v1177, 64
        %v2740 = vpop.permute.xlu0 %2739
        %2741 = vrot.lane.b32.xlu0 %v1183, 64
        %v2742 = vpop.permute.xlu0 %2741
        %2743 = vrot.lane.b32.xlu0 %v1187, 64
        %v2744 = vpop.permute.xlu0 %2743
        %2745 = vrot.lane.b32.xlu0 %v1193, 64
        %v2746 = vpop.permute.xlu0 %2745
        %2747 = vrot.lane.b32.xlu0 %v1197, 64
        %v2748 = vpop.permute.xlu0 %2747
        %2749 = vrot.lane.b32.xlu0 %v1203, 64
        %v2750 = vpop.permute.xlu0 %2749
        %2751 = vrot.lane.b32.xlu0 %v1207, 64
        %v2752 = vpop.permute.xlu0 %2751
        %2753 = vrot.lane.b32.xlu0 %v1213, 64
        %v2754 = vpop.permute.xlu0 %2753
        %2755 = vrot.lane.b32.xlu0 %v1217, 64
        %v2756 = vpop.permute.xlu0 %2755
        %2757 = vrot.lane.b32.xlu0 %v1223, 64
        %v2758 = vpop.permute.xlu0 %2757
        %2759 = vrot.lane.b32.xlu0 %v1227, 64
        %v2760 = vpop.permute.xlu0 %2759
        %2761 = vrot.lane.b32.xlu0 %v1233, 64
        %v2762 = vpop.permute.xlu0 %2761
        %2763 = vrot.lane.b32.xlu0 %v1237, 64
        %v2764 = vpop.permute.xlu0 %2763
        %2765 = vrot.lane.b32.xlu0 %v1243, 64
        %v2766 = vpop.permute.xlu0 %2765
        %2767 = vrot.lane.b32.xlu0 %v1247, 64
        %v2768 = vpop.permute.xlu0 %2767
        %2769 = vrot.lane.b32.xlu0 %v1253, 64
        %v2770 = vpop.permute.xlu0 %2769
        %2771 = vrot.lane.b32.xlu0 %v1257, 64
        %v2772 = vpop.permute.xlu0 %2771
        %2773 = vrot.lane.b32.xlu0 %v1263, 64
        %v2774 = vpop.permute.xlu0 %2773
        %2775 = vrot.lane.b32.xlu0 %v1267, 64
        %v2776 = vpop.permute.xlu0 %2775
        %2777 = vrot.lane.b32.xlu0 %v1273, 64
        %v2778 = vpop.permute.xlu0 %2777
        %2779 = vrot.lane.b32.xlu0 %v1277, 64
        %v2780 = vpop.permute.xlu0 %2779
        %2781 = vrot.lane.b32.xlu0 %v1283, 64
        %v2782 = vpop.permute.xlu0 %2781
        %2783 = vrot.lane.b32.xlu0 %v1287, 64
        %v2784 = vpop.permute.xlu0 %2783
        %2785 = vrot.lane.b32.xlu0 %v1293, 64
        %v2786 = vpop.permute.xlu0 %2785
        %2787 = vrot.lane.b32.xlu0 %v1297, 64
        %v2788 = vpop.permute.xlu0 %2787
        %2789 = vrot.lane.b32.xlu0 %v1303, 64
        %v2790 = vpop.permute.xlu0 %2789
        %2791 = vrot.lane.b32.xlu0 %v1307, 64
        %v2792 = vpop.permute.xlu0 %2791
        %2793 = vrot.lane.b32.xlu0 %v1313, 64
        %v2794 = vpop.permute.xlu0 %2793
        %2795 = vrot.lane.b32.xlu0 %v1317, 64
        %v2796 = vpop.permute.xlu0 %2795
        %v2829 = vadd.f32 %v2701, %v2734
        %v2830 = vadd.f32 %v2702, %v2736
        %v2831 = vadd.f32 %v2703, %v2738
        %v2832 = vadd.f32 %v2704, %v2740
        %v2833 = vadd.f32 %v2705, %v2742
        %v2834 = vadd.f32 %v2706, %v2744
        %v2835 = vadd.f32 %v2707, %v2746
        %v2836 = vadd.f32 %v2708, %v2748
        %v2837 = vadd.f32 %v2709, %v2750
        %v2838 = vadd.f32 %v2710, %v2752
        %v2839 = vadd.f32 %v2711, %v2754
        %v2840 = vadd.f32 %v2712, %v2756
        %v2841 = vadd.f32 %v2713, %v2758
        %v2842 = vadd.f32 %v2714, %v2760
        %v2843 = vadd.f32 %v2715, %v2762
        %v2844 = vadd.f32 %v2716, %v2764
        %v2845 = vadd.f32 %v2717, %v2766
        %v2846 = vadd.f32 %v2718, %v2768
        %v2847 = vadd.f32 %v2719, %v2770
        %v2848 = vadd.f32 %v2720, %v2772
        %v2849 = vadd.f32 %v2721, %v2774
        %v2850 = vadd.f32 %v2722, %v2776
        %v2851 = vadd.f32 %v2723, %v2778
        %v2852 = vadd.f32 %v2724, %v2780
        %v2853 = vadd.f32 %v2725, %v2782
        %v2854 = vadd.f32 %v2726, %v2784
        %v2855 = vadd.f32 %v2727, %v2786
        %v2856 = vadd.f32 %v2728, %v2788
        %v2857 = vadd.f32 %v2729, %v2790
        %v2858 = vadd.f32 %v2730, %v2792
        %v2859 = vadd.f32 %v2731, %v2794
        %v2860 = vadd.f32 %v2732, %v2796
        %2861 = vset.pattern.permute.xlu0 5
        %2862 = vperm.xlu0 %2861, %v1451
        %v2863 = vpop.permute.xlu0 %2862
        %2865 = vset.pattern.permute.xlu0 5
        %2866 = vperm.xlu0 %2865, %v1452
        %v2867 = vpop.permute.xlu0 %2866
        %2869 = vset.pattern.permute.xlu0 5
        %2870 = vperm.xlu0 %2869, %v1453
        %v2871 = vpop.permute.xlu0 %2870
        %2873 = vset.pattern.permute.xlu0 5
        %2874 = vperm.xlu0 %2873, %v1454
        %v2875 = vpop.permute.xlu0 %2874
        %2877 = vset.pattern.permute.xlu0 5
        %2878 = vperm.xlu0 %2877, %v1455
        %v2879 = vpop.permute.xlu0 %2878
        %2881 = vset.pattern.permute.xlu0 5
        %2882 = vperm.xlu0 %2881, %v1456
        %v2883 = vpop.permute.xlu0 %2882
        %2885 = vset.pattern.permute.xlu0 5
        %2886 = vperm.xlu0 %2885, %v1457
        %v2887 = vpop.permute.xlu0 %2886
        %2889 = vset.pattern.permute.xlu0 5
        %2890 = vperm.xlu0 %2889, %v1458
        %v2891 = vpop.permute.xlu0 %2890
        %2893 = vset.pattern.permute.xlu0 5
        %2894 = vperm.xlu0 %2893, %v1459
        %v2895 = vpop.permute.xlu0 %2894
        %2897 = vset.pattern.permute.xlu0 5
        %2898 = vperm.xlu0 %2897, %v1460
        %v2899 = vpop.permute.xlu0 %2898
        %2901 = vset.pattern.permute.xlu0 5
        %2902 = vperm.xlu0 %2901, %v1461
        %v2903 = vpop.permute.xlu0 %2902
        %2905 = vset.pattern.permute.xlu0 5
        %2906 = vperm.xlu0 %2905, %v1462
        %v2907 = vpop.permute.xlu0 %2906
        %2909 = vset.pattern.permute.xlu0 5
        %2910 = vperm.xlu0 %2909, %v1463
        %v2911 = vpop.permute.xlu0 %2910
        %2913 = vset.pattern.permute.xlu0 5
        %2914 = vperm.xlu0 %2913, %v1464
        %v2915 = vpop.permute.xlu0 %2914
        %2917 = vset.pattern.permute.xlu0 5
        %2918 = vperm.xlu0 %2917, %v1465
        %v2919 = vpop.permute.xlu0 %2918
        %2921 = vset.pattern.permute.xlu0 5
        %2922 = vperm.xlu0 %2921, %v1466
        %v2923 = vpop.permute.xlu0 %2922
        %2925 = vset.pattern.permute.xlu0 5
        %2926 = vperm.xlu0 %2925, %v1467
        %v2927 = vpop.permute.xlu0 %2926
        %2929 = vset.pattern.permute.xlu0 5
        %2930 = vperm.xlu0 %2929, %v1468
        %v2931 = vpop.permute.xlu0 %2930
        %2933 = vset.pattern.permute.xlu0 5
        %2934 = vperm.xlu0 %2933, %v1469
        %v2935 = vpop.permute.xlu0 %2934
        %2937 = vset.pattern.permute.xlu0 5
        %2938 = vperm.xlu0 %2937, %v1470
        %v2939 = vpop.permute.xlu0 %2938
        %2941 = vset.pattern.permute.xlu0 5
        %2942 = vperm.xlu0 %2941, %v1471
        %v2943 = vpop.permute.xlu0 %2942
        %2945 = vset.pattern.permute.xlu0 5
        %2946 = vperm.xlu0 %2945, %v1472
        %v2947 = vpop.permute.xlu0 %2946
        %2949 = vset.pattern.permute.xlu0 5
        %2950 = vperm.xlu0 %2949, %v1473
        %v2951 = vpop.permute.xlu0 %2950
        %2953 = vset.pattern.permute.xlu0 5
        %2954 = vperm.xlu0 %2953, %v1474
        %v2955 = vpop.permute.xlu0 %2954
        %2957 = vset.pattern.permute.xlu0 5
        %2958 = vperm.xlu0 %2957, %v1475
        %v2959 = vpop.permute.xlu0 %2958
        %2961 = vset.pattern.permute.xlu0 5
        %2962 = vperm.xlu0 %2961, %v1476
        %v2963 = vpop.permute.xlu0 %2962
        %2965 = vset.pattern.permute.xlu0 5
        %2966 = vperm.xlu0 %2965, %v1477
        %v2967 = vpop.permute.xlu0 %2966
        %2969 = vset.pattern.permute.xlu0 5
        %2970 = vperm.xlu0 %2969, %v1478
        %v2971 = vpop.permute.xlu0 %2970
        %2973 = vset.pattern.permute.xlu0 5
        %2974 = vperm.xlu0 %2973, %v1479
        %v2975 = vpop.permute.xlu0 %2974
        %2977 = vset.pattern.permute.xlu0 5
        %2978 = vperm.xlu0 %2977, %v1480
        %v2979 = vpop.permute.xlu0 %2978
        %2981 = vset.pattern.permute.xlu0 5
        %2982 = vperm.xlu0 %2981, %v1481
        %v2983 = vpop.permute.xlu0 %2982
        %2985 = vset.pattern.permute.xlu0 5
        %2986 = vperm.xlu0 %2985, %v1482
        %v2987 = vpop.permute.xlu0 %2986
        %v2989 = vmul.f32 %v2000, %v2863
        %v2990 = vmul.f32 %v2002, %v2867
        %v2991 = vmul.f32 %v2004, %v2871
        %v2992 = vmul.f32 %v2006, %v2875
        %v2993 = vmul.f32 %v2008, %v2879
        %v2994 = vmul.f32 %v2010, %v2883
        %v2995 = vmul.f32 %v2012, %v2887
        %v2996 = vmul.f32 %v2014, %v2891
        %v2997 = vmul.f32 %v2016, %v2895
        %v2998 = vmul.f32 %v2018, %v2899
        %v2999 = vmul.f32 %v2020, %v2903
        %v3000 = vmul.f32 %v2022, %v2907
        %v3001 = vmul.f32 %v2024, %v2911
        %v3002 = vmul.f32 %v2026, %v2915
        %v3003 = vmul.f32 %v2028, %v2919
        %v3004 = vmul.f32 %v2030, %v2923
        %v3005 = vmul.f32 %v2032, %v2927
        %v3006 = vmul.f32 %v2034, %v2931
        %v3007 = vmul.f32 %v2036, %v2935
        %v3008 = vmul.f32 %v2038, %v2939
        %v3009 = vmul.f32 %v2040, %v2943
        %v3010 = vmul.f32 %v2042, %v2947
        %v3011 = vmul.f32 %v2044, %v2951
        %v3012 = vmul.f32 %v2046, %v2955
        %v3013 = vmul.f32 %v2048, %v2959
        %v3014 = vmul.f32 %v2050, %v2963
        %v3015 = vmul.f32 %v2052, %v2967
        %v3016 = vmul.f32 %v2054, %v2971
        %v3017 = vmul.f32 %v2056, %v2975
        %v3018 = vmul.f32 %v2058, %v2979
        %v3019 = vmul.f32 %v2059, %v2983
        %v3020 = vmul.f32 %v2092, %v2987
        %3053 = vrot.lane.b32.xlu0 %v2989, 48
        %v3054 = vpop.permute.xlu0 %3053
        %3055 = vrot.lane.b32.xlu0 %v2990, 48
        %v3056 = vpop.permute.xlu0 %3055
        %3057 = vrot.lane.b32.xlu0 %v2991, 48
        %v3058 = vpop.permute.xlu0 %3057
        %3059 = vrot.lane.b32.xlu0 %v2992, 48
        %v3060 = vpop.permute.xlu0 %3059
        %3061 = vrot.lane.b32.xlu0 %v2993, 48
        %v3062 = vpop.permute.xlu0 %3061
        %3063 = vrot.lane.b32.xlu0 %v2994, 48
        %v3064 = vpop.permute.xlu0 %3063
        %3065 = vrot.lane.b32.xlu0 %v2995, 48
        %v3066 = vpop.permute.xlu0 %3065
        %3067 = vrot.lane.b32.xlu0 %v2996, 48
        %v3068 = vpop.permute.xlu0 %3067
        %3069 = vrot.lane.b32.xlu0 %v2997, 48
        %v3070 = vpop.permute.xlu0 %3069
        %3071 = vrot.lane.b32.xlu0 %v2998, 48
        %v3072 = vpop.permute.xlu0 %3071
        %3073 = vrot.lane.b32.xlu0 %v2999, 48
        %v3074 = vpop.permute.xlu0 %3073
        %3075 = vrot.lane.b32.xlu0 %v3000, 48
        %v3076 = vpop.permute.xlu0 %3075
        %3077 = vrot.lane.b32.xlu0 %v3001, 48
        %v3078 = vpop.permute.xlu0 %3077
        %3079 = vrot.lane.b32.xlu0 %v3002, 48
        %v3080 = vpop.permute.xlu0 %3079
        %3081 = vrot.lane.b32.xlu0 %v3003, 48
        %v3082 = vpop.permute.xlu0 %3081
        %3083 = vrot.lane.b32.xlu0 %v3004, 48
        %v3084 = vpop.permute.xlu0 %3083
        %3085 = vrot.lane.b32.xlu0 %v3005, 48
        %v3086 = vpop.permute.xlu0 %3085
        %3087 = vrot.lane.b32.xlu0 %v3006, 48
        %v3088 = vpop.permute.xlu0 %3087
        %3089 = vrot.lane.b32.xlu0 %v3007, 48
        %v3090 = vpop.permute.xlu0 %3089
        %3091 = vrot.lane.b32.xlu0 %v3008, 48
        %v3092 = vpop.permute.xlu0 %3091
        %3093 = vrot.lane.b32.xlu0 %v3009, 48
        %v3094 = vpop.permute.xlu0 %3093
        %3095 = vrot.lane.b32.xlu0 %v3010, 48
        %v3096 = vpop.permute.xlu0 %3095
        %3097 = vrot.lane.b32.xlu0 %v3011, 48
        %v3098 = vpop.permute.xlu0 %3097
        %3099 = vrot.lane.b32.xlu0 %v3012, 48
        %v3100 = vpop.permute.xlu0 %3099
        %3101 = vrot.lane.b32.xlu0 %v3013, 48
        %v3102 = vpop.permute.xlu0 %3101
        %3103 = vrot.lane.b32.xlu0 %v3014, 48
        %v3104 = vpop.permute.xlu0 %3103
        %3105 = vrot.lane.b32.xlu0 %v3015, 48
        %v3106 = vpop.permute.xlu0 %3105
        %3107 = vrot.lane.b32.xlu0 %v3016, 48
        %v3108 = vpop.permute.xlu0 %3107
        %3109 = vrot.lane.b32.xlu0 %v3017, 48
        %v3110 = vpop.permute.xlu0 %3109
        %3111 = vrot.lane.b32.xlu0 %v3018, 48
        %v3112 = vpop.permute.xlu0 %3111
        %3113 = vrot.lane.b32.xlu0 %v3019, 48
        %v3114 = vpop.permute.xlu0 %3113
        %3115 = vrot.lane.b32.xlu0 %v3020, 48
        %v3116 = vpop.permute.xlu0 %3115
        %v3149 = vadd.f32 %v2829, %v3054
        %v3150 = vadd.f32 %v2830, %v3056
        %v3151 = vadd.f32 %v2831, %v3058
        %v3152 = vadd.f32 %v2832, %v3060
        %v3153 = vadd.f32 %v2833, %v3062
        %v3154 = vadd.f32 %v2834, %v3064
        %v3155 = vadd.f32 %v2835, %v3066
        %v3156 = vadd.f32 %v2836, %v3068
        %v3157 = vadd.f32 %v2837, %v3070
        %v3158 = vadd.f32 %v2838, %v3072
        %v3159 = vadd.f32 %v2839, %v3074
        %v3160 = vadd.f32 %v2840, %v3076
        %v3161 = vadd.f32 %v2841, %v3078
        %v3162 = vadd.f32 %v2842, %v3080
        %v3163 = vadd.f32 %v2843, %v3082
        %v3164 = vadd.f32 %v2844, %v3084
        %v3165 = vadd.f32 %v2845, %v3086
        %v3166 = vadd.f32 %v2846, %v3088
        %v3167 = vadd.f32 %v2847, %v3090
        %v3168 = vadd.f32 %v2848, %v3092
        %v3169 = vadd.f32 %v2849, %v3094
        %v3170 = vadd.f32 %v2850, %v3096
        %v3171 = vadd.f32 %v2851, %v3098
        %v3172 = vadd.f32 %v2852, %v3100
        %v3173 = vadd.f32 %v2853, %v3102
        %v3174 = vadd.f32 %v2854, %v3104
        %v3175 = vadd.f32 %v2855, %v3106
        %v3176 = vadd.f32 %v2856, %v3108
        %v3177 = vadd.f32 %v2857, %v3110
        %v3178 = vadd.f32 %v2858, %v3112
        %v3179 = vadd.f32 %v2859, %v3114
        %v3180 = vadd.f32 %v2860, %v3116
        %3181 = vset.pattern.permute.xlu0 6
        %3182 = vperm.xlu0 %3181, %v1451
        %v3183 = vpop.permute.xlu0 %3182
        %3185 = vset.pattern.permute.xlu0 6
        %3186 = vperm.xlu0 %3185, %v1452
        %v3187 = vpop.permute.xlu0 %3186
        %3189 = vset.pattern.permute.xlu0 6
        %3190 = vperm.xlu0 %3189, %v1453
        %v3191 = vpop.permute.xlu0 %3190
        %3193 = vset.pattern.permute.xlu0 6
        %3194 = vperm.xlu0 %3193, %v1454
        %v3195 = vpop.permute.xlu0 %3194
        %3197 = vset.pattern.permute.xlu0 6
        %3198 = vperm.xlu0 %3197, %v1455
        %v3199 = vpop.permute.xlu0 %3198
        %3201 = vset.pattern.permute.xlu0 6
        %3202 = vperm.xlu0 %3201, %v1456
        %v3203 = vpop.permute.xlu0 %3202
        %3205 = vset.pattern.permute.xlu0 6
        %3206 = vperm.xlu0 %3205, %v1457
        %v3207 = vpop.permute.xlu0 %3206
        %3209 = vset.pattern.permute.xlu0 6
        %3210 = vperm.xlu0 %3209, %v1458
        %v3211 = vpop.permute.xlu0 %3210
        %3213 = vset.pattern.permute.xlu0 6
        %3214 = vperm.xlu0 %3213, %v1459
        %v3215 = vpop.permute.xlu0 %3214
        %3217 = vset.pattern.permute.xlu0 6
        %3218 = vperm.xlu0 %3217, %v1460
        %v3219 = vpop.permute.xlu0 %3218
        %3221 = vset.pattern.permute.xlu0 6
        %3222 = vperm.xlu0 %3221, %v1461
        %v3223 = vpop.permute.xlu0 %3222
        %3225 = vset.pattern.permute.xlu0 6
        %3226 = vperm.xlu0 %3225, %v1462
        %v3227 = vpop.permute.xlu0 %3226
        %3229 = vset.pattern.permute.xlu0 6
        %3230 = vperm.xlu0 %3229, %v1463
        %v3231 = vpop.permute.xlu0 %3230
        %3233 = vset.pattern.permute.xlu0 6
        %3234 = vperm.xlu0 %3233, %v1464
        %v3235 = vpop.permute.xlu0 %3234
        %3237 = vset.pattern.permute.xlu0 6
        %3238 = vperm.xlu0 %3237, %v1465
        %v3239 = vpop.permute.xlu0 %3238
        %3241 = vset.pattern.permute.xlu0 6
        %3242 = vperm.xlu0 %3241, %v1466
        %v3243 = vpop.permute.xlu0 %3242
        %3245 = vset.pattern.permute.xlu0 6
        %3246 = vperm.xlu0 %3245, %v1467
        %v3247 = vpop.permute.xlu0 %3246
        %3249 = vset.pattern.permute.xlu0 6
        %3250 = vperm.xlu0 %3249, %v1468
        %v3251 = vpop.permute.xlu0 %3250
        %3253 = vset.pattern.permute.xlu0 6
        %3254 = vperm.xlu0 %3253, %v1469
        %v3255 = vpop.permute.xlu0 %3254
        %3257 = vset.pattern.permute.xlu0 6
        %3258 = vperm.xlu0 %3257, %v1470
        %v3259 = vpop.permute.xlu0 %3258
        %3261 = vset.pattern.permute.xlu0 6
        %3262 = vperm.xlu0 %3261, %v1471
        %v3263 = vpop.permute.xlu0 %3262
        %3265 = vset.pattern.permute.xlu0 6
        %3266 = vperm.xlu0 %3265, %v1472
        %v3267 = vpop.permute.xlu0 %3266
        %3269 = vset.pattern.permute.xlu0 6
        %3270 = vperm.xlu0 %3269, %v1473
        %v3271 = vpop.permute.xlu0 %3270
        %3273 = vset.pattern.permute.xlu0 6
        %3274 = vperm.xlu0 %3273, %v1474
        %v3275 = vpop.permute.xlu0 %3274
        %3277 = vset.pattern.permute.xlu0 6
        %3278 = vperm.xlu0 %3277, %v1475
        %v3279 = vpop.permute.xlu0 %3278
        %3281 = vset.pattern.permute.xlu0 6
        %3282 = vperm.xlu0 %3281, %v1476
        %v3283 = vpop.permute.xlu0 %3282
        %3285 = vset.pattern.permute.xlu0 6
        %3286 = vperm.xlu0 %3285, %v1477
        %v3287 = vpop.permute.xlu0 %3286
        %3289 = vset.pattern.permute.xlu0 6
        %3290 = vperm.xlu0 %3289, %v1478
        %v3291 = vpop.permute.xlu0 %3290
        %3293 = vset.pattern.permute.xlu0 6
        %3294 = vperm.xlu0 %3293, %v1479
        %v3295 = vpop.permute.xlu0 %3294
        %3297 = vset.pattern.permute.xlu0 6
        %3298 = vperm.xlu0 %3297, %v1480
        %v3299 = vpop.permute.xlu0 %3298
        %3301 = vset.pattern.permute.xlu0 6
        %3302 = vperm.xlu0 %3301, %v1481
        %v3303 = vpop.permute.xlu0 %3302
        %3305 = vset.pattern.permute.xlu0 6
        %3306 = vperm.xlu0 %3305, %v1482
        %v3307 = vpop.permute.xlu0 %3306
        %v3309 = vmul.f32 %v1361, %v3183
        %v3310 = vmul.f32 %v1363, %v3187
        %v3311 = vmul.f32 %v1365, %v3191
        %v3312 = vmul.f32 %v1367, %v3195
        %v3313 = vmul.f32 %v1369, %v3199
        %v3314 = vmul.f32 %v1371, %v3203
        %v3315 = vmul.f32 %v1373, %v3207
        %v3316 = vmul.f32 %v1375, %v3211
        %v3317 = vmul.f32 %v1377, %v3215
        %v3318 = vmul.f32 %v1379, %v3219
        %v3319 = vmul.f32 %v1381, %v3223
        %v3320 = vmul.f32 %v1383, %v3227
        %v3321 = vmul.f32 %v1385, %v3231
        %v3322 = vmul.f32 %v1387, %v3235
        %v3323 = vmul.f32 %v1389, %v3239
        %v3324 = vmul.f32 %v1391, %v3243
        %v3325 = vmul.f32 %v1393, %v3247
        %v3326 = vmul.f32 %v1395, %v3251
        %v3327 = vmul.f32 %v1397, %v3255
        %v3328 = vmul.f32 %v1399, %v3259
        %v3329 = vmul.f32 %v1401, %v3263
        %v3330 = vmul.f32 %v1403, %v3267
        %v3331 = vmul.f32 %v1405, %v3271
        %v3332 = vmul.f32 %v1407, %v3275
        %v3333 = vmul.f32 %v1409, %v3279
        %v3334 = vmul.f32 %v1411, %v3283
        %v3335 = vmul.f32 %v1413, %v3287
        %v3336 = vmul.f32 %v1415, %v3291
        %v3337 = vmul.f32 %v1417, %v3295
        %v3338 = vmul.f32 %v1418, %v3299
        %v3339 = vmul.f32 %v1326, %v3303
        %v3340 = vmul.f32 %v1450, %v3307
        %3373 = vrot.lane.b32.xlu0 %v3309, 32
        %v3374 = vpop.permute.xlu0 %3373
        %3375 = vrot.lane.b32.xlu0 %v3310, 32
        %v3376 = vpop.permute.xlu0 %3375
        %3377 = vrot.lane.b32.xlu0 %v3311, 32
        %v3378 = vpop.permute.xlu0 %3377
        %3379 = vrot.lane.b32.xlu0 %v3312, 32
        %v3380 = vpop.permute.xlu0 %3379
        %3381 = vrot.lane.b32.xlu0 %v3313, 32
        %v3382 = vpop.permute.xlu0 %3381
        %3383 = vrot.lane.b32.xlu0 %v3314, 32
        %v3384 = vpop.permute.xlu0 %3383
        %3385 = vrot.lane.b32.xlu0 %v3315, 32
        %v3386 = vpop.permute.xlu0 %3385
        %3387 = vrot.lane.b32.xlu0 %v3316, 32
        %v3388 = vpop.permute.xlu0 %3387
        %3389 = vrot.lane.b32.xlu0 %v3317, 32
        %v3390 = vpop.permute.xlu0 %3389
        %3391 = vrot.lane.b32.xlu0 %v3318, 32
        %v3392 = vpop.permute.xlu0 %3391
        %3393 = vrot.lane.b32.xlu0 %v3319, 32
        %v3394 = vpop.permute.xlu0 %3393
        %3395 = vrot.lane.b32.xlu0 %v3320, 32
        %v3396 = vpop.permute.xlu0 %3395
        %3397 = vrot.lane.b32.xlu0 %v3321, 32
        %v3398 = vpop.permute.xlu0 %3397
        %3399 = vrot.lane.b32.xlu0 %v3322, 32
        %v3400 = vpop.permute.xlu0 %3399
        %3401 = vrot.lane.b32.xlu0 %v3323, 32
        %v3402 = vpop.permute.xlu0 %3401
        %3403 = vrot.lane.b32.xlu0 %v3324, 32
        %v3404 = vpop.permute.xlu0 %3403
        %3405 = vrot.lane.b32.xlu0 %v3325, 32
        %v3406 = vpop.permute.xlu0 %3405
        %3407 = vrot.lane.b32.xlu0 %v3326, 32
        %v3408 = vpop.permute.xlu0 %3407
        %3409 = vrot.lane.b32.xlu0 %v3327, 32
        %v3410 = vpop.permute.xlu0 %3409
        %3411 = vrot.lane.b32.xlu0 %v3328, 32
        %v3412 = vpop.permute.xlu0 %3411
        %3413 = vrot.lane.b32.xlu0 %v3329, 32
        %v3414 = vpop.permute.xlu0 %3413
        %3415 = vrot.lane.b32.xlu0 %v3330, 32
        %v3416 = vpop.permute.xlu0 %3415
        %3417 = vrot.lane.b32.xlu0 %v3331, 32
        %v3418 = vpop.permute.xlu0 %3417
        %3419 = vrot.lane.b32.xlu0 %v3332, 32
        %v3420 = vpop.permute.xlu0 %3419
        %3421 = vrot.lane.b32.xlu0 %v3333, 32
        %v3422 = vpop.permute.xlu0 %3421
        %3423 = vrot.lane.b32.xlu0 %v3334, 32
        %v3424 = vpop.permute.xlu0 %3423
        %3425 = vrot.lane.b32.xlu0 %v3335, 32
        %v3426 = vpop.permute.xlu0 %3425
        %3427 = vrot.lane.b32.xlu0 %v3336, 32
        %v3428 = vpop.permute.xlu0 %3427
        %3429 = vrot.lane.b32.xlu0 %v3337, 32
        %v3430 = vpop.permute.xlu0 %3429
        %3431 = vrot.lane.b32.xlu0 %v3338, 32
        %v3432 = vpop.permute.xlu0 %3431
        %3433 = vrot.lane.b32.xlu0 %v3339, 32
        %v3434 = vpop.permute.xlu0 %3433
        %3435 = vrot.lane.b32.xlu0 %v3340, 32
        %v3436 = vpop.permute.xlu0 %3435
        %v3469 = vadd.f32 %v3149, %v3374
        %v3470 = vadd.f32 %v3150, %v3376
        %v3471 = vadd.f32 %v3151, %v3378
        %v3472 = vadd.f32 %v3152, %v3380
        %v3473 = vadd.f32 %v3153, %v3382
        %v3474 = vadd.f32 %v3154, %v3384
        %v3475 = vadd.f32 %v3155, %v3386
        %v3476 = vadd.f32 %v3156, %v3388
        %v3477 = vadd.f32 %v3157, %v3390
        %v3478 = vadd.f32 %v3158, %v3392
        %v3479 = vadd.f32 %v3159, %v3394
        %v3480 = vadd.f32 %v3160, %v3396
        %v3481 = vadd.f32 %v3161, %v3398
        %v3482 = vadd.f32 %v3162, %v3400
        %v3483 = vadd.f32 %v3163, %v3402
        %v3484 = vadd.f32 %v3164, %v3404
        %v3485 = vadd.f32 %v3165, %v3406
        %v3486 = vadd.f32 %v3166, %v3408
        %v3487 = vadd.f32 %v3167, %v3410
        %v3488 = vadd.f32 %v3168, %v3412
        %v3489 = vadd.f32 %v3169, %v3414
        %v3490 = vadd.f32 %v3170, %v3416
        %v3491 = vadd.f32 %v3171, %v3418
        %v3492 = vadd.f32 %v3172, %v3420
        %v3493 = vadd.f32 %v3173, %v3422
        %v3494 = vadd.f32 %v3174, %v3424
        %v3495 = vadd.f32 %v3175, %v3426
        %v3496 = vadd.f32 %v3176, %v3428
        %v3497 = vadd.f32 %v3177, %v3430
        %v3498 = vadd.f32 %v3178, %v3432
        %v3499 = vadd.f32 %v3179, %v3434
        %v3500 = vadd.f32 %v3180, %v3436
        %3501 = vset.pattern.permute.xlu0 7
        %3502 = vperm.xlu0 %3501, %v1451
        %v3503 = vpop.permute.xlu0 %3502
        %3505 = vset.pattern.permute.xlu0 7
        %3506 = vperm.xlu0 %3505, %v1452
        %v3507 = vpop.permute.xlu0 %3506
        %3509 = vset.pattern.permute.xlu0 7
        %3510 = vperm.xlu0 %3509, %v1453
        %v3511 = vpop.permute.xlu0 %3510
        %3513 = vset.pattern.permute.xlu0 7
        %3514 = vperm.xlu0 %3513, %v1454
        %v3515 = vpop.permute.xlu0 %3514
        %3517 = vset.pattern.permute.xlu0 7
        %3518 = vperm.xlu0 %3517, %v1455
        %v3519 = vpop.permute.xlu0 %3518
        %3521 = vset.pattern.permute.xlu0 7
        %3522 = vperm.xlu0 %3521, %v1456
        %v3523 = vpop.permute.xlu0 %3522
        %3525 = vset.pattern.permute.xlu0 7
        %3526 = vperm.xlu0 %3525, %v1457
        %v3527 = vpop.permute.xlu0 %3526
        %3529 = vset.pattern.permute.xlu0 7
        %3530 = vperm.xlu0 %3529, %v1458
        %v3531 = vpop.permute.xlu0 %3530
        %3533 = vset.pattern.permute.xlu0 7
        %3534 = vperm.xlu0 %3533, %v1459
        %v3535 = vpop.permute.xlu0 %3534
        %3537 = vset.pattern.permute.xlu0 7
        %3538 = vperm.xlu0 %3537, %v1460
        %v3539 = vpop.permute.xlu0 %3538
        %3541 = vset.pattern.permute.xlu0 7
        %3542 = vperm.xlu0 %3541, %v1461
        %v3543 = vpop.permute.xlu0 %3542
        %3545 = vset.pattern.permute.xlu0 7
        %3546 = vperm.xlu0 %3545, %v1462
        %v3547 = vpop.permute.xlu0 %3546
        %3549 = vset.pattern.permute.xlu0 7
        %3550 = vperm.xlu0 %3549, %v1463
        %v3551 = vpop.permute.xlu0 %3550
        %3553 = vset.pattern.permute.xlu0 7
        %3554 = vperm.xlu0 %3553, %v1464
        %v3555 = vpop.permute.xlu0 %3554
        %3557 = vset.pattern.permute.xlu0 7
        %3558 = vperm.xlu0 %3557, %v1465
        %v3559 = vpop.permute.xlu0 %3558
        %3561 = vset.pattern.permute.xlu0 7
        %3562 = vperm.xlu0 %3561, %v1466
        %v3563 = vpop.permute.xlu0 %3562
        %3565 = vset.pattern.permute.xlu0 7
        %3566 = vperm.xlu0 %3565, %v1467
        %v3567 = vpop.permute.xlu0 %3566
        %3569 = vset.pattern.permute.xlu0 7
        %3570 = vperm.xlu0 %3569, %v1468
        %v3571 = vpop.permute.xlu0 %3570
        %3573 = vset.pattern.permute.xlu0 7
        %3574 = vperm.xlu0 %3573, %v1469
        %v3575 = vpop.permute.xlu0 %3574
        %3577 = vset.pattern.permute.xlu0 7
        %3578 = vperm.xlu0 %3577, %v1470
        %v3579 = vpop.permute.xlu0 %3578
        %3581 = vset.pattern.permute.xlu0 7
        %3582 = vperm.xlu0 %3581, %v1471
        %v3583 = vpop.permute.xlu0 %3582
        %3585 = vset.pattern.permute.xlu0 7
        %3586 = vperm.xlu0 %3585, %v1472
        %v3587 = vpop.permute.xlu0 %3586
        %3589 = vset.pattern.permute.xlu0 7
        %3590 = vperm.xlu0 %3589, %v1473
        %v3591 = vpop.permute.xlu0 %3590
        %3593 = vset.pattern.permute.xlu0 7
        %3594 = vperm.xlu0 %3593, %v1474
        %v3595 = vpop.permute.xlu0 %3594
        %3597 = vset.pattern.permute.xlu0 7
        %3598 = vperm.xlu0 %3597, %v1475
        %v3599 = vpop.permute.xlu0 %3598
        %3601 = vset.pattern.permute.xlu0 7
        %3602 = vperm.xlu0 %3601, %v1476
        %v3603 = vpop.permute.xlu0 %3602
        %3605 = vset.pattern.permute.xlu0 7
        %3606 = vperm.xlu0 %3605, %v1477
        %v3607 = vpop.permute.xlu0 %3606
        %3609 = vset.pattern.permute.xlu0 7
        %3610 = vperm.xlu0 %3609, %v1478
        %v3611 = vpop.permute.xlu0 %3610
        %3613 = vset.pattern.permute.xlu0 7
        %3614 = vperm.xlu0 %3613, %v1479
        %v3615 = vpop.permute.xlu0 %3614
        %3617 = vset.pattern.permute.xlu0 7
        %3618 = vperm.xlu0 %3617, %v1480
        %v3619 = vpop.permute.xlu0 %3618
        %3621 = vset.pattern.permute.xlu0 7
        %3622 = vperm.xlu0 %3621, %v1481
        %v3623 = vpop.permute.xlu0 %3622
        %3625 = vset.pattern.permute.xlu0 7
        %3626 = vperm.xlu0 %3625, %v1482
        %v3627 = vpop.permute.xlu0 %3626
        %v3629 = vmul.f32 %v1167, %v3503
        %v3630 = vmul.f32 %v1173, %v3507
        %v3631 = vmul.f32 %v1177, %v3511
        %v3632 = vmul.f32 %v1183, %v3515
        %v3633 = vmul.f32 %v1187, %v3519
        %v3634 = vmul.f32 %v1193, %v3523
        %v3635 = vmul.f32 %v1197, %v3527
        %v3636 = vmul.f32 %v1203, %v3531
        %v3637 = vmul.f32 %v1207, %v3535
        %v3638 = vmul.f32 %v1213, %v3539
        %v3639 = vmul.f32 %v1217, %v3543
        %v3640 = vmul.f32 %v1223, %v3547
        %v3641 = vmul.f32 %v1227, %v3551
        %v3642 = vmul.f32 %v1233, %v3555
        %v3643 = vmul.f32 %v1237, %v3559
        %v3644 = vmul.f32 %v1243, %v3563
        %v3645 = vmul.f32 %v1247, %v3567
        %v3646 = vmul.f32 %v1253, %v3571
        %v3647 = vmul.f32 %v1257, %v3575
        %v3648 = vmul.f32 %v1263, %v3579
        %v3649 = vmul.f32 %v1267, %v3583
        %v3650 = vmul.f32 %v1273, %v3587
        %v3651 = vmul.f32 %v1277, %v3591
        %v3652 = vmul.f32 %v1283, %v3595
        %v3653 = vmul.f32 %v1287, %v3599
        %v3654 = vmul.f32 %v1293, %v3603
        %v3655 = vmul.f32 %v1297, %v3607
        %v3656 = vmul.f32 %v1303, %v3611
        %v3657 = vmul.f32 %v1307, %v3615
        %v3658 = vmul.f32 %v1313, %v3619
        %v3659 = vmul.f32 %v1317, %v3623
        %v3660 = vmul.f32 %v1163, %v3627
        %3693 = vrot.lane.b32.xlu0 %v3629, 16
        %v3694 = vpop.permute.xlu0 %3693
        %3695 = vrot.lane.b32.xlu0 %v3630, 16
        %v3696 = vpop.permute.xlu0 %3695
        %3697 = vrot.lane.b32.xlu0 %v3631, 16
        %v3698 = vpop.permute.xlu0 %3697
        %3699 = vrot.lane.b32.xlu0 %v3632, 16
        %v3700 = vpop.permute.xlu0 %3699
        %3701 = vrot.lane.b32.xlu0 %v3633, 16
        %v3702 = vpop.permute.xlu0 %3701
        %3703 = vrot.lane.b32.xlu0 %v3634, 16
        %v3704 = vpop.permute.xlu0 %3703
        %3705 = vrot.lane.b32.xlu0 %v3635, 16
        %v3706 = vpop.permute.xlu0 %3705
        %3707 = vrot.lane.b32.xlu0 %v3636, 16
        %v3708 = vpop.permute.xlu0 %3707
        %3709 = vrot.lane.b32.xlu0 %v3637, 16
        %v3710 = vpop.permute.xlu0 %3709
        %3711 = vrot.lane.b32.xlu0 %v3638, 16
        %v3712 = vpop.permute.xlu0 %3711
        %3713 = vrot.lane.b32.xlu0 %v3639, 16
        %v3714 = vpop.permute.xlu0 %3713
        %3715 = vrot.lane.b32.xlu0 %v3640, 16
        %v3716 = vpop.permute.xlu0 %3715
        %3717 = vrot.lane.b32.xlu0 %v3641, 16
        %v3718 = vpop.permute.xlu0 %3717
        %3719 = vrot.lane.b32.xlu0 %v3642, 16
        %v3720 = vpop.permute.xlu0 %3719
        %3721 = vrot.lane.b32.xlu0 %v3643, 16
        %v3722 = vpop.permute.xlu0 %3721
        %3723 = vrot.lane.b32.xlu0 %v3644, 16
        %v3724 = vpop.permute.xlu0 %3723
        %3725 = vrot.lane.b32.xlu0 %v3645, 16
        %v3726 = vpop.permute.xlu0 %3725
        %3727 = vrot.lane.b32.xlu0 %v3646, 16
        %v3728 = vpop.permute.xlu0 %3727
        %3729 = vrot.lane.b32.xlu0 %v3647, 16
        %v3730 = vpop.permute.xlu0 %3729
        %3731 = vrot.lane.b32.xlu0 %v3648, 16
        %v3732 = vpop.permute.xlu0 %3731
        %3733 = vrot.lane.b32.xlu0 %v3649, 16
        %v3734 = vpop.permute.xlu0 %3733
        %3735 = vrot.lane.b32.xlu0 %v3650, 16
        %v3736 = vpop.permute.xlu0 %3735
        %3737 = vrot.lane.b32.xlu0 %v3651, 16
        %v3738 = vpop.permute.xlu0 %3737
        %3739 = vrot.lane.b32.xlu0 %v3652, 16
        %v3740 = vpop.permute.xlu0 %3739
        %3741 = vrot.lane.b32.xlu0 %v3653, 16
        %v3742 = vpop.permute.xlu0 %3741
        %3743 = vrot.lane.b32.xlu0 %v3654, 16
        %v3744 = vpop.permute.xlu0 %3743
        %3745 = vrot.lane.b32.xlu0 %v3655, 16
        %v3746 = vpop.permute.xlu0 %3745
        %3747 = vrot.lane.b32.xlu0 %v3656, 16
        %v3748 = vpop.permute.xlu0 %3747
        %3749 = vrot.lane.b32.xlu0 %v3657, 16
        %v3750 = vpop.permute.xlu0 %3749
        %3751 = vrot.lane.b32.xlu0 %v3658, 16
        %v3752 = vpop.permute.xlu0 %3751
        %3753 = vrot.lane.b32.xlu0 %v3659, 16
        %v3754 = vpop.permute.xlu0 %3753
        %3755 = vrot.lane.b32.xlu0 %v3660, 16
        %v3756 = vpop.permute.xlu0 %3755
        %v3789 = vadd.f32 %v3469, %v3694
        %v3790 = vadd.f32 %v3470, %v3696
        %v3791 = vadd.f32 %v3471, %v3698
        %v3792 = vadd.f32 %v3472, %v3700
        %v3793 = vadd.f32 %v3473, %v3702
        %v3794 = vadd.f32 %v3474, %v3704
        %v3795 = vadd.f32 %v3475, %v3706
        %v3796 = vadd.f32 %v3476, %v3708
        %v3797 = vadd.f32 %v3477, %v3710
        %v3798 = vadd.f32 %v3478, %v3712
        %v3799 = vadd.f32 %v3479, %v3714
        %v3800 = vadd.f32 %v3480, %v3716
        %v3801 = vadd.f32 %v3481, %v3718
        %v3802 = vadd.f32 %v3482, %v3720
        %v3803 = vadd.f32 %v3483, %v3722
        %v3804 = vadd.f32 %v3484, %v3724
        %v3805 = vadd.f32 %v3485, %v3726
        %v3806 = vadd.f32 %v3486, %v3728
        %v3807 = vadd.f32 %v3487, %v3730
        %v3808 = vadd.f32 %v3488, %v3732
        %v3809 = vadd.f32 %v3489, %v3734
        %v3810 = vadd.f32 %v3490, %v3736
        %v3811 = vadd.f32 %v3491, %v3738
        %v3812 = vadd.f32 %v3492, %v3740
        %v3813 = vadd.f32 %v3493, %v3742
        %v3814 = vadd.f32 %v3494, %v3744
        %v3815 = vadd.f32 %v3495, %v3746
        %v3816 = vadd.f32 %v3496, %v3748
        %v3817 = vadd.f32 %v3497, %v3750
        %v3818 = vadd.f32 %v3498, %v3752
        %v3819 = vadd.f32 %v3499, %v3754
        %v3820 = vadd.f32 %v3500, %v3756
        %v3852 = vrot.slane %v1169, 1
        %v3853 = vrot.slane %v1175, 1
        %v3854 = vsel %vm1997, %v3852, %v3853
        %v3855 = vrot.slane %v1179, 1
        %v3856 = vsel %vm1997, %v3853, %v3855
        %v3857 = vrot.slane %v1185, 1
        %v3858 = vsel %vm1997, %v3855, %v3857
        %v3859 = vrot.slane %v1189, 1
        %v3860 = vsel %vm1997, %v3857, %v3859
        %v3861 = vrot.slane %v1195, 1
        %v3862 = vsel %vm1997, %v3859, %v3861
        %v3863 = vrot.slane %v1199, 1
        %v3864 = vsel %vm1997, %v3861, %v3863
        %v3865 = vrot.slane %v1205, 1
        %v3866 = vsel %vm1997, %v3863, %v3865
        %v3867 = vrot.slane %v1209, 1
        %v3868 = vsel %vm1997, %v3865, %v3867
        %v3869 = vrot.slane %v1215, 1
        %v3870 = vsel %vm1997, %v3867, %v3869
        %v3871 = vrot.slane %v1219, 1
        %v3872 = vsel %vm1997, %v3869, %v3871
        %v3873 = vrot.slane %v1225, 1
        %v3874 = vsel %vm1997, %v3871, %v3873
        %v3875 = vrot.slane %v1229, 1
        %v3876 = vsel %vm1997, %v3873, %v3875
        %v3877 = vrot.slane %v1235, 1
        %v3878 = vsel %vm1997, %v3875, %v3877
        %v3879 = vrot.slane %v1239, 1
        %v3880 = vsel %vm1997, %v3877, %v3879
        %v3881 = vrot.slane %v1245, 1
        %v3882 = vsel %vm1997, %v3879, %v3881
        %v3883 = vrot.slane %v1249, 1
        %v3884 = vsel %vm1997, %v3881, %v3883
        %v3885 = vrot.slane %v1255, 1
        %v3886 = vsel %vm1997, %v3883, %v3885
        %v3887 = vrot.slane %v1259, 1
        %v3888 = vsel %vm1997, %v3885, %v3887
        %v3889 = vrot.slane %v1265, 1
        %v3890 = vsel %vm1997, %v3887, %v3889
        %v3891 = vrot.slane %v1269, 1
        %v3892 = vsel %vm1997, %v3889, %v3891
        %v3893 = vrot.slane %v1275, 1
        %v3894 = vsel %vm1997, %v3891, %v3893
        %v3895 = vrot.slane %v1279, 1
        %v3896 = vsel %vm1997, %v3893, %v3895
        %v3897 = vrot.slane %v1285, 1
        %v3898 = vsel %vm1997, %v3895, %v3897
        %v3899 = vrot.slane %v1289, 1
        %v3900 = vsel %vm1997, %v3897, %v3899
        %v3901 = vrot.slane %v1295, 1
        %v3902 = vsel %vm1997, %v3899, %v3901
        %v3903 = vrot.slane %v1299, 1
        %v3904 = vsel %vm1997, %v3901, %v3903
        %v3905 = vrot.slane %v1305, 1
        %v3906 = vsel %vm1997, %v3903, %v3905
        %v3907 = vrot.slane %v1309, 1
        %v3908 = vsel %vm1997, %v3905, %v3907
        %v3909 = vrot.slane %v1315, 1
        %v3910 = vsel %vm1997, %v3907, %v3909
        %v3911 = vrot.slane %v1319, 1
        %v3912 = vsel %vm1997, %v3909, %v3911
        %v3945 = vrot.slane %v1165, 1
        %v3946 = vsel %vm1997, %v3945, %v3852
        %v3949 = vsel %vm1997, %v3911, %v3945
        %3950 = vset.pattern.permute.xlu0 8
        %3951 = vperm.xlu0 %3950, %v1451
        %v3952 = vpop.permute.xlu0 %3951
        %3954 = vset.pattern.permute.xlu0 8
        %3955 = vperm.xlu0 %3954, %v1452
        %v3956 = vpop.permute.xlu0 %3955
        %3958 = vset.pattern.permute.xlu0 8
        %3959 = vperm.xlu0 %3958, %v1453
        %v3960 = vpop.permute.xlu0 %3959
        %3962 = vset.pattern.permute.xlu0 8
        %3963 = vperm.xlu0 %3962, %v1454
        %v3964 = vpop.permute.xlu0 %3963
        %3966 = vset.pattern.permute.xlu0 8
        %3967 = vperm.xlu0 %3966, %v1455
        %v3968 = vpop.permute.xlu0 %3967
        %3970 = vset.pattern.permute.xlu0 8
        %3971 = vperm.xlu0 %3970, %v1456
        %v3972 = vpop.permute.xlu0 %3971
        %3974 = vset.pattern.permute.xlu0 8
        %3975 = vperm.xlu0 %3974, %v1457
        %v3976 = vpop.permute.xlu0 %3975
        %3978 = vset.pattern.permute.xlu0 8
        %3979 = vperm.xlu0 %3978, %v1458
        %v3980 = vpop.permute.xlu0 %3979
        %3982 = vset.pattern.permute.xlu0 8
        %3983 = vperm.xlu0 %3982, %v1459
        %v3984 = vpop.permute.xlu0 %3983
        %3986 = vset.pattern.permute.xlu0 8
        %3987 = vperm.xlu0 %3986, %v1460
        %v3988 = vpop.permute.xlu0 %3987
        %3990 = vset.pattern.permute.xlu0 8
        %3991 = vperm.xlu0 %3990, %v1461
        %v3992 = vpop.permute.xlu0 %3991
        %3994 = vset.pattern.permute.xlu0 8
        %3995 = vperm.xlu0 %3994, %v1462
        %v3996 = vpop.permute.xlu0 %3995
        %3998 = vset.pattern.permute.xlu0 8
        %3999 = vperm.xlu0 %3998, %v1463
        %v4000 = vpop.permute.xlu0 %3999
        %4002 = vset.pattern.permute.xlu0 8
        %4003 = vperm.xlu0 %4002, %v1464
        %v4004 = vpop.permute.xlu0 %4003
        %4006 = vset.pattern.permute.xlu0 8
        %4007 = vperm.xlu0 %4006, %v1465
        %v4008 = vpop.permute.xlu0 %4007
        %4010 = vset.pattern.permute.xlu0 8
        %4011 = vperm.xlu0 %4010, %v1466
        %v4012 = vpop.permute.xlu0 %4011
        %4014 = vset.pattern.permute.xlu0 8
        %4015 = vperm.xlu0 %4014, %v1467
        %v4016 = vpop.permute.xlu0 %4015
        %4018 = vset.pattern.permute.xlu0 8
        %4019 = vperm.xlu0 %4018, %v1468
        %v4020 = vpop.permute.xlu0 %4019
        %4022 = vset.pattern.permute.xlu0 8
        %4023 = vperm.xlu0 %4022, %v1469
        %v4024 = vpop.permute.xlu0 %4023
        %4026 = vset.pattern.permute.xlu0 8
        %4027 = vperm.xlu0 %4026, %v1470
        %v4028 = vpop.permute.xlu0 %4027
        %4030 = vset.pattern.permute.xlu0 8
        %4031 = vperm.xlu0 %4030, %v1471
        %v4032 = vpop.permute.xlu0 %4031
        %4034 = vset.pattern.permute.xlu0 8
        %4035 = vperm.xlu0 %4034, %v1472
        %v4036 = vpop.permute.xlu0 %4035
        %4038 = vset.pattern.permute.xlu0 8
        %4039 = vperm.xlu0 %4038, %v1473
        %v4040 = vpop.permute.xlu0 %4039
        %4042 = vset.pattern.permute.xlu0 8
        %4043 = vperm.xlu0 %4042, %v1474
        %v4044 = vpop.permute.xlu0 %4043
        %4046 = vset.pattern.permute.xlu0 8
        %4047 = vperm.xlu0 %4046, %v1475
        %v4048 = vpop.permute.xlu0 %4047
        %4050 = vset.pattern.permute.xlu0 8
        %4051 = vperm.xlu0 %4050, %v1476
        %v4052 = vpop.permute.xlu0 %4051
        %4054 = vset.pattern.permute.xlu0 8
        %4055 = vperm.xlu0 %4054, %v1477
        %v4056 = vpop.permute.xlu0 %4055
        %4058 = vset.pattern.permute.xlu0 8
        %4059 = vperm.xlu0 %4058, %v1478
        %v4060 = vpop.permute.xlu0 %4059
        %4062 = vset.pattern.permute.xlu0 8
        %4063 = vperm.xlu0 %4062, %v1479
        %v4064 = vpop.permute.xlu0 %4063
        %4066 = vset.pattern.permute.xlu0 8
        %4067 = vperm.xlu0 %4066, %v1480
        %v4068 = vpop.permute.xlu0 %4067
        %4070 = vset.pattern.permute.xlu0 8
        %4071 = vperm.xlu0 %4070, %v1481
        %v4072 = vpop.permute.xlu0 %4071
        %4074 = vset.pattern.permute.xlu0 8
        %4075 = vperm.xlu0 %4074, %v1482
        %v4076 = vpop.permute.xlu0 %4075
        %v4078 = vmul.f32 %v3854, %v3952
        %v4079 = vmul.f32 %v3856, %v3956
        %v4080 = vmul.f32 %v3858, %v3960
        %v4081 = vmul.f32 %v3860, %v3964
        %v4082 = vmul.f32 %v3862, %v3968
        %v4083 = vmul.f32 %v3864, %v3972
        %v4084 = vmul.f32 %v3866, %v3976
        %v4085 = vmul.f32 %v3868, %v3980
        %v4086 = vmul.f32 %v3870, %v3984
        %v4087 = vmul.f32 %v3872, %v3988
        %v4088 = vmul.f32 %v3874, %v3992
        %v4089 = vmul.f32 %v3876, %v3996
        %v4090 = vmul.f32 %v3878, %v4000
        %v4091 = vmul.f32 %v3880, %v4004
        %v4092 = vmul.f32 %v3882, %v4008
        %v4093 = vmul.f32 %v3884, %v4012
        %v4094 = vmul.f32 %v3886, %v4016
        %v4095 = vmul.f32 %v3888, %v4020
        %v4096 = vmul.f32 %v3890, %v4024
        %v4097 = vmul.f32 %v3892, %v4028
        %v4098 = vmul.f32 %v3894, %v4032
        %v4099 = vmul.f32 %v3896, %v4036
        %v4100 = vmul.f32 %v3898, %v4040
        %v4101 = vmul.f32 %v3900, %v4044
        %v4102 = vmul.f32 %v3902, %v4048
        %v4103 = vmul.f32 %v3904, %v4052
        %v4104 = vmul.f32 %v3906, %v4056
        %v4105 = vmul.f32 %v3908, %v4060
        %v4106 = vmul.f32 %v3910, %v4064
        %v4107 = vmul.f32 %v3912, %v4068
        %v4108 = vmul.f32 %v3949, %v4072
        %v4109 = vmul.f32 %v3946, %v4076
        %v4110 = vadd.f32 %v3789, %v4078
        %v4111 = vadd.f32 %v3790, %v4079
        %v4112 = vadd.f32 %v3791, %v4080
        %v4113 = vadd.f32 %v3792, %v4081
        %v4114 = vadd.f32 %v3793, %v4082
        %v4115 = vadd.f32 %v3794, %v4083
        %v4116 = vadd.f32 %v3795, %v4084
        %v4117 = vadd.f32 %v3796, %v4085
        %v4118 = vadd.f32 %v3797, %v4086
        %v4119 = vadd.f32 %v3798, %v4087
        %v4120 = vadd.f32 %v3799, %v4088
        %v4121 = vadd.f32 %v3800, %v4089
        %v4122 = vadd.f32 %v3801, %v4090
        %v4123 = vadd.f32 %v3802, %v4091
        %v4124 = vadd.f32 %v3803, %v4092
        %v4125 = vadd.f32 %v3804, %v4093
        %v4126 = vadd.f32 %v3805, %v4094
        %v4127 = vadd.f32 %v3806, %v4095
        %v4128 = vadd.f32 %v3807, %v4096
        %v4129 = vadd.f32 %v3808, %v4097
        %v4130 = vadd.f32 %v3809, %v4098
        %v4131 = vadd.f32 %v3810, %v4099
        %v4132 = vadd.f32 %v3811, %v4100
        %v4133 = vadd.f32 %v3812, %v4101
        %v4134 = vadd.f32 %v3813, %v4102
        %v4135 = vadd.f32 %v3814, %v4103
        %v4136 = vadd.f32 %v3815, %v4104
        %v4137 = vadd.f32 %v3816, %v4105
        %v4138 = vadd.f32 %v3817, %v4106
        %v4139 = vadd.f32 %v3818, %v4107
        %v4140 = vadd.f32 %v3819, %v4108
        %v4141 = vadd.f32 %v3820, %v4109
        %v4142 = vmax.f32 %v4110, 0.0
        %v4143 = vmax.f32 %v4111, 0.0
        %v4144 = vmax.f32 %v4112, 0.0
        %v4145 = vmax.f32 %v4113, 0.0
        %v4146 = vmax.f32 %v4114, 0.0
        %v4147 = vmax.f32 %v4115, 0.0
        %v4148 = vmax.f32 %v4116, 0.0
        %v4149 = vmax.f32 %v4117, 0.0
        %v4150 = vmax.f32 %v4118, 0.0
        %v4151 = vmax.f32 %v4119, 0.0
        %v4152 = vmax.f32 %v4120, 0.0
        %v4153 = vmax.f32 %v4121, 0.0
        %v4154 = vmax.f32 %v4122, 0.0
        %v4155 = vmax.f32 %v4123, 0.0
        %v4156 = vmax.f32 %v4124, 0.0
        %v4157 = vmax.f32 %v4125, 0.0
        %v4158 = vmax.f32 %v4126, 0.0
        %v4159 = vmax.f32 %v4127, 0.0
        %v4160 = vmax.f32 %v4128, 0.0
        %v4161 = vmax.f32 %v4129, 0.0
        %v4162 = vmax.f32 %v4130, 0.0
        %v4163 = vmax.f32 %v4131, 0.0
        %v4164 = vmax.f32 %v4132, 0.0
        %v4165 = vmax.f32 %v4133, 0.0
        %v4166 = vmax.f32 %v4134, 0.0
        %v4167 = vmax.f32 %v4135, 0.0
        %v4168 = vmax.f32 %v4136, 0.0
        %v4169 = vmax.f32 %v4137, 0.0
        %v4170 = vmax.f32 %v4138, 0.0
        %v4171 = vmax.f32 %v4139, 0.0
        %v4172 = vmax.f32 %v4140, 0.0
        %v4173 = vmax.f32 %v4141, 0.0
        %v4174 = vpack.c.bf16 %v4143, %v4142
        %v4175 = vpack.c.bf16 %v4145, %v4144
        %v4176 = vpack.c.bf16 %v4147, %v4146
        %v4177 = vpack.c.bf16 %v4149, %v4148
        %v4178 = vpack.c.bf16 %v4151, %v4150
        %v4179 = vpack.c.bf16 %v4153, %v4152
        %v4180 = vpack.c.bf16 %v4155, %v4154
        %v4181 = vpack.c.bf16 %v4157, %v4156
        %v4182 = vpack.c.bf16 %v4159, %v4158
        %v4183 = vpack.c.bf16 %v4161, %v4160
        %v4184 = vpack.c.bf16 %v4163, %v4162
        %v4185 = vpack.c.bf16 %v4165, %v4164
        %v4186 = vpack.c.bf16 %v4167, %v4166
        %v4187 = vpack.c.bf16 %v4169, %v4168
        %v4188 = vpack.c.bf16 %v4171, %v4170
        %v4189 = vpack.c.bf16 %v4173, %v4172
        %v4190 = vld [vmem:[%s4] sm:$0xf]
        %v4191 = vld [vmem:[%s4 + $0x4] sm:$0xf]
        %v4194 = vunpack.c.l.b16 %v4190
        %v4195 = vunpack.c.l.b16 %v4191
        %v4196 = vpack.c.b16 %v4195, %v4194
        %v4199 = vsel %vm363, %v4174, 0
        %v4202 = vsel %vm363, %v4175, 0
        %v4205 = vsel %vm363, %v4176, 0
        %v4208 = vsel %vm363, %v4177, 0
        %v4211 = vsel %vm363, %v4178, 0
        %v4214 = vsel %vm363, %v4179, 0
        %v4217 = vsel %vm363, %v4180, 0
        %v4220 = vsel %vm363, %v4181, 0
        %v4223 = vsel %vm363, %v4182, 0
        %v4226 = vsel %vm363, %v4183, 0
        %v4229 = vsel %vm363, %v4184, 0
        %v4232 = vsel %vm363, %v4185, 0
        %v4235 = vsel %vm363, %v4186, 0
        %v4238 = vsel %vm363, %v4187, 0
        %v4241 = vsel %vm363, %v4188, 0
        %v4244 = vsel %vm363, %v4189, 0
        %4246 = vmatprep.subr.bf16.mxu0 0
        %4247 = vmatpush1.bf16.msra.mxu0 0
        %4248 = vmatprep.subr.bf16.mxu0 0
        %4249 = vmatpush1.bf16.msra.mxu0 0
        %4250 = vmatprep.subr.bf16.mxu0 0
        %4251 = vmatpush1.bf16.msra.mxu0 0
        %4252 = vmatprep.subr.bf16.mxu0 0
        %4253 = vmatpush1.bf16.msra.mxu0 0
        %4254 = vmatprep.subr.bf16.mxu0 0
        %4255 = vmatpush1.bf16.msra.mxu0 0
        %4256 = vmatprep.subr.bf16.mxu0 0
        %4257 = vmatpush1.bf16.msra.mxu0 0
        %4258 = vmatprep.subr.bf16.mxu0 0
        %4259 = vmatpush1.bf16.msra.mxu0 0
        %4260 = vmatprep.subr.bf16.mxu0 0
        %4261 = vmatpush1.bf16.msra.mxu0 %v4196
        %4262 = vmatprep.subr.bf16.mxu0 0
        %4263 = vmatpush2.bf16.msra.mxu0 0
        %4264 = vmatprep.subr.bf16.mxu0 0
        %4265 = vmatpush2.bf16.msra.mxu0 0
        %4266 = vmatprep.subr.bf16.mxu0 0
        %4267 = vmatpush2.bf16.msra.mxu0 0
        %4268 = vmatprep.subr.bf16.mxu0 0
        %4269 = vmatpush2.bf16.msra.mxu0 0
        %4270 = vmatprep.subr.bf16.mxu0 0
        %4271 = vmatpush2.bf16.msra.mxu0 0
        %4272 = vmatprep.subr.bf16.mxu0 0
        %4273 = vmatpush2.bf16.msra.mxu0 0
        %4274 = vmatprep.subr.bf16.mxu0 0
        %4275 = vmatpush2.bf16.msra.mxu0 0
        %4276 = vmatprep.subr.bf16.mxu0 0
        %4277 = vmatpush2.bf16.msra.mxu0 0
        %4278 = vmatprep.mubr.bf16.mxu0 0
        %4279 = vmatmul.mubr.bf16.gmra.mxu0 %v4199
        %v4280 = vpop.f32.mrf.mxu0
        %v4281 = vadd.f32 0.0, %v4280
        %v4282 = vpop.f32.mrf.mxu0
        %v4283 = vpop.f32.mrf.mxu0
        %v4284 = vadd.f32 0.0, %v4283
        %v4285 = vpop.f32.mrf.mxu0
        %4286 = vmatprep.mubr.bf16.mxu0 0
        %4287 = vmatmul.mubr.bf16.gmra.mxu0 %v4202
        %v4288 = vpop.f32.mrf.mxu0
        %v4289 = vadd.f32 0.0, %v4288
        %v4290 = vpop.f32.mrf.mxu0
        %v4291 = vpop.f32.mrf.mxu0
        %v4292 = vadd.f32 0.0, %v4291
        %v4293 = vpop.f32.mrf.mxu0
        %4294 = vmatprep.mubr.bf16.mxu0 0
        %4295 = vmatmul.mubr.bf16.gmra.mxu0 %v4205
        %v4296 = vpop.f32.mrf.mxu0
        %v4297 = vadd.f32 0.0, %v4296
        %v4298 = vpop.f32.mrf.mxu0
        %v4299 = vpop.f32.mrf.mxu0
        %v4300 = vadd.f32 0.0, %v4299
        %v4301 = vpop.f32.mrf.mxu0
        %4302 = vmatprep.mubr.bf16.mxu0 0
        %4303 = vmatmul.mubr.bf16.gmra.mxu0 %v4208
        %v4304 = vpop.f32.mrf.mxu0
        %v4305 = vadd.f32 0.0, %v4304
        %v4306 = vpop.f32.mrf.mxu0
        %v4307 = vpop.f32.mrf.mxu0
        %v4308 = vadd.f32 0.0, %v4307
        %v4309 = vpop.f32.mrf.mxu0
        %4310 = vmatprep.mubr.bf16.mxu0 0
        %4311 = vmatmul.mubr.bf16.gmra.mxu0 %v4211
        %v4312 = vpop.f32.mrf.mxu0
        %v4313 = vadd.f32 0.0, %v4312
        %v4314 = vpop.f32.mrf.mxu0
        %v4315 = vpop.f32.mrf.mxu0
        %v4316 = vadd.f32 0.0, %v4315
        %v4317 = vpop.f32.mrf.mxu0
        %4318 = vmatprep.mubr.bf16.mxu0 0
        %4319 = vmatmul.mubr.bf16.gmra.mxu0 %v4214
        %v4320 = vpop.f32.mrf.mxu0
        %v4321 = vadd.f32 0.0, %v4320
        %v4322 = vpop.f32.mrf.mxu0
        %v4323 = vpop.f32.mrf.mxu0
        %v4324 = vadd.f32 0.0, %v4323
        %v4325 = vpop.f32.mrf.mxu0
        %4326 = vmatprep.mubr.bf16.mxu0 0
        %4327 = vmatmul.mubr.bf16.gmra.mxu0 %v4217
        %v4328 = vpop.f32.mrf.mxu0
        %v4329 = vadd.f32 0.0, %v4328
        %v4330 = vpop.f32.mrf.mxu0
        %v4331 = vpop.f32.mrf.mxu0
        %v4332 = vadd.f32 0.0, %v4331
        %v4333 = vpop.f32.mrf.mxu0
        %4334 = vmatprep.mubr.bf16.mxu0 0
        %4335 = vmatmul.mubr.bf16.gmra.mxu0 %v4220
        %v4336 = vpop.f32.mrf.mxu0
        %v4337 = vadd.f32 0.0, %v4336
        %v4338 = vpop.f32.mrf.mxu0
        %v4339 = vpop.f32.mrf.mxu0
        %v4340 = vadd.f32 0.0, %v4339
        %v4341 = vpop.f32.mrf.mxu0
        %4342 = vmatprep.mubr.bf16.mxu0 0
        %4343 = vmatmul.mubr.bf16.gmra.mxu0 %v4223
        %v4344 = vpop.f32.mrf.mxu0
        %v4345 = vadd.f32 0.0, %v4344
        %v4346 = vpop.f32.mrf.mxu0
        %v4347 = vpop.f32.mrf.mxu0
        %v4348 = vadd.f32 0.0, %v4347
        %v4349 = vpop.f32.mrf.mxu0
        %4350 = vmatprep.mubr.bf16.mxu0 0
        %4351 = vmatmul.mubr.bf16.gmra.mxu0 %v4226
        %v4352 = vpop.f32.mrf.mxu0
        %v4353 = vadd.f32 0.0, %v4352
        %v4354 = vpop.f32.mrf.mxu0
        %v4355 = vpop.f32.mrf.mxu0
        %v4356 = vadd.f32 0.0, %v4355
        %v4357 = vpop.f32.mrf.mxu0
        %4358 = vmatprep.mubr.bf16.mxu0 0
        %4359 = vmatmul.mubr.bf16.gmra.mxu0 %v4229
        %v4360 = vpop.f32.mrf.mxu0
        %v4361 = vadd.f32 0.0, %v4360
        %v4362 = vpop.f32.mrf.mxu0
        %v4363 = vpop.f32.mrf.mxu0
        %v4364 = vadd.f32 0.0, %v4363
        %v4365 = vpop.f32.mrf.mxu0
        %4366 = vmatprep.mubr.bf16.mxu0 0
        %4367 = vmatmul.mubr.bf16.gmra.mxu0 %v4232
        %v4368 = vpop.f32.mrf.mxu0
        %v4369 = vadd.f32 0.0, %v4368
        %v4370 = vpop.f32.mrf.mxu0
        %v4371 = vpop.f32.mrf.mxu0
        %v4372 = vadd.f32 0.0, %v4371
        %v4373 = vpop.f32.mrf.mxu0
        %4374 = vmatprep.mubr.bf16.mxu0 0
        %4375 = vmatmul.mubr.bf16.gmra.mxu0 %v4235
        %v4376 = vpop.f32.mrf.mxu0
        %v4377 = vadd.f32 0.0, %v4376
        %v4378 = vpop.f32.mrf.mxu0
        %v4379 = vpop.f32.mrf.mxu0
        %v4380 = vadd.f32 0.0, %v4379
        %v4381 = vpop.f32.mrf.mxu0
        %4382 = vmatprep.mubr.bf16.mxu0 0
        %4383 = vmatmul.mubr.bf16.gmra.mxu0 %v4238
        %v4384 = vpop.f32.mrf.mxu0
        %v4385 = vadd.f32 0.0, %v4384
        %v4386 = vpop.f32.mrf.mxu0
        %v4387 = vpop.f32.mrf.mxu0
        %v4388 = vadd.f32 0.0, %v4387
        %v4389 = vpop.f32.mrf.mxu0
        %4390 = vmatprep.mubr.bf16.mxu0 0
        %4391 = vmatmul.mubr.bf16.gmra.mxu0 %v4241
        %v4392 = vpop.f32.mrf.mxu0
        %v4393 = vadd.f32 0.0, %v4392
        %v4394 = vpop.f32.mrf.mxu0
        %v4395 = vpop.f32.mrf.mxu0
        %v4396 = vadd.f32 0.0, %v4395
        %v4397 = vpop.f32.mrf.mxu0
        %4398 = vmatprep.mubr.bf16.mxu0 0
        %4399 = vmatmul.mubr.bf16.gmra.mxu0 %v4244
        %v4400 = vpop.f32.mrf.mxu0
        %v4401 = vadd.f32 0.0, %v4400
        %v4402 = vpop.f32.mrf.mxu0
        %v4403 = vpop.f32.mrf.mxu0
        %v4404 = vadd.f32 0.0, %v4403
        %v4405 = vpop.f32.mrf.mxu0
        %4406 = vdwg.mxu0
        %v4407 = vmax.f32 %v4281, 0.0
        %v4408 = vmax.f32 %v4284, 0.0
        %v4409 = vmax.f32 %v4289, 0.0
        %v4410 = vmax.f32 %v4292, 0.0
        %v4411 = vmax.f32 %v4297, 0.0
        %v4412 = vmax.f32 %v4300, 0.0
        %v4413 = vmax.f32 %v4305, 0.0
        %v4414 = vmax.f32 %v4308, 0.0
        %v4415 = vmax.f32 %v4313, 0.0
        %v4416 = vmax.f32 %v4316, 0.0
        %v4417 = vmax.f32 %v4321, 0.0
        %v4418 = vmax.f32 %v4324, 0.0
        %v4419 = vmax.f32 %v4329, 0.0
        %v4420 = vmax.f32 %v4332, 0.0
        %v4421 = vmax.f32 %v4337, 0.0
        %v4422 = vmax.f32 %v4340, 0.0
        %v4423 = vmax.f32 %v4345, 0.0
        %v4424 = vmax.f32 %v4348, 0.0
        %v4425 = vmax.f32 %v4353, 0.0
        %v4426 = vmax.f32 %v4356, 0.0
        %v4427 = vmax.f32 %v4361, 0.0
        %v4428 = vmax.f32 %v4364, 0.0
        %v4429 = vmax.f32 %v4369, 0.0
        %v4430 = vmax.f32 %v4372, 0.0
        %v4431 = vmax.f32 %v4377, 0.0
        %v4432 = vmax.f32 %v4380, 0.0
        %v4433 = vmax.f32 %v4385, 0.0
        %v4434 = vmax.f32 %v4388, 0.0
        %v4435 = vmax.f32 %v4393, 0.0
        %v4436 = vmax.f32 %v4396, 0.0
        %v4437 = vmax.f32 %v4401, 0.0
        %v4438 = vmax.f32 %v4404, 0.0
        %4439 = vst.msk [vmem:[%s319] sm:$0xff] %vm363, %v4407
        %4440 = vst.msk [vmem:[%s319 + $0x8] sm:$0xff] %vm363, %v4408
        %4441 = vst.msk [vmem:[%s319 + $0x10] sm:$0xff] %vm363, %v4409
        %4442 = vst.msk [vmem:[%s319 + $0x18] sm:$0xff] %vm363, %v4410
        %4443 = vst.msk [vmem:[%s319 + $0x20] sm:$0xff] %vm363, %v4411
        %4444 = vst.msk [vmem:[%s319 + $0x28] sm:$0xff] %vm363, %v4412
        %4445 = vst.msk [vmem:[%s319 + $0x30] sm:$0xff] %vm363, %v4413
        %4446 = vst.msk [vmem:[%s319 + $0x38] sm:$0xff] %vm363, %v4414
        %4447 = vst.msk [vmem:[%s319 + $0x40] sm:$0xff] %vm363, %v4415
        %4448 = vst.msk [vmem:[%s319 + $0x48] sm:$0xff] %vm363, %v4416
        %4449 = vst.msk [vmem:[%s319 + $0x50] sm:$0xff] %vm363, %v4417
        %4450 = vst.msk [vmem:[%s319 + $0x58] sm:$0xff] %vm363, %v4418
        %4451 = vst.msk [vmem:[%s319 + $0x60] sm:$0xff] %vm363, %v4419
        %4452 = vst.msk [vmem:[%s319 + $0x68] sm:$0xff] %vm363, %v4420
        %4453 = vst.msk [vmem:[%s319 + $0x70] sm:$0xff] %vm363, %v4421
        %4454 = vst.msk [vmem:[%s319 + $0x78] sm:$0xff] %vm363, %v4422
        %4455 = vst.msk [vmem:[%s319 + $0x80] sm:$0xff] %vm363, %v4423
        %4456 = vst.msk [vmem:[%s319 + $0x88] sm:$0xff] %vm363, %v4424
        %4457 = vst.msk [vmem:[%s319 + $0x90] sm:$0xff] %vm363, %v4425
        %4458 = vst.msk [vmem:[%s319 + $0x98] sm:$0xff] %vm363, %v4426
        %4459 = vst.msk [vmem:[%s319 + $0xa0] sm:$0xff] %vm363, %v4427
        %4460 = vst.msk [vmem:[%s319 + $0xa8] sm:$0xff] %vm363, %v4428
        %4461 = vst.msk [vmem:[%s319 + $0xb0] sm:$0xff] %vm363, %v4429
        %4462 = vst.msk [vmem:[%s319 + $0xb8] sm:$0xff] %vm363, %v4430
        %4463 = vst.msk [vmem:[%s319 + $0xc0] sm:$0xff] %vm363, %v4431
        %4464 = vst.msk [vmem:[%s319 + $0xc8] sm:$0xff] %vm363, %v4432
        %4465 = vst.msk [vmem:[%s319 + $0xd0] sm:$0xff] %vm363, %v4433
        %4466 = vst.msk [vmem:[%s319 + $0xd8] sm:$0xff] %vm363, %v4434
        %4467 = vst.msk [vmem:[%s319 + $0xe0] sm:$0xff] %vm363, %v4435
        %4468 = vst.msk [vmem:[%s319 + $0xe8] sm:$0xff] %vm363, %v4436
        %4469 = vst.msk [vmem:[%s319 + $0xf0] sm:$0xff] %vm363, %v4437
        %4470 = vst.msk [vmem:[%s319 + $0xf8] sm:$0xff] %vm363, %v4438
        %s4471 = sand.u32 %s165, 1
        %s4472 = scalar_lea.sflag [#allocation3], %s4471
        %s4473 = sand.u32 %s165, 1
        %s4474 = smul.addr %s4473, 4
        %s4475 = scalar_lea.vmem [#allocation2], %s4474
        %s4476 = sand.u32 %s26, 1
        %s4477 = scalar_lea.sflag [#allocation5], %s4476
        %s4478 = sand.u32 %s191, 1
        %s4479 = smul.addr %s4478, 256
        %s4480 = scalar_lea.vmem [#allocation4], %s4479
        %s4481 = sand.u32 %s26, 1
        %s4482 = scalar_lea.sflag [#allocation5], %s4481
        %s4483 = sand.u32 %s217, 1
        %s4484 = smul.addr %s4483, 256
        %s4485 = scalar_lea.vmem [#allocation6], %s4484
        // Predicated region
        $region45: #{stam_forward.1} parent=43 // pred_check
          %p4486 = pneg %p175
        $region46: #{stam_forward.1} parent=43 // pred_check_branch
          %4488 = sbr.rel (%p4486) target = $region48
        $region47: #{stam_forward.1} parent=43 // pred_region
          %s4489 = smul.u32 4, %s26
          %s4491 = ssub.s32 64, 64
          %4492 = vsyncadd %s4472, %s4491
          %s4493 = smul.addr %s4489, 16
          %s4494 = scalar_lea.hbm %s6, %s4493
          %s4495 = sshll.u32 %s4475, 4
          %s4496 = int_to_ptr.vmem [resolvable:$true] %s4495
          %4501 = dma.vmem_to_hbm [thread:$0]  %s4496, 64, %s4494, %s4472, 16, 16, 1
        $region48: #{stam_forward.1} parent=43 // pred_fallthru
          _
        // Predicated region
        $region49: #{stam_forward.1} parent=43 // pred_check
          %p4502 = pneg %p201
        $region50: #{stam_forward.1} parent=43 // pred_check_branch
          %4504 = sbr.rel (%p4502) target = $region52
        $region51: #{stam_forward.1} parent=43 // pred_region
          %s4505 = smul.u32 4, %s26
          %s4507 = ssub.s32 4096, 4096
          %4508 = vsyncadd %s4477, %s4507
          %s4509 = smul.addr %s4505, 8
          %s4510 = smul.addr %s4509, 128
          %s4511 = scalar_lea.hbm %s7, %s4510
          %s4512 = sshll.u32 %s4480, 4
          %s4513 = int_to_ptr.vmem [resolvable:$true] %s4512
          %4518 = dma.vmem_to_hbm [thread:$0]  %s4513, 4096, %s4511, %s4477, 128, 128, 8
        $region52: #{stam_forward.1} parent=43 // pred_fallthru
          _
        // Predicated region
        $region53: #{stam_forward.1} parent=43 // pred_check
          %p4519 = pneg %p227
        $region54: #{stam_forward.1} parent=43 // pred_check_branch
          %4521 = sbr.rel (%p4519) target = $region56
        $region55: #{stam_forward.1} parent=43 // pred_region
          %s4522 = smul.u32 4, %s26
          %s4524 = ssub.s32 4096, 4096
          %4525 = vsyncadd %s4482, %s4524
          %s4526 = smul.addr %s4522, 8
          %s4527 = smul.addr %s4526, 128
          %s4528 = scalar_lea.hbm %s8, %s4527
          %s4529 = sshll.u32 %s4485, 4
          %s4530 = int_to_ptr.vmem [resolvable:$true] %s4529
          %4535 = dma.vmem_to_hbm [thread:$0]  %s4530, 4096, %s4528, %s4482, 128, 128, 8
        $region56: #{stam_forward.1} parent=43 // pred_fallthru
          _
      $region44: #{stam_forward.1} parent=5 // pred_fallthru
        _
      %p4536 = scmp.le.s32.totalorder 2, %s21
      // Predicated region
      $region57: #{stam_forward.1} parent=5 // pred_check
        %p4537 = pneg %p4536
      $region58: #{stam_forward.1} parent=5 // pred_check_branch
        %4539 = sbr.rel (%p4537) target = $region60
      $region59: #{stam_forward.1} parent=5 // pred_region
        %s4540 = ssub.s32 %s21, 2
        // Predicated region
        $region61: #{stam_forward.1} parent=59 // pred_check
          %p4541 = pneg %p181
        $region62: #{stam_forward.1} parent=59 // pred_check_branch
          %4543 = sbr.rel (%p4541) target = $region64
        $region63: #{stam_forward.1} parent=59 // pred_region
          %s4544 = sand.u32 %s166, 1
          %s4545 = scalar_lea.sflag [#allocation3], %s4544
          %s4546 = sand.u32 %s166, 1
          %s4547 = smul.addr %s4546, 4
          %s4548 = scalar_lea.vmem [#allocation2], %s4547
          %4549 = dma.done %s4545, 64
        $region64: #{stam_forward.1} parent=59 // pred_fallthru
          _
        // Predicated region
        $region65: #{stam_forward.1} parent=59 // pred_check
          %p4550 = pneg %p207
        $region66: #{stam_forward.1} parent=59 // pred_check_branch
          %4552 = sbr.rel (%p4550) target = $region68
        $region67: #{stam_forward.1} parent=59 // pred_region
          %s4553 = sand.u32 %s27, 1
          %s4554 = scalar_lea.sflag [#allocation5], %s4553
          %s4555 = sand.u32 %s192, 1
          %s4556 = smul.addr %s4555, 256
          %s4557 = scalar_lea.vmem [#allocation4], %s4556
          %4558 = dma.done %s4554, 4096
        $region68: #{stam_forward.1} parent=59 // pred_fallthru
          _
        // Predicated region
        $region69: #{stam_forward.1} parent=59 // pred_check
          %p4559 = pneg %p233
        $region70: #{stam_forward.1} parent=59 // pred_check_branch
          %4561 = sbr.rel (%p4559) target = $region72
        $region71: #{stam_forward.1} parent=59 // pred_region
          %s4562 = sand.u32 %s27, 1
          %s4563 = scalar_lea.sflag [#allocation5], %s4562
          %s4564 = sand.u32 %s218, 1
          %s4565 = smul.addr %s4564, 256
          %s4566 = scalar_lea.vmem [#allocation6], %s4565
          %4567 = dma.done %s4563, 4096
        $region72: #{stam_forward.1} parent=59 // pred_fallthru
          _
      $region60: #{stam_forward.1} parent=5 // pred_fallthru
        _
    $region6: #{stam_forward.1} parent=1 // loop_footer
      %s25 = sadd.s32 1, %s21
    $region7: #{stam_forward.1} parent=1 // loop_footer_branch
      %20 = sbr.rel target = $region3
    $region8: #{stam_forward.1} parent=1 // loop_exit
      _
    %4568 = vsyncpa [#allocation3], 1
    %s4569 = scalar_lea.sflag [#allocation3], 1
    %4570 = vsyncpa %s4569, 1
    %4571 = vsyncpa [#allocation5], 1
    %s4572 = scalar_lea.sflag [#allocation5], 1
    %4573 = vsyncpa %s4572, 1

</llo_original>
